<compile_context>
chip_gen: v7x
topology: tpu7x:2x2x1
jax: 0.10.0
libtpu: 0.0.40
codegen_flags: <defaults>
</compile_context>

<pallas_src>
import math
import functools

import jax
import jax.numpy as jnp
from jax.experimental import pallas as pl
from jax.experimental.pallas import tpu as pltpu

D_MODEL = 32
NHEAD = 4
DIM_FF = 64
NUM_LAYERS = 2
EPS = 1e-5
LANES = 128      # slab lane width (host-side zero padding)
W2_ROWS = 128    # w2 contraction rows, zero padded from DIM_FF


def _layer_norm(x, w, b):
    """Single-pass LayerNorm: one reduction pass for mean and mean-of-squares."""
    mu = jnp.mean(x, axis=-1, keepdims=True)
    ms = jnp.mean(x * x, axis=-1, keepdims=True)
    var = ms - mu * mu
    return (x - mu) * jax.lax.rsqrt(var + EPS) * w + b


def _softmax_attend(q, k, v):
    """One attention head. q:(Tq,Dh) k,v:(Tk,Dh) -> (Tq,Dh). q already pre-scaled."""
    s = jax.lax.dot_general(q, k, (((1,), (1,)), ((), ())),
                            preferred_element_type=jnp.float32)   # q @ k^T
    s = s - jnp.max(s, axis=-1, keepdims=True)
    p = jnp.exp(s)
    p = p * pl.reciprocal(jnp.sum(p, axis=-1, keepdims=True), approx=True)
    return jnp.dot(p, v, preferred_element_type=jnp.float32)


def decoder_layer_kernel(tgt_ref, src_ref, w_ref, vec_ref, out_ref, res_ref, *,
                         nhead, B, Tq, Tk, d_model):
    D = d_model
    Dh = D // nhead

    x = tgt_ref[...]                                    # (B*Tq, D)

    # ---------------- self attention ----------------
    # Fused QKV projection, full 128-lane slab (padding columns are zero). Scale folded in.
    qkv = jnp.dot(x, w_ref[0:D, :], preferred_element_type=jnp.float32) + vec_ref[0:1, :]
    sa_out_t = w_ref[3 * D:4 * D, 0:D]                  # (D, D) out-proj (pre-transposed)
    sa_out_b = vec_ref[3:4, 0:D]
    for b in range(B):
        r0, r1 = b * Tq, (b + 1) * Tq
        acc = x[r0:r1, :] + sa_out_b                    # residual + out-proj bias fused
        for h in range(nhead):
            c = h * Dh
            head = _softmax_attend(qkv[r0:r1, c:c + Dh],
                                   qkv[r0:r1, D + c:D + c + Dh],
                                   qkv[r0:r1, 2 * D + c:2 * D + c + Dh])
            # Recombine heads through the output projection (no lane concat).
            acc = acc + jnp.dot(head, sa_out_t[c:c + Dh, :],
                                preferred_element_type=jnp.float32)
        res_ref[r0:r1, :] = acc                         # sublane-offset scratch write
    x = _layer_norm(res_ref[...], vec_ref[7:8, 0:D], vec_ref[8:9, 0:D])

    # ---------------- cross attention ----------------
    src = src_ref[...]                                  # (B*Tk, D) flattened host-side
    # Q from tgt path (scale folded), K/V hoisted: one matmul over the whole flattened src.
    qc = jnp.dot(x, w_ref[D:2 * D, :], preferred_element_type=jnp.float32) + vec_ref[1:2, :]
    kv = jnp.dot(src, w_ref[2 * D:3 * D, :], preferred_element_type=jnp.float32) + vec_ref[2:3, :]
    ca_out_t = w_ref[4 * D:5 * D, 0:D]
    ca_out_b = vec_ref[4:5, 0:D]
    for b in range(B):
        r0, r1 = b * Tq, (b + 1) * Tq
        s0, s1 = b * Tk, (b + 1) * Tk
        acc = x[r0:r1, :] + ca_out_b
        for h in range(nhead):
            c = h * Dh
            head = _softmax_attend(qc[r0:r1, c:c + Dh],
                                   kv[s0:s1, c:c + Dh],
                                   kv[s0:s1, D + c:D + c + Dh])
            acc = acc + jnp.dot(head, ca_out_t[c:c + Dh, :],
                                preferred_element_type=jnp.float32)
        res_ref[r0:r1, :] = acc
    x = _layer_norm(res_ref[...], vec_ref[9:10, 0:D], vec_ref[10:11, 0:D])

    # ---------------- feed-forward (ReLU) ----------------
    # w1 is 128-lane padded (zeros beyond F) and w2 is zero-padded to 128 contraction rows,
    # so no lane slicing of the hidden activation is needed.
    h = jnp.maximum(
        jnp.dot(x, w_ref[5 * D:6 * D, :], preferred_element_type=jnp.float32) + vec_ref[5:6, :],
        0.0)                                            # (B*Tq, 128), cols >= F are zero
    ff = jnp.dot(h, w_ref[6 * D:6 * D + W2_ROWS, 0:D],
                 preferred_element_type=jnp.float32) + vec_ref[6:7, 0:D]
    x = _layer_norm(x + ff, vec_ref[11:12, 0:D], vec_ref[12:13, 0:D])

    out_ref[...] = x.astype(out_ref.dtype)


def decoder_layer(tgt, src, w_slab, vec_slab, nhead=NHEAD):
    B, Tq, D = tgt.shape
    _, Tk, _ = src.shape
    tgt_flat = tgt.reshape(B * Tq, D)
    src_flat = src.reshape(B * Tk, D)

    out_flat = pl.pallas_call(
        functools.partial(decoder_layer_kernel, nhead=nhead, B=B, Tq=Tq, Tk=Tk,
                          d_model=D),
        out_shape=jax.ShapeDtypeStruct((B * Tq, D), tgt.dtype),
        grid=(1,),
        in_specs=[
            pl.BlockSpec((B * Tq, D), lambda i: (0, 0)),
            pl.BlockSpec((B * Tk, D), lambda i: (0, 0)),
            pl.BlockSpec(w_slab.shape, lambda i: (0, 0)),
            pl.BlockSpec(vec_slab.shape, lambda i: (0, 0)),
        ],
        out_specs=pl.BlockSpec((B * Tq, D), lambda i: (0, 0)),
        scratch_shapes=[pltpu.VMEM((B * Tq, D), jnp.float32)],
        compiler_params=pltpu.CompilerParams(dimension_semantics=("arbitrary",)),
    )(tgt_flat, src_flat, w_slab, vec_slab)
    return out_flat.reshape(B, Tq, D)


def transformer_decoder(tgt, src, w_slab, vec_slab, num_layers=NUM_LAYERS):
    # The reference forward feeds the ORIGINAL tgt to every (identical deepcopy'd) layer,
    # so every iteration yields the same tensor -> one launch is exact.
    del num_layers
    return decoder_layer(tgt, src, w_slab, vec_slab)


def init_params(key, d_model=D_MODEL, dim_ff=DIM_FF):
    """PyTorch-layout parameters for one nn.TransformerDecoderLayer."""
    ks = jax.random.split(key, 12)

    def w(k, shape, scale=0.05):
        return (scale * jax.random.normal(k, shape)).astype(jnp.float32)

    return (
        w(ks[0], (3 * d_model, d_model)),        # self-attn in_proj_weight
        w(ks[1], (1, 3 * d_model)),              # self-attn in_proj_bias
        w(ks[2], (d_model, d_model)),            # self-attn out_proj.weight
        w(ks[3], (1, d_model)),                  # self-attn out_proj.bias
        w(ks[4], (3 * d_model, d_model)),        # cross-attn in_proj_weight
        w(ks[5], (1, 3 * d_model)),              # cross-attn in_proj_bias
        w(ks[6], (d_model, d_model)),            # cross-attn out_proj.weight
        w(ks[7], (1, d_model)),                  # cross-attn out_proj.bias
        w(ks[8], (dim_ff, d_model)),             # linear1.weight
        w(ks[9], (1, dim_ff)),                   # linear1.bias
        w(ks[10], (d_model, dim_ff)),            # linear2.weight
        w(ks[11], (1, d_model)),                 # linear2.bias
        jnp.ones((1, d_model), jnp.float32),     # norm1.weight
        jnp.zeros((1, d_model), jnp.float32),    # norm1.bias
        jnp.ones((1, d_model), jnp.float32),     # norm2.weight
        jnp.zeros((1, d_model), jnp.float32),    # norm2.bias
        jnp.ones((1, d_model), jnp.float32),     # norm3.weight
        jnp.zeros((1, d_model), jnp.float32),    # norm3.bias
    )


def pack_params(params, d_model=D_MODEL, dim_ff=DIM_FF, nhead=NHEAD):
    """Host-side: pre-transpose, fold the softmax scale into the Q projections, pad to
    128 lanes, and pack all layer params into one weight slab and one vector slab."""
    (sa_w, sa_b, sa_ow, sa_ob, ca_w, ca_b, ca_ow, ca_ob,
     w1, b1, w2, b2, n1w, n1b, n2w, n2b, n3w, n3b) = params
    D, F = d_model, dim_ff
    scale = 1.0 / math.sqrt(D // nhead)

    # Fold 1/sqrt(Dh) into the Q rows of the in-projections (weight AND bias).
    sa_w_sc = jnp.concatenate([sa_w[0:D] * scale, sa_w[D:]], axis=0)          # (3D, D)
    sa_b_sc = jnp.concatenate([sa_b[:, 0:D] * scale, sa_b[:, D:]], axis=1)    # (1, 3D)
    ca_q_w = ca_w[0:D] * scale                                                # (D, D)
    ca_q_b = ca_b[:, 0:D] * scale                                             # (1, D)
    ca_kv_w = ca_w[D:3 * D]                                                   # (2D, D)
    ca_kv_b = ca_b[:, D:3 * D]                                                # (1, 2D)

    def pad_cols(a):
        return jnp.pad(a, ((0, 0), (0, LANES - a.shape[1])))

    def pad_rows(a, rows):
        return jnp.pad(a, ((0, rows - a.shape[0]), (0, 0)))

    w_slab = jnp.concatenate([
        pad_cols(sa_w_sc.T),               # rows 0:D        (D, 3D) live, Q cols scaled
        pad_cols(ca_q_w.T),                # rows D:2D       (D, D)  live, scaled
        pad_cols(ca_kv_w.T),               # rows 2D:3D      (D, 2D) live
        pad_cols(sa_ow.T),                 # rows 3D:4D      (D, D)
        pad_cols(ca_ow.T),                 # rows 4D:5D      (D, D)
        pad_cols(w1.T),                    # rows 5D:6D      (D, F)  live
        pad_cols(pad_rows(w2.T, W2_ROWS)),  # rows 6D:6D+128  (F, D) live, rows F:128 zero
    ], axis=0)                             # (6D + 128, 128) = (320, 128) f32

    vec_rows = [sa_b_sc, ca_q_b, ca_kv_b, sa_ob, ca_ob, b1, b2,
                n1w, n1b, n2w, n2b, n3w, n3b]
    vec_slab = jnp.concatenate([pad_cols(r) for r in vec_rows], axis=0)        # (13, 128)
    vec_slab = jnp.pad(vec_slab, ((0, 16 - vec_slab.shape[0]), (0, 0)))        # (16, 128)
    return w_slab, vec_slab


if __name__ == "__main__":
    key = jax.random.PRNGKey(0)
    k_tgt, k_src, k_p = jax.random.split(key, 3)
    B, Tq, Tk = 2, 8, 10
    tgt = jax.random.normal(k_tgt, (B, Tq, D_MODEL), jnp.float32)
    src = jax.random.normal(k_src, (B, Tk, D_MODEL), jnp.float32)

    params = init_params(k_p)
    w_slab, vec_slab = pack_params(params)

    output = transformer_decoder(tgt, src, w_slab, vec_slab, num_layers=NUM_LAYERS)
    output = jax.block_until_ready(output)

    assert output.shape == tgt.shape and output.dtype == tgt.dtype
    assert bool(jnp.all(jnp.isfinite(output)))
    print("KERNEL_OK")
</pallas_src>

<mosaic_0001>
module attributes {stable_mosaic.version = 11 : i64} {
  func.func @decoder_layer_kernel(%arg0: i32, %arg1: memref<16x32xf32, #tpu.memory_space<vmem>>, %arg2: memref<20x32xf32, #tpu.memory_space<vmem>>, %arg3: memref<320x128xf32, #tpu.memory_space<vmem>>, %arg4: memref<16x128xf32, #tpu.memory_space<vmem>>, %arg5: memref<16x32xf32, #tpu.memory_space<vmem>>, %arg6: memref<16x32xf32, #tpu.memory_space<vmem>>) attributes {dimension_semantics = [#tpu.dimension_semantics<arbitrary>], iteration_bounds = array<i64: 1>, scalar_prefetch = 0 : i64, scratch_operands = 1 : i64, tpu.core_type = #tpu.core_type<tc>, window_params = [{pipeline_mode = #tpu.pipeline_mode<synchronous>, transform_indices = @transform_0, window_bounds = array<i64: 16, 32>}, {pipeline_mode = #tpu.pipeline_mode<synchronous>, transform_indices = @transform_1, window_bounds = array<i64: 20, 32>}, {pipeline_mode = #tpu.pipeline_mode<synchronous>, transform_indices = @transform_2, window_bounds = array<i64: 320, 128>}, {pipeline_mode = #tpu.pipeline_mode<synchronous>, transform_indices = @transform_3, window_bounds = array<i64: 16, 128>}, {pipeline_mode = #tpu.pipeline_mode<synchronous>, transform_indices = @transform_4, window_bounds = array<i64: 16, 32>}]} {
    %c0 = arith.constant 0 : index
    %c0_0 = arith.constant 0 : index
    %0 = vector.load %arg1[%c0, %c0_0] : memref<16x32xf32, #tpu.memory_space<vmem>>, vector<16x32xf32>
    %c0_1 = arith.constant 0 : index
    %c0_2 = arith.constant 0 : index
    %1 = vector.load %arg3[%c0_1, %c0_2] : memref<320x128xf32, #tpu.memory_space<vmem>>, vector<32x128xf32>
    %cst = arith.constant dense<0.000000e+00> : vector<16x128xf32>
    %2 = tpu.matmul %0, %1, %cst {dimension_numbers = #tpu.dot_dimension_numbers<[1], [0], [0], [1], [0, 0, 1, 1], [], []>} : vector<16x32xf32>, vector<32x128xf32>, vector<16x128xf32> -> vector<16x128xf32>
    %c0_3 = arith.constant 0 : index
    %c0_4 = arith.constant 0 : index
    %3 = vector.load %arg4[%c0_3, %c0_4] : memref<16x128xf32, #tpu.memory_space<vmem>>, vector<1x128xf32>
    %4 = vector.broadcast %3 : vector<1x128xf32> to vector<16x128xf32>
    %5 = arith.addf %2, %4 : vector<16x128xf32>
    %c96 = arith.constant 96 : index
    %c0_5 = arith.constant 0 : index
    %6 = vector.load %arg3[%c96, %c0_5] : memref<320x128xf32, #tpu.memory_space<vmem>>, vector<32x32xf32>
    %c3 = arith.constant 3 : index
    %c0_6 = arith.constant 0 : index
    %7 = vector.load %arg4[%c3, %c0_6] : memref<16x128xf32, #tpu.memory_space<vmem>>, vector<1x32xf32>
    %8 = vector.extract_strided_slice %0 {offsets = [0, 0], sizes = [8, 32], strides = [1, 1]} : vector<16x32xf32> to vector<8x32xf32>
    %9 = vector.broadcast %7 : vector<1x32xf32> to vector<8x32xf32>
    %10 = arith.addf %8, %9 : vector<8x32xf32>
    %11 = vector.extract_strided_slice %5 {offsets = [0, 0], sizes = [8, 8], strides = [1, 1]} : vector<16x128xf32> to vector<8x8xf32>
    %12 = vector.extract_strided_slice %5 {offsets = [0, 32], sizes = [8, 8], strides = [1, 1]} : vector<16x128xf32> to vector<8x8xf32>
    %13 = vector.extract_strided_slice %5 {offsets = [0, 64], sizes = [8, 8], strides = [1, 1]} : vector<16x128xf32> to vector<8x8xf32>
    %cst_7 = arith.constant dense<0.000000e+00> : vector<8x8xf32>
    %14 = tpu.matmul %11, %12, %cst_7 {dimension_numbers = #tpu.dot_dimension_numbers<[1], [1], [0], [0], [0, 0, 1, 0], [], []>} : vector<8x8xf32>, vector<8x8xf32>, vector<8x8xf32> -> vector<8x8xf32>
    %cst_8 = arith.constant dense<0xFF800000> : vector<8xf32>
    %15 = vector.multi_reduction <maximumf>, %14, %cst_8 [1] : vector<8x8xf32> to vector<8xf32>
    %16 = vector.shape_cast %15 : vector<8xf32> to vector<8x1xf32>
    %17 = vector.broadcast %16 : vector<8x1xf32> to vector<8x8xf32>
    %18 = arith.subf %14, %17 : vector<8x8xf32>
    %19 = math.exp %18 : vector<8x8xf32>
    %cst_9 = arith.constant dense<0.000000e+00> : vector<8xf32>
    %20 = vector.multi_reduction <add>, %19, %cst_9 [1] : vector<8x8xf32> to vector<8xf32>
    %21 = vector.shape_cast %20 : vector<8xf32> to vector<8x1xf32>
    %22 = tpu.reciprocal %21 {approx = true} : vector<8x1xf32> -> vector<8x1xf32>
    %23 = vector.broadcast %22 : vector<8x1xf32> to vector<8x8xf32>
    %24 = arith.mulf %19, %23 : vector<8x8xf32>
    %cst_10 = arith.constant dense<0.000000e+00> : vector<8x8xf32>
    %25 = tpu.matmul %24, %13, %cst_10 {dimension_numbers = #tpu.dot_dimension_numbers<[1], [0], [0], [1], [0, 0, 1, 1], [], []>} : vector<8x8xf32>, vector<8x8xf32>, vector<8x8xf32> -> vector<8x8xf32>
    %26 = vector.extract_strided_slice %6 {offsets = [0, 0], sizes = [8, 32], strides = [1, 1]} : vector<32x32xf32> to vector<8x32xf32>
    %cst_11 = arith.constant dense<0.000000e+00> : vector<8x32xf32>
    %27 = tpu.matmul %25, %26, %cst_11 {dimension_numbers = #tpu.dot_dimension_numbers<[1], [0], [0], [1], [0, 0, 1, 1], [], []>} : vector<8x8xf32>, vector<8x32xf32>, vector<8x32xf32> -> vector<8x32xf32>
    %28 = arith.addf %10, %27 : vector<8x32xf32>
    %29 = vector.extract_strided_slice %5 {offsets = [0, 8], sizes = [8, 8], strides = [1, 1]} : vector<16x128xf32> to vector<8x8xf32>
    %30 = vector.extract_strided_slice %5 {offsets = [0, 40], sizes = [8, 8], strides = [1, 1]} : vector<16x128xf32> to vector<8x8xf32>
    %31 = vector.extract_strided_slice %5 {offsets = [0, 72], sizes = [8, 8], strides = [1, 1]} : vector<16x128xf32> to vector<8x8xf32>
    %cst_12 = arith.constant dense<0.000000e+00> : vector<8x8xf32>
    %32 = tpu.matmul %29, %30, %cst_12 {dimension_numbers = #tpu.dot_dimension_numbers<[1], [1], [0], [0], [0, 0, 1, 0], [], []>} : vector<8x8xf32>, vector<8x8xf32>, vector<8x8xf32> -> vector<8x8xf32>
    %cst_13 = arith.constant dense<0xFF800000> : vector<8xf32>
    %33 = vector.multi_reduction <maximumf>, %32, %cst_13 [1] : vector<8x8xf32> to vector<8xf32>
    %34 = vector.shape_cast %33 : vector<8xf32> to vector<8x1xf32>
    %35 = vector.broadcast %34 : vector<8x1xf32> to vector<8x8xf32>
    %36 = arith.subf %32, %35 : vector<8x8xf32>
    %37 = math.exp %36 : vector<8x8xf32>
    %cst_14 = arith.constant dense<0.000000e+00> : vector<8xf32>
    %38 = vector.multi_reduction <add>, %37, %cst_14 [1] : vector<8x8xf32> to vector<8xf32>
    %39 = vector.shape_cast %38 : vector<8xf32> to vector<8x1xf32>
    %40 = tpu.reciprocal %39 {approx = true} : vector<8x1xf32> -> vector<8x1xf32>
    %41 = vector.broadcast %40 : vector<8x1xf32> to vector<8x8xf32>
    %42 = arith.mulf %37, %41 : vector<8x8xf32>
    %cst_15 = arith.constant dense<0.000000e+00> : vector<8x8xf32>
    %43 = tpu.matmul %42, %31, %cst_15 {dimension_numbers = #tpu.dot_dimension_numbers<[1], [0], [0], [1], [0, 0, 1, 1], [], []>} : vector<8x8xf32>, vector<8x8xf32>, vector<8x8xf32> -> vector<8x8xf32>
    %44 = vector.extract_strided_slice %6 {offsets = [8, 0], sizes = [8, 32], strides = [1, 1]} : vector<32x32xf32> to vector<8x32xf32>
    %cst_16 = arith.constant dense<0.000000e+00> : vector<8x32xf32>
    %45 = tpu.matmul %43, %44, %cst_16 {dimension_numbers = #tpu.dot_dimension_numbers<[1], [0], [0], [1], [0, 0, 1, 1], [], []>} : vector<8x8xf32>, vector<8x32xf32>, vector<8x32xf32> -> vector<8x32xf32>
    %46 = arith.addf %28, %45 : vector<8x32xf32>
    %47 = vector.extract_strided_slice %5 {offsets = [0, 16], sizes = [8, 8], strides = [1, 1]} : vector<16x128xf32> to vector<8x8xf32>
    %48 = vector.extract_strided_slice %5 {offsets = [0, 48], sizes = [8, 8], strides = [1, 1]} : vector<16x128xf32> to vector<8x8xf32>
    %49 = vector.extract_strided_slice %5 {offsets = [0, 80], sizes = [8, 8], strides = [1, 1]} : vector<16x128xf32> to vector<8x8xf32>
    %cst_17 = arith.constant dense<0.000000e+00> : vector<8x8xf32>
    %50 = tpu.matmul %47, %48, %cst_17 {dimension_numbers = #tpu.dot_dimension_numbers<[1], [1], [0], [0], [0, 0, 1, 0], [], []>} : vector<8x8xf32>, vector<8x8xf32>, vector<8x8xf32> -> vector<8x8xf32>
    %cst_18 = arith.constant dense<0xFF800000> : vector<8xf32>
    %51 = vector.multi_reduction <maximumf>, %50, %cst_18 [1] : vector<8x8xf32> to vector<8xf32>
    %52 = vector.shape_cast %51 : vector<8xf32> to vector<8x1xf32>
    %53 = vector.broadcast %52 : vector<8x1xf32> to vector<8x8xf32>
    %54 = arith.subf %50, %53 : vector<8x8xf32>
    %55 = math.exp %54 : vector<8x8xf32>
    %cst_19 = arith.constant dense<0.000000e+00> : vector<8xf32>
    %56 = vector.multi_reduction <add>, %55, %cst_19 [1] : vector<8x8xf32> to vector<8xf32>
    %57 = vector.shape_cast %56 : vector<8xf32> to vector<8x1xf32>
    %58 = tpu.reciprocal %57 {approx = true} : vector<8x1xf32> -> vector<8x1xf32>
    %59 = vector.broadcast %58 : vector<8x1xf32> to vector<8x8xf32>
    %60 = arith.mulf %55, %59 : vector<8x8xf32>
    %cst_20 = arith.constant dense<0.000000e+00> : vector<8x8xf32>
    %61 = tpu.matmul %60, %49, %cst_20 {dimension_numbers = #tpu.dot_dimension_numbers<[1], [0], [0], [1], [0, 0, 1, 1], [], []>} : vector<8x8xf32>, vector<8x8xf32>, vector<8x8xf32> -> vector<8x8xf32>
    %62 = vector.extract_strided_slice %6 {offsets = [16, 0], sizes = [8, 32], strides = [1, 1]} : vector<32x32xf32> to vector<8x32xf32>
    %cst_21 = arith.constant dense<0.000000e+00> : vector<8x32xf32>
    %63 = tpu.matmul %61, %62, %cst_21 {dimension_numbers = #tpu.dot_dimension_numbers<[1], [0], [0], [1], [0, 0, 1, 1], [], []>} : vector<8x8xf32>, vector<8x32xf32>, vector<8x32xf32> -> vector<8x32xf32>
    %64 = arith.addf %46, %63 : vector<8x32xf32>
    %65 = vector.extract_strided_slice %5 {offsets = [0, 24], sizes = [8, 8], strides = [1, 1]} : vector<16x128xf32> to vector<8x8xf32>
    %66 = vector.extract_strided_slice %5 {offsets = [0, 56], sizes = [8, 8], strides = [1, 1]} : vector<16x128xf32> to vector<8x8xf32>
    %67 = vector.extract_strided_slice %5 {offsets = [0, 88], sizes = [8, 8], strides = [1, 1]} : vector<16x128xf32> to vector<8x8xf32>
    %cst_22 = arith.constant dense<0.000000e+00> : vector<8x8xf32>
    %68 = tpu.matmul %65, %66, %cst_22 {dimension_numbers = #tpu.dot_dimension_numbers<[1], [1], [0], [0], [0, 0, 1, 0], [], []>} : vector<8x8xf32>, vector<8x8xf32>, vector<8x8xf32> -> vector<8x8xf32>
    %cst_23 = arith.constant dense<0xFF800000> : vector<8xf32>
    %69 = vector.multi_reduction <maximumf>, %68, %cst_23 [1] : vector<8x8xf32> to vector<8xf32>
    %70 = vector.shape_cast %69 : vector<8xf32> to vector<8x1xf32>
    %71 = vector.broadcast %70 : vector<8x1xf32> to vector<8x8xf32>
    %72 = arith.subf %68, %71 : vector<8x8xf32>
    %73 = math.exp %72 : vector<8x8xf32>
    %cst_24 = arith.constant dense<0.000000e+00> : vector<8xf32>
    %74 = vector.multi_reduction <add>, %73, %cst_24 [1] : vector<8x8xf32> to vector<8xf32>
    %75 = vector.shape_cast %74 : vector<8xf32> to vector<8x1xf32>
    %76 = tpu.reciprocal %75 {approx = true} : vector<8x1xf32> -> vector<8x1xf32>
    %77 = vector.broadcast %76 : vector<8x1xf32> to vector<8x8xf32>
    %78 = arith.mulf %73, %77 : vector<8x8xf32>
    %cst_25 = arith.constant dense<0.000000e+00> : vector<8x8xf32>
    %79 = tpu.matmul %78, %67, %cst_25 {dimension_numbers = #tpu.dot_dimension_numbers<[1], [0], [0], [1], [0, 0, 1, 1], [], []>} : vector<8x8xf32>, vector<8x8xf32>, vector<8x8xf32> -> vector<8x8xf32>
    %80 = vector.extract_strided_slice %6 {offsets = [24, 0], sizes = [8, 32], strides = [1, 1]} : vector<32x32xf32> to vector<8x32xf32>
    %cst_26 = arith.constant dense<0.000000e+00> : vector<8x32xf32>
    %81 = tpu.matmul %79, %80, %cst_26 {dimension_numbers = #tpu.dot_dimension_numbers<[1], [0], [0], [1], [0, 0, 1, 1], [], []>} : vector<8x8xf32>, vector<8x32xf32>, vector<8x32xf32> -> vector<8x32xf32>
    %82 = arith.addf %64, %81 : vector<8x32xf32>
    %c0_27 = arith.constant 0 : index
    %c0_28 = arith.constant 0 : index
    %83 = vector.load %arg6[%c0_27, %c0_28] : memref<16x32xf32, #tpu.memory_space<vmem>>, vector<8x32xf32>
    tpu.vector_store %arg6[%c0_27, %c0_28], %82 {strides = array<i32>} : memref<16x32xf32, #tpu.memory_space<vmem>>, vector<8x32xf32>,
    %84 = vector.extract_strided_slice %0 {offsets = [8, 0], sizes = [8, 32], strides = [1, 1]} : vector<16x32xf32> to vector<8x32xf32>
    %85 = vector.broadcast %7 : vector<1x32xf32> to vector<8x32xf32>
    %86 = arith.addf %84, %85 : vector<8x32xf32>
    %87 = vector.extract_strided_slice %5 {offsets = [8, 0], sizes = [8, 8], strides = [1, 1]} : vector<16x128xf32> to vector<8x8xf32>
    %88 = vector.extract_strided_slice %5 {offsets = [8, 32], sizes = [8, 8], strides = [1, 1]} : vector<16x128xf32> to vector<8x8xf32>
    %89 = vector.extract_strided_slice %5 {offsets = [8, 64], sizes = [8, 8], strides = [1, 1]} : vector<16x128xf32> to vector<8x8xf32>
    %cst_29 = arith.constant dense<0.000000e+00> : vector<8x8xf32>
    %90 = tpu.matmul %87, %88, %cst_29 {dimension_numbers = #tpu.dot_dimension_numbers<[1], [1], [0], [0], [0, 0, 1, 0], [], []>} : vector<8x8xf32>, vector<8x8xf32>, vector<8x8xf32> -> vector<8x8xf32>
    %cst_30 = arith.constant dense<0xFF800000> : vector<8xf32>
    %91 = vector.multi_reduction <maximumf>, %90, %cst_30 [1] : vector<8x8xf32> to vector<8xf32>
    %92 = vector.shape_cast %91 : vector<8xf32> to vector<8x1xf32>
    %93 = vector.broadcast %92 : vector<8x1xf32> to vector<8x8xf32>
    %94 = arith.subf %90, %93 : vector<8x8xf32>
    %95 = math.exp %94 : vector<8x8xf32>
    %cst_31 = arith.constant dense<0.000000e+00> : vector<8xf32>
    %96 = vector.multi_reduction <add>, %95, %cst_31 [1] : vector<8x8xf32> to vector<8xf32>
    %97 = vector.shape_cast %96 : vector<8xf32> to vector<8x1xf32>
    %98 = tpu.reciprocal %97 {approx = true} : vector<8x1xf32> -> vector<8x1xf32>
    %99 = vector.broadcast %98 : vector<8x1xf32> to vector<8x8xf32>
    %100 = arith.mulf %95, %99 : vector<8x8xf32>
    %cst_32 = arith.constant dense<0.000000e+00> : vector<8x8xf32>
    %101 = tpu.matmul %100, %89, %cst_32 {dimension_numbers = #tpu.dot_dimension_numbers<[1], [0], [0], [1], [0, 0, 1, 1], [], []>} : vector<8x8xf32>, vector<8x8xf32>, vector<8x8xf32> -> vector<8x8xf32>
    %102 = vector.extract_strided_slice %6 {offsets = [0, 0], sizes = [8, 32], strides = [1, 1]} : vector<32x32xf32> to vector<8x32xf32>
    %cst_33 = arith.constant dense<0.000000e+00> : vector<8x32xf32>
    %103 = tpu.matmul %101, %102, %cst_33 {dimension_numbers = #tpu.dot_dimension_numbers<[1], [0], [0], [1], [0, 0, 1, 1], [], []>} : vector<8x8xf32>, vector<8x32xf32>, vector<8x32xf32> -> vector<8x32xf32>
    %104 = arith.addf %86, %103 : vector<8x32xf32>
    %105 = vector.extract_strided_slice %5 {offsets = [8, 8], sizes = [8, 8], strides = [1, 1]} : vector<16x128xf32> to vector<8x8xf32>
    %106 = vector.extract_strided_slice %5 {offsets = [8, 40], sizes = [8, 8], strides = [1, 1]} : vector<16x128xf32> to vector<8x8xf32>
    %107 = vector.extract_strided_slice %5 {offsets = [8, 72], sizes = [8, 8], strides = [1, 1]} : vector<16x128xf32> to vector<8x8xf32>
    %cst_34 = arith.constant dense<0.000000e+00> : vector<8x8xf32>
    %108 = tpu.matmul %105, %106, %cst_34 {dimension_numbers = #tpu.dot_dimension_numbers<[1], [1], [0], [0], [0, 0, 1, 0], [], []>} : vector<8x8xf32>, vector<8x8xf32>, vector<8x8xf32> -> vector<8x8xf32>
    %cst_35 = arith.constant dense<0xFF800000> : vector<8xf32>
    %109 = vector.multi_reduction <maximumf>, %108, %cst_35 [1] : vector<8x8xf32> to vector<8xf32>
    %110 = vector.shape_cast %109 : vector<8xf32> to vector<8x1xf32>
    %111 = vector.broadcast %110 : vector<8x1xf32> to vector<8x8xf32>
    %112 = arith.subf %108, %111 : vector<8x8xf32>
    %113 = math.exp %112 : vector<8x8xf32>
    %cst_36 = arith.constant dense<0.000000e+00> : vector<8xf32>
    %114 = vector.multi_reduction <add>, %113, %cst_36 [1] : vector<8x8xf32> to vector<8xf32>
    %115 = vector.shape_cast %114 : vector<8xf32> to vector<8x1xf32>
    %116 = tpu.reciprocal %115 {approx = true} : vector<8x1xf32> -> vector<8x1xf32>
    %117 = vector.broadcast %116 : vector<8x1xf32> to vector<8x8xf32>
    %118 = arith.mulf %113, %117 : vector<8x8xf32>
    %cst_37 = arith.constant dense<0.000000e+00> : vector<8x8xf32>
    %119 = tpu.matmul %118, %107, %cst_37 {dimension_numbers = #tpu.dot_dimension_numbers<[1], [0], [0], [1], [0, 0, 1, 1], [], []>} : vector<8x8xf32>, vector<8x8xf32>, vector<8x8xf32> -> vector<8x8xf32>
    %120 = vector.extract_strided_slice %6 {offsets = [8, 0], sizes = [8, 32], strides = [1, 1]} : vector<32x32xf32> to vector<8x32xf32>
    %cst_38 = arith.constant dense<0.000000e+00> : vector<8x32xf32>
    %121 = tpu.matmul %119, %120, %cst_38 {dimension_numbers = #tpu.dot_dimension_numbers<[1], [0], [0], [1], [0, 0, 1, 1], [], []>} : vector<8x8xf32>, vector<8x32xf32>, vector<8x32xf32> -> vector<8x32xf32>
    %122 = arith.addf %104, %121 : vector<8x32xf32>
    %123 = vector.extract_strided_slice %5 {offsets = [8, 16], sizes = [8, 8], strides = [1, 1]} : vector<16x128xf32> to vector<8x8xf32>
    %124 = vector.extract_strided_slice %5 {offsets = [8, 48], sizes = [8, 8], strides = [1, 1]} : vector<16x128xf32> to vector<8x8xf32>
    %125 = vector.extract_strided_slice %5 {offsets = [8, 80], sizes = [8, 8], strides = [1, 1]} : vector<16x128xf32> to vector<8x8xf32>
    %cst_39 = arith.constant dense<0.000000e+00> : vector<8x8xf32>
    %126 = tpu.matmul %123, %124, %cst_39 {dimension_numbers = #tpu.dot_dimension_numbers<[1], [1], [0], [0], [0, 0, 1, 0], [], []>} : vector<8x8xf32>, vector<8x8xf32>, vector<8x8xf32> -> vector<8x8xf32>
    %cst_40 = arith.constant dense<0xFF800000> : vector<8xf32>
    %127 = vector.multi_reduction <maximumf>, %126, %cst_40 [1] : vector<8x8xf32> to vector<8xf32>
    %128 = vector.shape_cast %127 : vector<8xf32> to vector<8x1xf32>
    %129 = vector.broadcast %128 : vector<8x1xf32> to vector<8x8xf32>
    %130 = arith.subf %126, %129 : vector<8x8xf32>
    %131 = math.exp %130 : vector<8x8xf32>
    %cst_41 = arith.constant dense<0.000000e+00> : vector<8xf32>
    %132 = vector.multi_reduction <add>, %131, %cst_41 [1] : vector<8x8xf32> to vector<8xf32>
    %133 = vector.shape_cast %132 : vector<8xf32> to vector<8x1xf32>
    %134 = tpu.reciprocal %133 {approx = true} : vector<8x1xf32> -> vector<8x1xf32>
    %135 = vector.broadcast %134 : vector<8x1xf32> to vector<8x8xf32>
    %136 = arith.mulf %131, %135 : vector<8x8xf32>
    %cst_42 = arith.constant dense<0.000000e+00> : vector<8x8xf32>
    %137 = tpu.matmul %136, %125, %cst_42 {dimension_numbers = #tpu.dot_dimension_numbers<[1], [0], [0], [1], [0, 0, 1, 1], [], []>} : vector<8x8xf32>, vector<8x8xf32>, vector<8x8xf32> -> vector<8x8xf32>
    %138 = vector.extract_strided_slice %6 {offsets = [16, 0], sizes = [8, 32], strides = [1, 1]} : vector<32x32xf32> to vector<8x32xf32>
    %cst_43 = arith.constant dense<0.000000e+00> : vector<8x32xf32>
    %139 = tpu.matmul %137, %138, %cst_43 {dimension_numbers = #tpu.dot_dimension_numbers<[1], [0], [0], [1], [0, 0, 1, 1], [], []>} : vector<8x8xf32>, vector<8x32xf32>, vector<8x32xf32> -> vector<8x32xf32>
    %140 = arith.addf %122, %139 : vector<8x32xf32>
    %141 = vector.extract_strided_slice %5 {offsets = [8, 24], sizes = [8, 8], strides = [1, 1]} : vector<16x128xf32> to vector<8x8xf32>
    %142 = vector.extract_strided_slice %5 {offsets = [8, 56], sizes = [8, 8], strides = [1, 1]} : vector<16x128xf32> to vector<8x8xf32>
    %143 = vector.extract_strided_slice %5 {offsets = [8, 88], sizes = [8, 8], strides = [1, 1]} : vector<16x128xf32> to vector<8x8xf32>
    %cst_44 = arith.constant dense<0.000000e+00> : vector<8x8xf32>
    %144 = tpu.matmul %141, %142, %cst_44 {dimension_numbers = #tpu.dot_dimension_numbers<[1], [1], [0], [0], [0, 0, 1, 0], [], []>} : vector<8x8xf32>, vector<8x8xf32>, vector<8x8xf32> -> vector<8x8xf32>
    %cst_45 = arith.constant dense<0xFF800000> : vector<8xf32>
    %145 = vector.multi_reduction <maximumf>, %144, %cst_45 [1] : vector<8x8xf32> to vector<8xf32>
    %146 = vector.shape_cast %145 : vector<8xf32> to vector<8x1xf32>
    %147 = vector.broadcast %146 : vector<8x1xf32> to vector<8x8xf32>
    %148 = arith.subf %144, %147 : vector<8x8xf32>
    %149 = math.exp %148 : vector<8x8xf32>
    %cst_46 = arith.constant dense<0.000000e+00> : vector<8xf32>
    %150 = vector.multi_reduction <add>, %149, %cst_46 [1] : vector<8x8xf32> to vector<8xf32>
    %151 = vector.shape_cast %150 : vector<8xf32> to vector<8x1xf32>
    %152 = tpu.reciprocal %151 {approx = true} : vector<8x1xf32> -> vector<8x1xf32>
    %153 = vector.broadcast %152 : vector<8x1xf32> to vector<8x8xf32>
    %154 = arith.mulf %149, %153 : vector<8x8xf32>
    %cst_47 = arith.constant dense<0.000000e+00> : vector<8x8xf32>
    %155 = tpu.matmul %154, %143, %cst_47 {dimension_numbers = #tpu.dot_dimension_numbers<[1], [0], [0], [1], [0, 0, 1, 1], [], []>} : vector<8x8xf32>, vector<8x8xf32>, vector<8x8xf32> -> vector<8x8xf32>
    %156 = vector.extract_strided_slice %6 {offsets = [24, 0], sizes = [8, 32], strides = [1, 1]} : vector<32x32xf32> to vector<8x32xf32>
    %cst_48 = arith.constant dense<0.000000e+00> : vector<8x32xf32>
    %157 = tpu.matmul %155, %156, %cst_48 {dimension_numbers = #tpu.dot_dimension_numbers<[1], [0], [0], [1], [0, 0, 1, 1], [], []>} : vector<8x8xf32>, vector<8x32xf32>, vector<8x32xf32> -> vector<8x32xf32>
    %158 = arith.addf %140, %157 : vector<8x32xf32>
    %c8 = arith.constant 8 : index
    %c0_49 = arith.constant 0 : index
    %159 = vector.load %arg6[%c8, %c0_49] : memref<16x32xf32, #tpu.memory_space<vmem>>, vector<8x32xf32>
    tpu.vector_store %arg6[%c8, %c0_49], %158 {strides = array<i32>} : memref<16x32xf32, #tpu.memory_space<vmem>>, vector<8x32xf32>,
    %c0_50 = arith.constant 0 : index
    %c0_51 = arith.constant 0 : index
    %160 = vector.load %arg6[%c0_50, %c0_51] : memref<16x32xf32, #tpu.memory_space<vmem>>, vector<16x32xf32>
    %c7 = arith.constant 7 : index
    %c0_52 = arith.constant 0 : index
    %161 = vector.load %arg4[%c7, %c0_52] : memref<16x128xf32, #tpu.memory_space<vmem>>, vector<1x32xf32>
    %c8_53 = arith.constant 8 : index
    %c0_54 = arith.constant 0 : index
    %162 = vector.load %arg4[%c8_53, %c0_54] : memref<16x128xf32, #tpu.memory_space<vmem>>, vector<1x32xf32>
    %cst_55 = arith.constant dense<0.000000e+00> : vector<16xf32>
    %163 = vector.multi_reduction <add>, %160, %cst_55 [1] : vector<16x32xf32> to vector<16xf32>
    %164 = vector.shape_cast %163 : vector<16xf32> to vector<16x1xf32>
    %cst_56 = arith.constant 3.200000e+01 : f32
    %165 = vector.broadcast %cst_56 : f32 to vector<16x1xf32>
    %166 = arith.divf %164, %165 : vector<16x1xf32>
    %167 = arith.mulf %160, %160 : vector<16x32xf32>
    %cst_57 = arith.constant dense<0.000000e+00> : vector<16xf32>
    %168 = vector.multi_reduction <add>, %167, %cst_57 [1] : vector<16x32xf32> to vector<16xf32>
    %169 = vector.shape_cast %168 : vector<16xf32> to vector<16x1xf32>
    %cst_58 = arith.constant 3.200000e+01 : f32
    %170 = vector.broadcast %cst_58 : f32 to vector<16x1xf32>
    %171 = arith.divf %169, %170 : vector<16x1xf32>
    %172 = arith.mulf %166, %166 : vector<16x1xf32>
    %173 = arith.subf %171, %172 : vector<16x1xf32>
    %174 = vector.broadcast %166 : vector<16x1xf32> to vector<16x32xf32>
    %175 = arith.subf %160, %174 : vector<16x32xf32>
    %cst_59 = arith.constant 9.99999974E-6 : f32
    %176 = vector.broadcast %cst_59 : f32 to vector<16x1xf32>
    %177 = arith.addf %173, %176 : vector<16x1xf32>
    %178 = math.rsqrt %177 : vector<16x1xf32>
    %179 = vector.broadcast %178 : vector<16x1xf32> to vector<16x32xf32>
    %180 = arith.mulf %175, %179 : vector<16x32xf32>
    %181 = vector.broadcast %161 : vector<1x32xf32> to vector<16x32xf32>
    %182 = arith.mulf %180, %181 : vector<16x32xf32>
    %183 = vector.broadcast %162 : vector<1x32xf32> to vector<16x32xf32>
    %184 = arith.addf %182, %183 : vector<16x32xf32>
    %c0_60 = arith.constant 0 : index
    %c0_61 = arith.constant 0 : index
    %185 = vector.load %arg2[%c0_60, %c0_61] : memref<20x32xf32, #tpu.memory_space<vmem>>, vector<20x32xf32>
    %c32 = arith.constant 32 : index
    %c0_62 = arith.constant 0 : index
    %186 = vector.load %arg3[%c32, %c0_62] : memref<320x128xf32, #tpu.memory_space<vmem>>, vector<32x128xf32>
    %cst_63 = arith.constant dense<0.000000e+00> : vector<16x128xf32>
    %187 = tpu.matmul %184, %186, %cst_63 {dimension_numbers = #tpu.dot_dimension_numbers<[1], [0], [0], [1], [0, 0, 1, 1], [], []>} : vector<16x32xf32>, vector<32x128xf32>, vector<16x128xf32> -> vector<16x128xf32>
    %c1 = arith.constant 1 : index
    %c0_64 = arith.constant 0 : index
    %188 = vector.load %arg4[%c1, %c0_64] : memref<16x128xf32, #tpu.memory_space<vmem>>, vector<1x128xf32>
    %189 = vector.broadcast %188 : vector<1x128xf32> to vector<16x128xf32>
    %190 = arith.addf %187, %189 : vector<16x128xf32>
    %c64 = arith.constant 64 : index
    %c0_65 = arith.constant 0 : index
    %191 = vector.load %arg3[%c64, %c0_65] : memref<320x128xf32, #tpu.memory_space<vmem>>, vector<32x128xf32>
    %cst_66 = arith.constant dense<0.000000e+00> : vector<20x128xf32>
    %192 = tpu.matmul %185, %191, %cst_66 {dimension_numbers = #tpu.dot_dimension_numbers<[1], [0], [0], [1], [0, 0, 1, 1], [], []>} : vector<20x32xf32>, vector<32x128xf32>, vector<20x128xf32> -> vector<20x128xf32>
    %c2 = arith.constant 2 : index
    %c0_67 = arith.constant 0 : index
    %193 = vector.load %arg4[%c2, %c0_67] : memref<16x128xf32, #tpu.memory_space<vmem>>, vector<1x128xf32>
    %194 = vector.broadcast %193 : vector<1x128xf32> to vector<20x128xf32>
    %195 = arith.addf %192, %194 : vector<20x128xf32>
    %c128 = arith.constant 128 : index
    %c0_68 = arith.constant 0 : index
    %196 = vector.load %arg3[%c128, %c0_68] : memref<320x128xf32, #tpu.memory_space<vmem>>, vector<32x32xf32>
    %c4 = arith.constant 4 : index
    %c0_69 = arith.constant 0 : index
    %197 = vector.load %arg4[%c4, %c0_69] : memref<16x128xf32, #tpu.memory_space<vmem>>, vector<1x32xf32>
    %198 = vector.extract_strided_slice %184 {offsets = [0, 0], sizes = [8, 32], strides = [1, 1]} : vector<16x32xf32> to vector<8x32xf32>
    %199 = vector.broadcast %197 : vector<1x32xf32> to vector<8x32xf32>
    %200 = arith.addf %198, %199 : vector<8x32xf32>
    %201 = vector.extract_strided_slice %190 {offsets = [0, 0], sizes = [8, 8], strides = [1, 1]} : vector<16x128xf32> to vector<8x8xf32>
    %202 = vector.extract_strided_slice %195 {offsets = [0, 0], sizes = [10, 8], strides = [1, 1]} : vector<20x128xf32> to vector<10x8xf32>
    %203 = vector.extract_strided_slice %195 {offsets = [0, 32], sizes = [10, 8], strides = [1, 1]} : vector<20x128xf32> to vector<10x8xf32>
    %cst_70 = arith.constant dense<0.000000e+00> : vector<8x10xf32>
    %204 = tpu.matmul %201, %202, %cst_70 {dimension_numbers = #tpu.dot_dimension_numbers<[1], [1], [0], [0], [0, 0, 1, 0], [], []>} : vector<8x8xf32>, vector<10x8xf32>, vector<8x10xf32> -> vector<8x10xf32>
    %cst_71 = arith.constant dense<0xFF800000> : vector<8xf32>
    %205 = vector.multi_reduction <maximumf>, %204, %cst_71 [1] : vector<8x10xf32> to vector<8xf32>
    %206 = vector.shape_cast %205 : vector<8xf32> to vector<8x1xf32>
    %207 = vector.broadcast %206 : vector<8x1xf32> to vector<8x10xf32>
    %208 = arith.subf %204, %207 : vector<8x10xf32>
    %209 = math.exp %208 : vector<8x10xf32>
    %cst_72 = arith.constant dense<0.000000e+00> : vector<8xf32>
    %210 = vector.multi_reduction <add>, %209, %cst_72 [1] : vector<8x10xf32> to vector<8xf32>
    %211 = vector.shape_cast %210 : vector<8xf32> to vector<8x1xf32>
    %212 = tpu.reciprocal %211 {approx = true} : vector<8x1xf32> -> vector<8x1xf32>
    %213 = vector.broadcast %212 : vector<8x1xf32> to vector<8x10xf32>
    %214 = arith.mulf %209, %213 : vector<8x10xf32>
    %cst_73 = arith.constant dense<0.000000e+00> : vector<8x8xf32>
    %215 = tpu.matmul %214, %203, %cst_73 {dimension_numbers = #tpu.dot_dimension_numbers<[1], [0], [0], [1], [0, 0, 1, 1], [], []>} : vector<8x10xf32>, vector<10x8xf32>, vector<8x8xf32> -> vector<8x8xf32>
    %216 = vector.extract_strided_slice %196 {offsets = [0, 0], sizes = [8, 32], strides = [1, 1]} : vector<32x32xf32> to vector<8x32xf32>
    %cst_74 = arith.constant dense<0.000000e+00> : vector<8x32xf32>
    %217 = tpu.matmul %215, %216, %cst_74 {dimension_numbers = #tpu.dot_dimension_numbers<[1], [0], [0], [1], [0, 0, 1, 1], [], []>} : vector<8x8xf32>, vector<8x32xf32>, vector<8x32xf32> -> vector<8x32xf32>
    %218 = arith.addf %200, %217 : vector<8x32xf32>
    %219 = vector.extract_strided_slice %190 {offsets = [0, 8], sizes = [8, 8], strides = [1, 1]} : vector<16x128xf32> to vector<8x8xf32>
    %220 = vector.extract_strided_slice %195 {offsets = [0, 8], sizes = [10, 8], strides = [1, 1]} : vector<20x128xf32> to vector<10x8xf32>
    %221 = vector.extract_strided_slice %195 {offsets = [0, 40], sizes = [10, 8], strides = [1, 1]} : vector<20x128xf32> to vector<10x8xf32>
    %cst_75 = arith.constant dense<0.000000e+00> : vector<8x10xf32>
    %222 = tpu.matmul %219, %220, %cst_75 {dimension_numbers = #tpu.dot_dimension_numbers<[1], [1], [0], [0], [0, 0, 1, 0], [], []>} : vector<8x8xf32>, vector<10x8xf32>, vector<8x10xf32> -> vector<8x10xf32>
    %cst_76 = arith.constant dense<0xFF800000> : vector<8xf32>
    %223 = vector.multi_reduction <maximumf>, %222, %cst_76 [1] : vector<8x10xf32> to vector<8xf32>
    %224 = vector.shape_cast %223 : vector<8xf32> to vector<8x1xf32>
    %225 = vector.broadcast %224 : vector<8x1xf32> to vector<8x10xf32>
    %226 = arith.subf %222, %225 : vector<8x10xf32>
    %227 = math.exp %226 : vector<8x10xf32>
    %cst_77 = arith.constant dense<0.000000e+00> : vector<8xf32>
    %228 = vector.multi_reduction <add>, %227, %cst_77 [1] : vector<8x10xf32> to vector<8xf32>
    %229 = vector.shape_cast %228 : vector<8xf32> to vector<8x1xf32>
    %230 = tpu.reciprocal %229 {approx = true} : vector<8x1xf32> -> vector<8x1xf32>
    %231 = vector.broadcast %230 : vector<8x1xf32> to vector<8x10xf32>
    %232 = arith.mulf %227, %231 : vector<8x10xf32>
    %cst_78 = arith.constant dense<0.000000e+00> : vector<8x8xf32>
    %233 = tpu.matmul %232, %221, %cst_78 {dimension_numbers = #tpu.dot_dimension_numbers<[1], [0], [0], [1], [0, 0, 1, 1], [], []>} : vector<8x10xf32>, vector<10x8xf32>, vector<8x8xf32> -> vector<8x8xf32>
    %234 = vector.extract_strided_slice %196 {offsets = [8, 0], sizes = [8, 32], strides = [1, 1]} : vector<32x32xf32> to vector<8x32xf32>
    %cst_79 = arith.constant dense<0.000000e+00> : vector<8x32xf32>
    %235 = tpu.matmul %233, %234, %cst_79 {dimension_numbers = #tpu.dot_dimension_numbers<[1], [0], [0], [1], [0, 0, 1, 1], [], []>} : vector<8x8xf32>, vector<8x32xf32>, vector<8x32xf32> -> vector<8x32xf32>
    %236 = arith.addf %218, %235 : vector<8x32xf32>
    %237 = vector.extract_strided_slice %190 {offsets = [0, 16], sizes = [8, 8], strides = [1, 1]} : vector<16x128xf32> to vector<8x8xf32>
    %238 = vector.extract_strided_slice %195 {offsets = [0, 16], sizes = [10, 8], strides = [1, 1]} : vector<20x128xf32> to vector<10x8xf32>
    %239 = vector.extract_strided_slice %195 {offsets = [0, 48], sizes = [10, 8], strides = [1, 1]} : vector<20x128xf32> to vector<10x8xf32>
    %cst_80 = arith.constant dense<0.000000e+00> : vector<8x10xf32>
    %240 = tpu.matmul %237, %238, %cst_80 {dimension_numbers = #tpu.dot_dimension_numbers<[1], [1], [0], [0], [0, 0, 1, 0], [], []>} : vector<8x8xf32>, vector<10x8xf32>, vector<8x10xf32> -> vector<8x10xf32>
    %cst_81 = arith.constant dense<0xFF800000> : vector<8xf32>
    %241 = vector.multi_reduction <maximumf>, %240, %cst_81 [1] : vector<8x10xf32> to vector<8xf32>
    %242 = vector.shape_cast %241 : vector<8xf32> to vector<8x1xf32>
    %243 = vector.broadcast %242 : vector<8x1xf32> to vector<8x10xf32>
    %244 = arith.subf %240, %243 : vector<8x10xf32>
    %245 = math.exp %244 : vector<8x10xf32>
    %cst_82 = arith.constant dense<0.000000e+00> : vector<8xf32>
    %246 = vector.multi_reduction <add>, %245, %cst_82 [1] : vector<8x10xf32> to vector<8xf32>
    %247 = vector.shape_cast %246 : vector<8xf32> to vector<8x1xf32>
    %248 = tpu.reciprocal %247 {approx = true} : vector<8x1xf32> -> vector<8x1xf32>
    %249 = vector.broadcast %248 : vector<8x1xf32> to vector<8x10xf32>
    %250 = arith.mulf %245, %249 : vector<8x10xf32>
    %cst_83 = arith.constant dense<0.000000e+00> : vector<8x8xf32>
    %251 = tpu.matmul %250, %239, %cst_83 {dimension_numbers = #tpu.dot_dimension_numbers<[1], [0], [0], [1], [0, 0, 1, 1], [], []>} : vector<8x10xf32>, vector<10x8xf32>, vector<8x8xf32> -> vector<8x8xf32>
    %252 = vector.extract_strided_slice %196 {offsets = [16, 0], sizes = [8, 32], strides = [1, 1]} : vector<32x32xf32> to vector<8x32xf32>
    %cst_84 = arith.constant dense<0.000000e+00> : vector<8x32xf32>
    %253 = tpu.matmul %251, %252, %cst_84 {dimension_numbers = #tpu.dot_dimension_numbers<[1], [0], [0], [1], [0, 0, 1, 1], [], []>} : vector<8x8xf32>, vector<8x32xf32>, vector<8x32xf32> -> vector<8x32xf32>
    %254 = arith.addf %236, %253 : vector<8x32xf32>
    %255 = vector.extract_strided_slice %190 {offsets = [0, 24], sizes = [8, 8], strides = [1, 1]} : vector<16x128xf32> to vector<8x8xf32>
    %256 = vector.extract_strided_slice %195 {offsets = [0, 24], sizes = [10, 8], strides = [1, 1]} : vector<20x128xf32> to vector<10x8xf32>
    %257 = vector.extract_strided_slice %195 {offsets = [0, 56], sizes = [10, 8], strides = [1, 1]} : vector<20x128xf32> to vector<10x8xf32>
    %cst_85 = arith.constant dense<0.000000e+00> : vector<8x10xf32>
    %258 = tpu.matmul %255, %256, %cst_85 {dimension_numbers = #tpu.dot_dimension_numbers<[1], [1], [0], [0], [0, 0, 1, 0], [], []>} : vector<8x8xf32>, vector<10x8xf32>, vector<8x10xf32> -> vector<8x10xf32>
    %cst_86 = arith.constant dense<0xFF800000> : vector<8xf32>
    %259 = vector.multi_reduction <maximumf>, %258, %cst_86 [1] : vector<8x10xf32> to vector<8xf32>
    %260 = vector.shape_cast %259 : vector<8xf32> to vector<8x1xf32>
    %261 = vector.broadcast %260 : vector<8x1xf32> to vector<8x10xf32>
    %262 = arith.subf %258, %261 : vector<8x10xf32>
    %263 = math.exp %262 : vector<8x10xf32>
    %cst_87 = arith.constant dense<0.000000e+00> : vector<8xf32>
    %264 = vector.multi_reduction <add>, %263, %cst_87 [1] : vector<8x10xf32> to vector<8xf32>
    %265 = vector.shape_cast %264 : vector<8xf32> to vector<8x1xf32>
    %266 = tpu.reciprocal %265 {approx = true} : vector<8x1xf32> -> vector<8x1xf32>
    %267 = vector.broadcast %266 : vector<8x1xf32> to vector<8x10xf32>
    %268 = arith.mulf %263, %267 : vector<8x10xf32>
    %cst_88 = arith.constant dense<0.000000e+00> : vector<8x8xf32>
    %269 = tpu.matmul %268, %257, %cst_88 {dimension_numbers = #tpu.dot_dimension_numbers<[1], [0], [0], [1], [0, 0, 1, 1], [], []>} : vector<8x10xf32>, vector<10x8xf32>, vector<8x8xf32> -> vector<8x8xf32>
    %270 = vector.extract_strided_slice %196 {offsets = [24, 0], sizes = [8, 32], strides = [1, 1]} : vector<32x32xf32> to vector<8x32xf32>
    %cst_89 = arith.constant dense<0.000000e+00> : vector<8x32xf32>
    %271 = tpu.matmul %269, %270, %cst_89 {dimension_numbers = #tpu.dot_dimension_numbers<[1], [0], [0], [1], [0, 0, 1, 1], [], []>} : vector<8x8xf32>, vector<8x32xf32>, vector<8x32xf32> -> vector<8x32xf32>
    %272 = arith.addf %254, %271 : vector<8x32xf32>
    %c0_90 = arith.constant 0 : index
    %c0_91 = arith.constant 0 : index
    %273 = vector.load %arg6[%c0_90, %c0_91] : memref<16x32xf32, #tpu.memory_space<vmem>>, vector<8x32xf32>
    tpu.vector_store %arg6[%c0_90, %c0_91], %272 {strides = array<i32>} : memref<16x32xf32, #tpu.memory_space<vmem>>, vector<8x32xf32>,
    %274 = vector.extract_strided_slice %184 {offsets = [8, 0], sizes = [8, 32], strides = [1, 1]} : vector<16x32xf32> to vector<8x32xf32>
    %275 = vector.broadcast %197 : vector<1x32xf32> to vector<8x32xf32>
    %276 = arith.addf %274, %275 : vector<8x32xf32>
    %277 = vector.extract_strided_slice %190 {offsets = [8, 0], sizes = [8, 8], strides = [1, 1]} : vector<16x128xf32> to vector<8x8xf32>
    %278 = vector.extract_strided_slice %195 {offsets = [10, 0], sizes = [10, 8], strides = [1, 1]} : vector<20x128xf32> to vector<10x8xf32>
    %279 = vector.extract_strided_slice %195 {offsets = [10, 32], sizes = [10, 8], strides = [1, 1]} : vector<20x128xf32> to vector<10x8xf32>
    %cst_92 = arith.constant dense<0.000000e+00> : vector<8x10xf32>
    %280 = tpu.matmul %277, %278, %cst_92 {dimension_numbers = #tpu.dot_dimension_numbers<[1], [1], [0], [0], [0, 0, 1, 0], [], []>} : vector<8x8xf32>, vector<10x8xf32>, vector<8x10xf32> -> vector<8x10xf32>
    %cst_93 = arith.constant dense<0xFF800000> : vector<8xf32>
    %281 = vector.multi_reduction <maximumf>, %280, %cst_93 [1] : vector<8x10xf32> to vector<8xf32>
    %282 = vector.shape_cast %281 : vector<8xf32> to vector<8x1xf32>
    %283 = vector.broadcast %282 : vector<8x1xf32> to vector<8x10xf32>
    %284 = arith.subf %280, %283 : vector<8x10xf32>
    %285 = math.exp %284 : vector<8x10xf32>
    %cst_94 = arith.constant dense<0.000000e+00> : vector<8xf32>
    %286 = vector.multi_reduction <add>, %285, %cst_94 [1] : vector<8x10xf32> to vector<8xf32>
    %287 = vector.shape_cast %286 : vector<8xf32> to vector<8x1xf32>
    %288 = tpu.reciprocal %287 {approx = true} : vector<8x1xf32> -> vector<8x1xf32>
    %289 = vector.broadcast %288 : vector<8x1xf32> to vector<8x10xf32>
    %290 = arith.mulf %285, %289 : vector<8x10xf32>
    %cst_95 = arith.constant dense<0.000000e+00> : vector<8x8xf32>
    %291 = tpu.matmul %290, %279, %cst_95 {dimension_numbers = #tpu.dot_dimension_numbers<[1], [0], [0], [1], [0, 0, 1, 1], [], []>} : vector<8x10xf32>, vector<10x8xf32>, vector<8x8xf32> -> vector<8x8xf32>
    %292 = vector.extract_strided_slice %196 {offsets = [0, 0], sizes = [8, 32], strides = [1, 1]} : vector<32x32xf32> to vector<8x32xf32>
    %cst_96 = arith.constant dense<0.000000e+00> : vector<8x32xf32>
    %293 = tpu.matmul %291, %292, %cst_96 {dimension_numbers = #tpu.dot_dimension_numbers<[1], [0], [0], [1], [0, 0, 1, 1], [], []>} : vector<8x8xf32>, vector<8x32xf32>, vector<8x32xf32> -> vector<8x32xf32>
    %294 = arith.addf %276, %293 : vector<8x32xf32>
    %295 = vector.extract_strided_slice %190 {offsets = [8, 8], sizes = [8, 8], strides = [1, 1]} : vector<16x128xf32> to vector<8x8xf32>
    %296 = vector.extract_strided_slice %195 {offsets = [10, 8], sizes = [10, 8], strides = [1, 1]} : vector<20x128xf32> to vector<10x8xf32>
    %297 = vector.extract_strided_slice %195 {offsets = [10, 40], sizes = [10, 8], strides = [1, 1]} : vector<20x128xf32> to vector<10x8xf32>
    %cst_97 = arith.constant dense<0.000000e+00> : vector<8x10xf32>
    %298 = tpu.matmul %295, %296, %cst_97 {dimension_numbers = #tpu.dot_dimension_numbers<[1], [1], [0], [0], [0, 0, 1, 0], [], []>} : vector<8x8xf32>, vector<10x8xf32>, vector<8x10xf32> -> vector<8x10xf32>
    %cst_98 = arith.constant dense<0xFF800000> : vector<8xf32>
    %299 = vector.multi_reduction <maximumf>, %298, %cst_98 [1] : vector<8x10xf32> to vector<8xf32>
    %300 = vector.shape_cast %299 : vector<8xf32> to vector<8x1xf32>
    %301 = vector.broadcast %300 : vector<8x1xf32> to vector<8x10xf32>
    %302 = arith.subf %298, %301 : vector<8x10xf32>
    %303 = math.exp %302 : vector<8x10xf32>
    %cst_99 = arith.constant dense<0.000000e+00> : vector<8xf32>
    %304 = vector.multi_reduction <add>, %303, %cst_99 [1] : vector<8x10xf32> to vector<8xf32>
    %305 = vector.shape_cast %304 : vector<8xf32> to vector<8x1xf32>
    %306 = tpu.reciprocal %305 {approx = true} : vector<8x1xf32> -> vector<8x1xf32>
    %307 = vector.broadcast %306 : vector<8x1xf32> to vector<8x10xf32>
    %308 = arith.mulf %303, %307 : vector<8x10xf32>
    %cst_100 = arith.constant dense<0.000000e+00> : vector<8x8xf32>
    %309 = tpu.matmul %308, %297, %cst_100 {dimension_numbers = #tpu.dot_dimension_numbers<[1], [0], [0], [1], [0, 0, 1, 1], [], []>} : vector<8x10xf32>, vector<10x8xf32>, vector<8x8xf32> -> vector<8x8xf32>
    %310 = vector.extract_strided_slice %196 {offsets = [8, 0], sizes = [8, 32], strides = [1, 1]} : vector<32x32xf32> to vector<8x32xf32>
    %cst_101 = arith.constant dense<0.000000e+00> : vector<8x32xf32>
    %311 = tpu.matmul %309, %310, %cst_101 {dimension_numbers = #tpu.dot_dimension_numbers<[1], [0], [0], [1], [0, 0, 1, 1], [], []>} : vector<8x8xf32>, vector<8x32xf32>, vector<8x32xf32> -> vector<8x32xf32>
    %312 = arith.addf %294, %311 : vector<8x32xf32>
    %313 = vector.extract_strided_slice %190 {offsets = [8, 16], sizes = [8, 8], strides = [1, 1]} : vector<16x128xf32> to vector<8x8xf32>
    %314 = vector.extract_strided_slice %195 {offsets = [10, 16], sizes = [10, 8], strides = [1, 1]} : vector<20x128xf32> to vector<10x8xf32>
    %315 = vector.extract_strided_slice %195 {offsets = [10, 48], sizes = [10, 8], strides = [1, 1]} : vector<20x128xf32> to vector<10x8xf32>
    %cst_102 = arith.constant dense<0.000000e+00> : vector<8x10xf32>
    %316 = tpu.matmul %313, %314, %cst_102 {dimension_numbers = #tpu.dot_dimension_numbers<[1], [1], [0], [0], [0, 0, 1, 0], [], []>} : vector<8x8xf32>, vector<10x8xf32>, vector<8x10xf32> -> vector<8x10xf32>
    %cst_103 = arith.constant dense<0xFF800000> : vector<8xf32>
    %317 = vector.multi_reduction <maximumf>, %316, %cst_103 [1] : vector<8x10xf32> to vector<8xf32>
    %318 = vector.shape_cast %317 : vector<8xf32> to vector<8x1xf32>
    %319 = vector.broadcast %318 : vector<8x1xf32> to vector<8x10xf32>
    %320 = arith.subf %316, %319 : vector<8x10xf32>
    %321 = math.exp %320 : vector<8x10xf32>
    %cst_104 = arith.constant dense<0.000000e+00> : vector<8xf32>
    %322 = vector.multi_reduction <add>, %321, %cst_104 [1] : vector<8x10xf32> to vector<8xf32>
    %323 = vector.shape_cast %322 : vector<8xf32> to vector<8x1xf32>
    %324 = tpu.reciprocal %323 {approx = true} : vector<8x1xf32> -> vector<8x1xf32>
    %325 = vector.broadcast %324 : vector<8x1xf32> to vector<8x10xf32>
    %326 = arith.mulf %321, %325 : vector<8x10xf32>
    %cst_105 = arith.constant dense<0.000000e+00> : vector<8x8xf32>
    %327 = tpu.matmul %326, %315, %cst_105 {dimension_numbers = #tpu.dot_dimension_numbers<[1], [0], [0], [1], [0, 0, 1, 1], [], []>} : vector<8x10xf32>, vector<10x8xf32>, vector<8x8xf32> -> vector<8x8xf32>
    %328 = vector.extract_strided_slice %196 {offsets = [16, 0], sizes = [8, 32], strides = [1, 1]} : vector<32x32xf32> to vector<8x32xf32>
    %cst_106 = arith.constant dense<0.000000e+00> : vector<8x32xf32>
    %329 = tpu.matmul %327, %328, %cst_106 {dimension_numbers = #tpu.dot_dimension_numbers<[1], [0], [0], [1], [0, 0, 1, 1], [], []>} : vector<8x8xf32>, vector<8x32xf32>, vector<8x32xf32> -> vector<8x32xf32>
    %330 = arith.addf %312, %329 : vector<8x32xf32>
    %331 = vector.extract_strided_slice %190 {offsets = [8, 24], sizes = [8, 8], strides = [1, 1]} : vector<16x128xf32> to vector<8x8xf32>
    %332 = vector.extract_strided_slice %195 {offsets = [10, 24], sizes = [10, 8], strides = [1, 1]} : vector<20x128xf32> to vector<10x8xf32>
    %333 = vector.extract_strided_slice %195 {offsets = [10, 56], sizes = [10, 8], strides = [1, 1]} : vector<20x128xf32> to vector<10x8xf32>
    %cst_107 = arith.constant dense<0.000000e+00> : vector<8x10xf32>
    %334 = tpu.matmul %331, %332, %cst_107 {dimension_numbers = #tpu.dot_dimension_numbers<[1], [1], [0], [0], [0, 0, 1, 0], [], []>} : vector<8x8xf32>, vector<10x8xf32>, vector<8x10xf32> -> vector<8x10xf32>
    %cst_108 = arith.constant dense<0xFF800000> : vector<8xf32>
    %335 = vector.multi_reduction <maximumf>, %334, %cst_108 [1] : vector<8x10xf32> to vector<8xf32>
    %336 = vector.shape_cast %335 : vector<8xf32> to vector<8x1xf32>
    %337 = vector.broadcast %336 : vector<8x1xf32> to vector<8x10xf32>
    %338 = arith.subf %334, %337 : vector<8x10xf32>
    %339 = math.exp %338 : vector<8x10xf32>
    %cst_109 = arith.constant dense<0.000000e+00> : vector<8xf32>
    %340 = vector.multi_reduction <add>, %339, %cst_109 [1] : vector<8x10xf32> to vector<8xf32>
    %341 = vector.shape_cast %340 : vector<8xf32> to vector<8x1xf32>
    %342 = tpu.reciprocal %341 {approx = true} : vector<8x1xf32> -> vector<8x1xf32>
    %343 = vector.broadcast %342 : vector<8x1xf32> to vector<8x10xf32>
    %344 = arith.mulf %339, %343 : vector<8x10xf32>
    %cst_110 = arith.constant dense<0.000000e+00> : vector<8x8xf32>
    %345 = tpu.matmul %344, %333, %cst_110 {dimension_numbers = #tpu.dot_dimension_numbers<[1], [0], [0], [1], [0, 0, 1, 1], [], []>} : vector<8x10xf32>, vector<10x8xf32>, vector<8x8xf32> -> vector<8x8xf32>
    %346 = vector.extract_strided_slice %196 {offsets = [24, 0], sizes = [8, 32], strides = [1, 1]} : vector<32x32xf32> to vector<8x32xf32>
    %cst_111 = arith.constant dense<0.000000e+00> : vector<8x32xf32>
    %347 = tpu.matmul %345, %346, %cst_111 {dimension_numbers = #tpu.dot_dimension_numbers<[1], [0], [0], [1], [0, 0, 1, 1], [], []>} : vector<8x8xf32>, vector<8x32xf32>, vector<8x32xf32> -> vector<8x32xf32>
    %348 = arith.addf %330, %347 : vector<8x32xf32>
    %c8_112 = arith.constant 8 : index
    %c0_113 = arith.constant 0 : index
    %349 = vector.load %arg6[%c8_112, %c0_113] : memref<16x32xf32, #tpu.memory_space<vmem>>, vector<8x32xf32>
    tpu.vector_store %arg6[%c8_112, %c0_113], %348 {strides = array<i32>} : memref<16x32xf32, #tpu.memory_space<vmem>>, vector<8x32xf32>,
    %c0_114 = arith.constant 0 : index
    %c0_115 = arith.constant 0 : index
    %350 = vector.load %arg6[%c0_114, %c0_115] : memref<16x32xf32, #tpu.memory_space<vmem>>, vector<16x32xf32>
    %c9 = arith.constant 9 : index
    %c0_116 = arith.constant 0 : index
    %351 = vector.load %arg4[%c9, %c0_116] : memref<16x128xf32, #tpu.memory_space<vmem>>, vector<1x32xf32>
    %c10 = arith.constant 10 : index
    %c0_117 = arith.constant 0 : index
    %352 = vector.load %arg4[%c10, %c0_117] : memref<16x128xf32, #tpu.memory_space<vmem>>, vector<1x32xf32>
    %cst_118 = arith.constant dense<0.000000e+00> : vector<16xf32>
    %353 = vector.multi_reduction <add>, %350, %cst_118 [1] : vector<16x32xf32> to vector<16xf32>
    %354 = vector.shape_cast %353 : vector<16xf32> to vector<16x1xf32>
    %cst_119 = arith.constant 3.200000e+01 : f32
    %355 = vector.broadcast %cst_119 : f32 to vector<16x1xf32>
    %356 = arith.divf %354, %355 : vector<16x1xf32>
    %357 = arith.mulf %350, %350 : vector<16x32xf32>
    %cst_120 = arith.constant dense<0.000000e+00> : vector<16xf32>
    %358 = vector.multi_reduction <add>, %357, %cst_120 [1] : vector<16x32xf32> to vector<16xf32>
    %359 = vector.shape_cast %358 : vector<16xf32> to vector<16x1xf32>
    %cst_121 = arith.constant 3.200000e+01 : f32
    %360 = vector.broadcast %cst_121 : f32 to vector<16x1xf32>
    %361 = arith.divf %359, %360 : vector<16x1xf32>
    %362 = arith.mulf %356, %356 : vector<16x1xf32>
    %363 = arith.subf %361, %362 : vector<16x1xf32>
    %364 = vector.broadcast %356 : vector<16x1xf32> to vector<16x32xf32>
    %365 = arith.subf %350, %364 : vector<16x32xf32>
    %cst_122 = arith.constant 9.99999974E-6 : f32
    %366 = vector.broadcast %cst_122 : f32 to vector<16x1xf32>
    %367 = arith.addf %363, %366 : vector<16x1xf32>
    %368 = math.rsqrt %367 : vector<16x1xf32>
    %369 = vector.broadcast %368 : vector<16x1xf32> to vector<16x32xf32>
    %370 = arith.mulf %365, %369 : vector<16x32xf32>
    %371 = vector.broadcast %351 : vector<1x32xf32> to vector<16x32xf32>
    %372 = arith.mulf %370, %371 : vector<16x32xf32>
    %373 = vector.broadcast %352 : vector<1x32xf32> to vector<16x32xf32>
    %374 = arith.addf %372, %373 : vector<16x32xf32>
    %c160 = arith.constant 160 : index
    %c0_123 = arith.constant 0 : index
    %375 = vector.load %arg3[%c160, %c0_123] : memref<320x128xf32, #tpu.memory_space<vmem>>, vector<32x128xf32>
    %cst_124 = arith.constant dense<0.000000e+00> : vector<16x128xf32>
    %376 = tpu.matmul %374, %375, %cst_124 {dimension_numbers = #tpu.dot_dimension_numbers<[1], [0], [0], [1], [0, 0, 1, 1], [], []>} : vector<16x32xf32>, vector<32x128xf32>, vector<16x128xf32> -> vector<16x128xf32>
    %c5 = arith.constant 5 : index
    %c0_125 = arith.constant 0 : index
    %377 = vector.load %arg4[%c5, %c0_125] : memref<16x128xf32, #tpu.memory_space<vmem>>, vector<1x128xf32>
    %378 = vector.broadcast %377 : vector<1x128xf32> to vector<16x128xf32>
    %379 = arith.addf %376, %378 : vector<16x128xf32>
    %cst_126 = arith.constant 0.000000e+00 : f32
    %380 = vector.broadcast %cst_126 : f32 to vector<16x128xf32>
    %381 = arith.maximumf %379, %380 : vector<16x128xf32>
    %c192 = arith.constant 192 : index
    %c0_127 = arith.constant 0 : index
    %382 = vector.load %arg3[%c192, %c0_127] : memref<320x128xf32, #tpu.memory_space<vmem>>, vector<128x32xf32>
    %cst_128 = arith.constant dense<0.000000e+00> : vector<16x32xf32>
    %383 = tpu.matmul %381, %382, %cst_128 {dimension_numbers = #tpu.dot_dimension_numbers<[1], [0], [0], [1], [0, 0, 1, 1], [], []>} : vector<16x128xf32>, vector<128x32xf32>, vector<16x32xf32> -> vector<16x32xf32>
    %c6 = arith.constant 6 : index
    %c0_129 = arith.constant 0 : index
    %384 = vector.load %arg4[%c6, %c0_129] : memref<16x128xf32, #tpu.memory_space<vmem>>, vector<1x32xf32>
    %385 = vector.broadcast %384 : vector<1x32xf32> to vector<16x32xf32>
    %386 = arith.addf %383, %385 : vector<16x32xf32>
    %387 = arith.addf %374, %386 : vector<16x32xf32>
    %c11 = arith.constant 11 : index
    %c0_130 = arith.constant 0 : index
    %388 = vector.load %arg4[%c11, %c0_130] : memref<16x128xf32, #tpu.memory_space<vmem>>, vector<1x32xf32>
    %c12 = arith.constant 12 : index
    %c0_131 = arith.constant 0 : index
    %389 = vector.load %arg4[%c12, %c0_131] : memref<16x128xf32, #tpu.memory_space<vmem>>, vector<1x32xf32>
    %cst_132 = arith.constant dense<0.000000e+00> : vector<16xf32>
    %390 = vector.multi_reduction <add>, %387, %cst_132 [1] : vector<16x32xf32> to vector<16xf32>
    %391 = vector.shape_cast %390 : vector<16xf32> to vector<16x1xf32>
    %cst_133 = arith.constant 3.200000e+01 : f32
    %392 = vector.broadcast %cst_133 : f32 to vector<16x1xf32>
    %393 = arith.divf %391, %392 : vector<16x1xf32>
    %394 = arith.mulf %387, %387 : vector<16x32xf32>
    %cst_134 = arith.constant dense<0.000000e+00> : vector<16xf32>
    %395 = vector.multi_reduction <add>, %394, %cst_134 [1] : vector<16x32xf32> to vector<16xf32>
    %396 = vector.shape_cast %395 : vector<16xf32> to vector<16x1xf32>
    %cst_135 = arith.constant 3.200000e+01 : f32
    %397 = vector.broadcast %cst_135 : f32 to vector<16x1xf32>
    %398 = arith.divf %396, %397 : vector<16x1xf32>
    %399 = arith.mulf %393, %393 : vector<16x1xf32>
    %400 = arith.subf %398, %399 : vector<16x1xf32>
    %401 = vector.broadcast %393 : vector<16x1xf32> to vector<16x32xf32>
    %402 = arith.subf %387, %401 : vector<16x32xf32>
    %cst_136 = arith.constant 9.99999974E-6 : f32
    %403 = vector.broadcast %cst_136 : f32 to vector<16x1xf32>
    %404 = arith.addf %400, %403 : vector<16x1xf32>
    %405 = math.rsqrt %404 : vector<16x1xf32>
    %406 = vector.broadcast %405 : vector<16x1xf32> to vector<16x32xf32>
    %407 = arith.mulf %402, %406 : vector<16x32xf32>
    %408 = vector.broadcast %388 : vector<1x32xf32> to vector<16x32xf32>
    %409 = arith.mulf %407, %408 : vector<16x32xf32>
    %410 = vector.broadcast %389 : vector<1x32xf32> to vector<16x32xf32>
    %411 = arith.addf %409, %410 : vector<16x32xf32>
    %c0_137 = arith.constant 0 : index
    %c0_138 = arith.constant 0 : index
    %412 = vector.load %arg5[%c0_137, %c0_138] : memref<16x32xf32, #tpu.memory_space<vmem>>, vector<16x32xf32>
    tpu.vector_store %arg5[%c0_137, %c0_138], %411 {strides = array<i32>} : memref<16x32xf32, #tpu.memory_space<vmem>>, vector<16x32xf32>,
    return
  }
  func.func @transform_0(%arg0: i32) -> (i32, i32) {
    %c0_i32 = arith.constant 0 : i32
    %c0_i32_0 = arith.constant 0 : i32
    %c0_i32_1 = arith.constant 0 : i32
    return %c0_i32, %c0_i32_0 : i32, i32
  }
  func.func @transform_1(%arg0: i32) -> (i32, i32) {
    %c0_i32 = arith.constant 0 : i32
    %c0_i32_0 = arith.constant 0 : i32
    %c0_i32_1 = arith.constant 0 : i32
    return %c0_i32, %c0_i32_0 : i32, i32
  }
  func.func @transform_2(%arg0: i32) -> (i32, i32) {
    %c0_i32 = arith.constant 0 : i32
    %c0_i32_0 = arith.constant 0 : i32
    %c0_i32_1 = arith.constant 0 : i32
    return %c0_i32, %c0_i32_0 : i32, i32
  }
  func.func @transform_3(%arg0: i32) -> (i32, i32) {
    %c0_i32 = arith.constant 0 : i32
    %c0_i32_0 = arith.constant 0 : i32
    %c0_i32_1 = arith.constant 0 : i32
    return %c0_i32, %c0_i32_0 : i32, i32
  }
  func.func @transform_4(%arg0: i32) -> (i32, i32) {
    %c0_i32 = arith.constant 0 : i32
    %c0_i32_0 = arith.constant 0 : i32
    %c0_i32_1 = arith.constant 0 : i32
    return %c0_i32, %c0_i32_0 : i32, i32
  }
}

</mosaic_0001>

<llo_original>
// kernel: tpu_custom_call.1
$region0: #{tpu_custom_call.1}
  #allocation0 [shape = 'u32[]', space=smem, size = 0x4, offset = 0x4, fixed_abs, tag = 'smem constant byte address 0x4 - core index']
  #allocation1 [shape = 'u32[144,128]{1,0:T(1,128)}', space=vmem, size = 0x12000, scoped, tag = 'internal scratch']
  #allocation2 [shape = 'f32[16,32]{1,0:T(8,128)}', space=vmem, size = 0x2000, scoped, tag = 'scratch operand']
  %s0 = inlined_call_operand.hbm [shape: f32[16,32], index: 0, kind: input, shape index: {}]
  %s1 = inlined_call_operand.hbm [shape: f32[20,32], index: 1, kind: input, shape index: {}]
  %s2 = inlined_call_operand.hbm [shape: f32[320,128], index: 2, kind: input, shape index: {}]
  %s3 = inlined_call_operand.hbm [shape: f32[16,128], index: 3, kind: input, shape index: {}]
  %s4 = inlined_call_operand.hbm [shape: f32[16,32], index: 4, kind: output, shape index: {}]
  %s5 = sld [smem:[#allocation0]]
  $region42: #{tpu_custom_call.1} parent=0
    _
  %s7 = ssub.s32 1, %s5
  %s8 = scalar_select 0, %s7, %s5
  $region1: #{tpu_custom_call.1} parent=0
    #allocation3 [shape = 'u8[8192]{0}', space=vmem, size = 0x2000, scoped, tag = 'input window, operand 0, single buffered']
    #allocation4 [shape = 's32[1]{0}', space=sflag, size = 0x4, scoped, tag = 'scoped memory for tpu_custom_call.1']
    #allocation5 [shape = 's32[1]{0}', space=sflag, size = 0x4, scoped, tag = 'scoped memory for tpu_custom_call.1']
    #allocation6 [shape = 'u8[12288]{0}', space=vmem, size = 0x3000, scoped, tag = 'input window, operand 1, single buffered']
    #allocation7 [shape = 's32[1]{0}', space=sflag, size = 0x4, scoped, tag = 'scoped memory for tpu_custom_call.1']
    #allocation8 [shape = 'u8[163840]{0}', space=vmem, size = 0x28000, scoped, tag = 'input window, operand 2, single buffered']
    #allocation9 [shape = 'u8[8192]{0}', space=vmem, size = 0x2000, scoped, tag = 'input window, operand 3, single buffered']
    #allocation10 [shape = 's32[1]{0}', space=sflag, size = 0x4, scoped, tag = 'scoped memory for tpu_custom_call.1']
    #allocation11 [shape = 'u8[8192]{0}', space=vmem, size = 0x2000, scoped, tag = 'output window, operand 0, single buffered']
    %9 = vsyncpa [#allocation4], 0
    %10 = vsyncpa [#allocation7], 0
    %11 = vsyncpa [#allocation10], 0
    %12 = vsyncpa [#allocation5], 0
    // Predicated region
    $region2: #{tpu_custom_call.1} parent=1 // pred_check
      _
    $region3: #{tpu_custom_call.1} parent=1 // pred_check_branch
      %14 = sbr.rel (0) target = $region5
    $region4: #{tpu_custom_call.1} parent=1 // pred_region
      %s16 = ssub.s32 256, 256
      %17 = vsyncadd [#allocation4], %s16
      %s18 = sshll.u32 [#allocation3], 4
      %s19 = int_to_ptr.vmem [resolvable:$true] %s18
      %24 = dma.hbm_to_vmem [thread:$0]  %s0, 256, %s19, [#allocation4], 128, 128, 8
    $region5: #{tpu_custom_call.1} parent=1 // pred_fallthru
      _
    // Predicated region
    $region6: #{tpu_custom_call.1} parent=1 // pred_check
      _
    $region7: #{tpu_custom_call.1} parent=1 // pred_check_branch
      %26 = sbr.rel (0) target = $region9
    $region8: #{tpu_custom_call.1} parent=1 // pred_region
      %s28 = ssub.s32 384, 384
      %29 = vsyncadd [#allocation7], %s28
      %s30 = sshll.u32 [#allocation6], 4
      %s31 = int_to_ptr.vmem [resolvable:$true] %s30
      %36 = dma.hbm_to_vmem [thread:$0]  %s1, 384, %s31, [#allocation7], 128, 128, 8
    $region9: #{tpu_custom_call.1} parent=1 // pred_fallthru
      _
    // Predicated region
    $region10: #{tpu_custom_call.1} parent=1 // pred_check
      _
    $region11: #{tpu_custom_call.1} parent=1 // pred_check_branch
      %38 = sbr.rel (0) target = $region13
    $region12: #{tpu_custom_call.1} parent=1 // pred_region
      %s40 = ssub.s32 5120, 5120
      %41 = vsyncadd [#allocation7], %s40
      %s42 = sshll.u32 [#allocation8], 4
      %s43 = int_to_ptr.vmem [resolvable:$true] %s42
      %48 = dma.hbm_to_vmem [thread:$0]  %s2, 5120, %s43, [#allocation7], 128, 128, 8
    $region13: #{tpu_custom_call.1} parent=1 // pred_fallthru
      _
    // Predicated region
    $region14: #{tpu_custom_call.1} parent=1 // pred_check
      _
    $region15: #{tpu_custom_call.1} parent=1 // pred_check_branch
      %50 = sbr.rel (0) target = $region17
    $region16: #{tpu_custom_call.1} parent=1 // pred_region
      %s52 = ssub.s32 256, 256
      %53 = vsyncadd [#allocation10], %s52
      %s54 = sshll.u32 [#allocation9], 4
      %s55 = int_to_ptr.vmem [resolvable:$true] %s54
      %60 = dma.hbm_to_vmem [thread:$0]  %s3, 256, %s55, [#allocation10], 128, 128, 8
    $region17: #{tpu_custom_call.1} parent=1 // pred_fallthru
      _
    // Predicated region
    $region18: #{tpu_custom_call.1} parent=1 // pred_check
      _
    $region19: #{tpu_custom_call.1} parent=1 // pred_check_branch
      %62 = sbr.rel (0) target = $region21
    $region20: #{tpu_custom_call.1} parent=1 // pred_region
      %63 = dma.done [#allocation4], 256
    $region21: #{tpu_custom_call.1} parent=1 // pred_fallthru
      _
    // Predicated region
    $region22: #{tpu_custom_call.1} parent=1 // pred_check
      _
    $region23: #{tpu_custom_call.1} parent=1 // pred_check_branch
      %65 = sbr.rel (0) target = $region25
    $region24: #{tpu_custom_call.1} parent=1 // pred_region
      %66 = dma.done [#allocation7], 384
    $region25: #{tpu_custom_call.1} parent=1 // pred_fallthru
      _
    // Predicated region
    $region26: #{tpu_custom_call.1} parent=1 // pred_check
      _
    $region27: #{tpu_custom_call.1} parent=1 // pred_check_branch
      %68 = sbr.rel (0) target = $region29
    $region28: #{tpu_custom_call.1} parent=1 // pred_region
      %69 = dma.done [#allocation7], 5120
    $region29: #{tpu_custom_call.1} parent=1 // pred_fallthru
      _
    // Predicated region
    $region30: #{tpu_custom_call.1} parent=1 // pred_check
      _
    $region31: #{tpu_custom_call.1} parent=1 // pred_check_branch
      %71 = sbr.rel (0) target = $region33
    $region32: #{tpu_custom_call.1} parent=1 // pred_region
      %72 = dma.done [#allocation10], 256
    $region33: #{tpu_custom_call.1} parent=1 // pred_fallthru
      _
    %v73 = vld [vmem:[#allocation3] sm:$0xff]
    %v74 = vld [vmem:[#allocation3 + $0x8] sm:$0xff]
    %v75 = vld [vmem:[#allocation8] sm:$0xff]
    %v76 = vld [vmem:[#allocation8 + $0x8] sm:$0xff]
    %v77 = vld [vmem:[#allocation8 + $0x10] sm:$0xff]
    %v78 = vld [vmem:[#allocation8 + $0x18] sm:$0xff]
    %v79 = vld [vmem:[#allocation9] sm:$0x1]
    %v80 = vlaneseq
    %v81 = vshrl.u32 %v80, 7
    %v82 = vsub.s32 0, %v81
    %v83 = vrot.slane %v79, %v82
    %vm84 = vcmask 261120
    %v86 = vsel %vm84, %v73, 0
    %v89 = vsel %vm84, %v74, 0
    %91 = vmatprep.subr.mxu0 0.0
    %92 = vmatpush1.msra.mxu0 %v75
    %93 = vmatprep.subr.mxu0 0.0
    %94 = vmatpush1.msra.mxu0 %v76
    %95 = vmatprep.subr.mxu0 0.0
    %96 = vmatpush1.msra.mxu0 %v77
    %97 = vmatprep.subr.mxu0 0.0
    %98 = vmatpush1.msra.mxu0 %v78
    %99 = vmatprep.subr.mxu0 0.0
    %100 = vmatpush1.msra.mxu0 0.0
    %101 = vmatprep.subr.mxu0 0.0
    %102 = vmatpush1.msra.mxu0 0.0
    %103 = vmatprep.subr.mxu0 0.0
    %104 = vmatpush1.msra.mxu0 0.0
    %105 = vmatprep.subr.mxu0 0.0
    %106 = vmatpush1.msra.mxu0 0.0
    %107 = vmatprep.subr.mxu0 0.0
    %108 = vmatpush1.msra.mxu0 0.0
    %109 = vmatprep.subr.mxu0 0.0
    %110 = vmatpush1.msra.mxu0 0.0
    %111 = vmatprep.subr.mxu0 0.0
    %112 = vmatpush1.msra.mxu0 0.0
    %113 = vmatprep.subr.mxu0 0.0
    %114 = vmatpush1.msra.mxu0 0.0
    %115 = vmatprep.subr.mxu0 0.0
    %116 = vmatpush1.msra.mxu0 0.0
    %117 = vmatprep.subr.mxu0 0.0
    %118 = vmatpush1.msra.mxu0 0.0
    %119 = vmatprep.subr.mxu0 0.0
    %120 = vmatpush1.msra.mxu0 0.0
    %121 = vmatprep.subr.mxu0 0.0
    %122 = vmatpush1.msra.mxu0 0.0
    %123 = vmatprep.subr.mxu0 0.0
    %124 = vmatpush1.msra.mxu0 0.0
    %125 = vmatprep.subr.mxu0 0.0
    %126 = vmatpush1.msra.mxu0 0.0
    %127 = vmatprep.subr.mxu0 0.0
    %128 = vmatpush1.msra.mxu0 0.0
    %129 = vmatprep.subr.mxu0 0.0
    %130 = vmatpush1.msra.mxu0 0.0
    %131 = vmatprep.subr.mxu0 0.0
    %132 = vmatpush1.msra.mxu0 0.0
    %133 = vmatprep.subr.mxu0 0.0
    %134 = vmatpush1.msra.mxu0 0.0
    %135 = vmatprep.subr.mxu0 0.0
    %136 = vmatpush1.msra.mxu0 0.0
    %137 = vmatprep.subr.mxu0 0.0
    %138 = vmatpush1.msra.mxu0 0.0
    %139 = vmatprep.subr.mxu0 0.0
    %140 = vmatpush1.msra.mxu0 0.0
    %141 = vmatprep.subr.mxu0 0.0
    %142 = vmatpush1.msra.mxu0 0.0
    %143 = vmatprep.subr.mxu0 0.0
    %144 = vmatpush1.msra.mxu0 0.0
    %145 = vmatprep.subr.mxu0 0.0
    %146 = vmatpush1.msra.mxu0 0.0
    %147 = vmatprep.subr.mxu0 0.0
    %148 = vmatpush1.msra.mxu0 0.0
    %149 = vmatprep.subr.mxu0 0.0
    %150 = vmatpush1.msra.mxu0 0.0
    %151 = vmatprep.subr.mxu0 0.0
    %152 = vmatpush1.msra.mxu0 0.0
    %153 = vmatprep.subr.mxu0 0.0
    %154 = vmatpush1.msra.mxu0 0.0
    %155 = vmatprep.mubr.f32.mxu0 0.0
    %156 = vmatmul.mubr.f32.gmra.mrb[0].mxu0 %v86
    %v157 = vpop.f32.mrb[0].mxu0
    %v158 = vadd.f32 %v83, %v157
    %v159 = vpop.f32.mrb[0].mxu0
    %160 = vmatprep.mubr.f32.mxu0 0.0
    %161 = vmatmul.mubr.f32.gmra.mrb[0].mxu0 %v89
    %v162 = vpop.f32.mrb[0].mxu0
    %v163 = vadd.f32 %v83, %v162
    %v164 = vpop.f32.mrb[0].mxu0
    %165 = vdwg.mxu0
    %v166 = vld [vmem:[#allocation8 + $0x60] sm:$0xff]
    %v167 = vld [vmem:[#allocation8 + $0x68] sm:$0xff]
    %v168 = vld [vmem:[#allocation8 + $0x70] sm:$0xff]
    %v169 = vld [vmem:[#allocation8 + $0x78] sm:$0xff]
    %v170 = vld [vmem:[#allocation9 + $0x3] sm:$0x1]
    %v171 = vlaneseq
    %v172 = vshrl.u32 %v171, 7
    %v173 = vsub.s32 0, %v172
    %v174 = vrot.slane %v170, %v173
    %v175 = vadd.f32 %v73, %v174
    %177 = vrot.lane.b32.xlu0 %v158, 96
    %v178 = vpop.permute.xlu0 %177
    %vm179 = vcmask 64512
    %v180 = vsel %vm179, %v158, 0
    %v182 = vsel %vm179, %v178, 0
    %184 = vmatprep.subr.mxu0 0.0
    %185 = vmatpush1.xpose.msra.mxu0 %v182
    %186 = vmatprep.subr.mxu0 0.0
    %187 = vmatpush1.xpose.msra.mxu0 0.0
    %188 = vmatprep.subr.mxu0 0.0
    %189 = vmatpush1.xpose.msra.mxu0 0.0
    %190 = vmatprep.subr.mxu0 0.0
    %191 = vmatpush1.xpose.msra.mxu0 0.0
    %192 = vmatprep.subr.mxu0 0.0
    %193 = vmatpush1.xpose.msra.mxu0 0.0
    %194 = vmatprep.subr.mxu0 0.0
    %195 = vmatpush1.xpose.msra.mxu0 0.0
    %196 = vmatprep.subr.mxu0 0.0
    %197 = vmatpush1.xpose.msra.mxu0 0.0
    %198 = vmatprep.subr.mxu0 0.0
    %199 = vmatpush1.xpose.msra.mxu0 0.0
    %200 = vmatprep.subr.mxu0 0.0
    %201 = vmatpush1.xpose.msra.mxu0 0.0
    %202 = vmatprep.subr.mxu0 0.0
    %203 = vmatpush1.xpose.msra.mxu0 0.0
    %204 = vmatprep.subr.mxu0 0.0
    %205 = vmatpush1.xpose.msra.mxu0 0.0
    %206 = vmatprep.subr.mxu0 0.0
    %207 = vmatpush1.xpose.msra.mxu0 0.0
    %208 = vmatprep.subr.mxu0 0.0
    %209 = vmatpush1.xpose.msra.mxu0 0.0
    %210 = vmatprep.subr.mxu0 0.0
    %211 = vmatpush1.xpose.msra.mxu0 0.0
    %212 = vmatprep.subr.mxu0 0.0
    %213 = vmatpush1.xpose.msra.mxu0 0.0
    %214 = vmatprep.subr.mxu0 0.0
    %215 = vmatpush1.xpose.msra.mxu0 0.0
    %216 = vmatprep.subr.mxu0 0.0
    %217 = vmatpush1.xpose.msra.mxu0 0.0
    %218 = vmatprep.subr.mxu0 0.0
    %219 = vmatpush1.xpose.msra.mxu0 0.0
    %220 = vmatprep.subr.mxu0 0.0
    %221 = vmatpush1.xpose.msra.mxu0 0.0
    %222 = vmatprep.subr.mxu0 0.0
    %223 = vmatpush1.xpose.msra.mxu0 0.0
    %224 = vmatprep.subr.mxu0 0.0
    %225 = vmatpush1.xpose.msra.mxu0 0.0
    %226 = vmatprep.subr.mxu0 0.0
    %227 = vmatpush1.xpose.msra.mxu0 0.0
    %228 = vmatprep.subr.mxu0 0.0
    %229 = vmatpush1.xpose.msra.mxu0 0.0
    %230 = vmatprep.subr.mxu0 0.0
    %231 = vmatpush1.xpose.msra.mxu0 0.0
    %232 = vmatprep.subr.mxu0 0.0
    %233 = vmatpush1.xpose.msra.mxu0 0.0
    %234 = vmatprep.subr.mxu0 0.0
    %235 = vmatpush1.xpose.msra.mxu0 0.0
    %236 = vmatprep.subr.mxu0 0.0
    %237 = vmatpush1.xpose.msra.mxu0 0.0
    %238 = vmatprep.subr.mxu0 0.0
    %239 = vmatpush1.xpose.msra.mxu0 0.0
    %240 = vmatprep.subr.mxu0 0.0
    %241 = vmatpush1.xpose.msra.mxu0 0.0
    %242 = vmatprep.subr.mxu0 0.0
    %243 = vmatpush1.xpose.msra.mxu0 0.0
    %244 = vmatprep.subr.mxu0 0.0
    %245 = vmatpush1.xpose.msra.mxu0 0.0
    %246 = vmatprep.subr.mxu0 0.0
    %247 = vmatpush1.xpose.msra.mxu0 0.0
    %248 = vmatprep.mubr.f32.mxu0 0.0
    %249 = vmatmul.mubr.f32.gmra.mrb[0].mxu0 %v180
    %v250 = vpop.f32.mrb[0].mxu0
    %v251 = vadd.f32 0.0, %v250
    %v252 = vpop.f32.mrb[0].mxu0
    %253 = vdwg.mxu0
    %v254 = vsel %vm179, %v251, -inf
    %255 = vmax.xlane.f32.xlu0 %v254
    %v256 = vpop.xlane.xlu0 %255
    %v257 = vsub.f32 %v251, %v256
    %v258 = vmul.f32 %v257, 1.442695
    %v259 = vpow.pop %v258
    %v260 = vsel %vm179, %v259, 0.0
    %261 = vadd.xlane.f32.xlu0 %v260
    %v262 = vpop.xlane.xlu0 %261
    %v263 = vrcp.pop %v262
    %v264 = vmul.f32 %v259, %v263
    %265 = vrot.lane.b32.xlu0 %v158, 64
    %v266 = vpop.permute.xlu0 %265
    %v269 = vsel %vm179, %v264, 0
    %271 = vmatprep.subr.mxu0 0.0
    %272 = vmatpush1.msra.mxu0 %v266
    %273 = vmatprep.subr.mxu0 0.0
    %274 = vmatpush1.msra.mxu0 0.0
    %275 = vmatprep.subr.mxu0 0.0
    %276 = vmatpush1.msra.mxu0 0.0
    %277 = vmatprep.subr.mxu0 0.0
    %278 = vmatpush1.msra.mxu0 0.0
    %279 = vmatprep.subr.mxu0 0.0
    %280 = vmatpush1.msra.mxu0 0.0
    %281 = vmatprep.subr.mxu0 0.0
    %282 = vmatpush1.msra.mxu0 0.0
    %283 = vmatprep.subr.mxu0 0.0
    %284 = vmatpush1.msra.mxu0 0.0
    %285 = vmatprep.subr.mxu0 0.0
    %286 = vmatpush1.msra.mxu0 0.0
    %287 = vmatprep.subr.mxu0 0.0
    %288 = vmatpush1.msra.mxu0 0.0
    %289 = vmatprep.subr.mxu0 0.0
    %290 = vmatpush1.msra.mxu0 0.0
    %291 = vmatprep.subr.mxu0 0.0
    %292 = vmatpush1.msra.mxu0 0.0
    %293 = vmatprep.subr.mxu0 0.0
    %294 = vmatpush1.msra.mxu0 0.0
    %295 = vmatprep.subr.mxu0 0.0
    %296 = vmatpush1.msra.mxu0 0.0
    %297 = vmatprep.subr.mxu0 0.0
    %298 = vmatpush1.msra.mxu0 0.0
    %299 = vmatprep.subr.mxu0 0.0
    %300 = vmatpush1.msra.mxu0 0.0
    %301 = vmatprep.subr.mxu0 0.0
    %302 = vmatpush1.msra.mxu0 0.0
    %303 = vmatprep.subr.mxu0 0.0
    %304 = vmatpush1.msra.mxu0 0.0
    %305 = vmatprep.subr.mxu0 0.0
    %306 = vmatpush1.msra.mxu0 0.0
    %307 = vmatprep.subr.mxu0 0.0
    %308 = vmatpush1.msra.mxu0 0.0
    %309 = vmatprep.subr.mxu0 0.0
    %310 = vmatpush1.msra.mxu0 0.0
    %311 = vmatprep.subr.mxu0 0.0
    %312 = vmatpush1.msra.mxu0 0.0
    %313 = vmatprep.subr.mxu0 0.0
    %314 = vmatpush1.msra.mxu0 0.0
    %315 = vmatprep.subr.mxu0 0.0
    %316 = vmatpush1.msra.mxu0 0.0
    %317 = vmatprep.subr.mxu0 0.0
    %318 = vmatpush1.msra.mxu0 0.0
    %319 = vmatprep.subr.mxu0 0.0
    %320 = vmatpush1.msra.mxu0 0.0
    %321 = vmatprep.subr.mxu0 0.0
    %322 = vmatpush1.msra.mxu0 0.0
    %323 = vmatprep.subr.mxu0 0.0
    %324 = vmatpush1.msra.mxu0 0.0
    %325 = vmatprep.subr.mxu0 0.0
    %326 = vmatpush1.msra.mxu0 0.0
    %327 = vmatprep.subr.mxu0 0.0
    %328 = vmatpush1.msra.mxu0 0.0
    %329 = vmatprep.subr.mxu0 0.0
    %330 = vmatpush1.msra.mxu0 0.0
    %331 = vmatprep.subr.mxu0 0.0
    %332 = vmatpush1.msra.mxu0 0.0
    %333 = vmatprep.subr.mxu0 0.0
    %334 = vmatpush1.msra.mxu0 0.0
    %335 = vmatprep.mubr.f32.mxu0 0.0
    %336 = vmatmul.mubr.f32.gmra.mrb[0].mxu0 %v269
    %v337 = vpop.f32.mrb[0].mxu0
    %v338 = vadd.f32 0.0, %v337
    %v339 = vpop.f32.mrb[0].mxu0
    %340 = vdwg.mxu0
    %v342 = vsel %vm179, %v338, 0
    %344 = vmatprep.subr.mxu0 0.0
    %345 = vmatpush1.msra.mxu0 %v166
    %346 = vmatprep.subr.mxu0 0.0
    %347 = vmatpush1.msra.mxu0 0.0
    %348 = vmatprep.subr.mxu0 0.0
    %349 = vmatpush1.msra.mxu0 0.0
    %350 = vmatprep.subr.mxu0 0.0
    %351 = vmatpush1.msra.mxu0 0.0
    %352 = vmatprep.subr.mxu0 0.0
    %353 = vmatpush1.msra.mxu0 0.0
    %354 = vmatprep.subr.mxu0 0.0
    %355 = vmatpush1.msra.mxu0 0.0
    %356 = vmatprep.subr.mxu0 0.0
    %357 = vmatpush1.msra.mxu0 0.0
    %358 = vmatprep.subr.mxu0 0.0
    %359 = vmatpush1.msra.mxu0 0.0
    %360 = vmatprep.subr.mxu0 0.0
    %361 = vmatpush1.msra.mxu0 0.0
    %362 = vmatprep.subr.mxu0 0.0
    %363 = vmatpush1.msra.mxu0 0.0
    %364 = vmatprep.subr.mxu0 0.0
    %365 = vmatpush1.msra.mxu0 0.0
    %366 = vmatprep.subr.mxu0 0.0
    %367 = vmatpush1.msra.mxu0 0.0
    %368 = vmatprep.subr.mxu0 0.0
    %369 = vmatpush1.msra.mxu0 0.0
    %370 = vmatprep.subr.mxu0 0.0
    %371 = vmatpush1.msra.mxu0 0.0
    %372 = vmatprep.subr.mxu0 0.0
    %373 = vmatpush1.msra.mxu0 0.0
    %374 = vmatprep.subr.mxu0 0.0
    %375 = vmatpush1.msra.mxu0 0.0
    %376 = vmatprep.subr.mxu0 0.0
    %377 = vmatpush1.msra.mxu0 0.0
    %378 = vmatprep.subr.mxu0 0.0
    %379 = vmatpush1.msra.mxu0 0.0
    %380 = vmatprep.subr.mxu0 0.0
    %381 = vmatpush1.msra.mxu0 0.0
    %382 = vmatprep.subr.mxu0 0.0
    %383 = vmatpush1.msra.mxu0 0.0
    %384 = vmatprep.subr.mxu0 0.0
    %385 = vmatpush1.msra.mxu0 0.0
    %386 = vmatprep.subr.mxu0 0.0
    %387 = vmatpush1.msra.mxu0 0.0
    %388 = vmatprep.subr.mxu0 0.0
    %389 = vmatpush1.msra.mxu0 0.0
    %390 = vmatprep.subr.mxu0 0.0
    %391 = vmatpush1.msra.mxu0 0.0
    %392 = vmatprep.subr.mxu0 0.0
    %393 = vmatpush1.msra.mxu0 0.0
    %394 = vmatprep.subr.mxu0 0.0
    %395 = vmatpush1.msra.mxu0 0.0
    %396 = vmatprep.subr.mxu0 0.0
    %397 = vmatpush1.msra.mxu0 0.0
    %398 = vmatprep.subr.mxu0 0.0
    %399 = vmatpush1.msra.mxu0 0.0
    %400 = vmatprep.subr.mxu0 0.0
    %401 = vmatpush1.msra.mxu0 0.0
    %402 = vmatprep.subr.mxu0 0.0
    %403 = vmatpush1.msra.mxu0 0.0
    %404 = vmatprep.subr.mxu0 0.0
    %405 = vmatpush1.msra.mxu0 0.0
    %406 = vmatprep.subr.mxu0 0.0
    %407 = vmatpush1.msra.mxu0 0.0
    %408 = vmatprep.mubr.f32.mxu0 0.0
    %409 = vmatmul.mubr.f32.gmra.mrb[0].mxu0 %v342
    %v410 = vpop.f32.mrb[0].mxu0
    %v411 = vadd.f32 0.0, %v410
    %v412 = vpop.f32.mrb[0].mxu0
    %413 = vdwg.mxu0
    %v414 = vadd.f32 %v175, %v411
    %415 = vrot.lane.b32.xlu0 %v158, 120
    %v416 = vpop.permute.xlu0 %415
    %417 = vrot.lane.b32.xlu0 %v158, 88
    %v418 = vpop.permute.xlu0 %417
    %v419 = vsel %vm179, %v416, 0
    %v421 = vsel %vm179, %v418, 0
    %423 = vmatprep.subr.mxu0 0.0
    %424 = vmatpush1.xpose.msra.mxu0 %v421
    %425 = vmatprep.subr.mxu0 0.0
    %426 = vmatpush1.xpose.msra.mxu0 0.0
    %427 = vmatprep.subr.mxu0 0.0
    %428 = vmatpush1.xpose.msra.mxu0 0.0
    %429 = vmatprep.subr.mxu0 0.0
    %430 = vmatpush1.xpose.msra.mxu0 0.0
    %431 = vmatprep.subr.mxu0 0.0
    %432 = vmatpush1.xpose.msra.mxu0 0.0
    %433 = vmatprep.subr.mxu0 0.0
    %434 = vmatpush1.xpose.msra.mxu0 0.0
    %435 = vmatprep.subr.mxu0 0.0
    %436 = vmatpush1.xpose.msra.mxu0 0.0
    %437 = vmatprep.subr.mxu0 0.0
    %438 = vmatpush1.xpose.msra.mxu0 0.0
    %439 = vmatprep.subr.mxu0 0.0
    %440 = vmatpush1.xpose.msra.mxu0 0.0
    %441 = vmatprep.subr.mxu0 0.0
    %442 = vmatpush1.xpose.msra.mxu0 0.0
    %443 = vmatprep.subr.mxu0 0.0
    %444 = vmatpush1.xpose.msra.mxu0 0.0
    %445 = vmatprep.subr.mxu0 0.0
    %446 = vmatpush1.xpose.msra.mxu0 0.0
    %447 = vmatprep.subr.mxu0 0.0
    %448 = vmatpush1.xpose.msra.mxu0 0.0
    %449 = vmatprep.subr.mxu0 0.0
    %450 = vmatpush1.xpose.msra.mxu0 0.0
    %451 = vmatprep.subr.mxu0 0.0
    %452 = vmatpush1.xpose.msra.mxu0 0.0
    %453 = vmatprep.subr.mxu0 0.0
    %454 = vmatpush1.xpose.msra.mxu0 0.0
    %455 = vmatprep.subr.mxu0 0.0
    %456 = vmatpush1.xpose.msra.mxu0 0.0
    %457 = vmatprep.subr.mxu0 0.0
    %458 = vmatpush1.xpose.msra.mxu0 0.0
    %459 = vmatprep.subr.mxu0 0.0
    %460 = vmatpush1.xpose.msra.mxu0 0.0
    %461 = vmatprep.subr.mxu0 0.0
    %462 = vmatpush1.xpose.msra.mxu0 0.0
    %463 = vmatprep.subr.mxu0 0.0
    %464 = vmatpush1.xpose.msra.mxu0 0.0
    %465 = vmatprep.subr.mxu0 0.0
    %466 = vmatpush1.xpose.msra.mxu0 0.0
    %467 = vmatprep.subr.mxu0 0.0
    %468 = vmatpush1.xpose.msra.mxu0 0.0
    %469 = vmatprep.subr.mxu0 0.0
    %470 = vmatpush1.xpose.msra.mxu0 0.0
    %471 = vmatprep.subr.mxu0 0.0
    %472 = vmatpush1.xpose.msra.mxu0 0.0
    %473 = vmatprep.subr.mxu0 0.0
    %474 = vmatpush1.xpose.msra.mxu0 0.0
    %475 = vmatprep.subr.mxu0 0.0
    %476 = vmatpush1.xpose.msra.mxu0 0.0
    %477 = vmatprep.subr.mxu0 0.0
    %478 = vmatpush1.xpose.msra.mxu0 0.0
    %479 = vmatprep.subr.mxu0 0.0
    %480 = vmatpush1.xpose.msra.mxu0 0.0
    %481 = vmatprep.subr.mxu0 0.0
    %482 = vmatpush1.xpose.msra.mxu0 0.0
    %483 = vmatprep.subr.mxu0 0.0
    %484 = vmatpush1.xpose.msra.mxu0 0.0
    %485 = vmatprep.subr.mxu0 0.0
    %486 = vmatpush1.xpose.msra.mxu0 0.0
    %487 = vmatprep.mubr.f32.mxu0 0.0
    %488 = vmatmul.mubr.f32.gmra.mrb[0].mxu0 %v419
    %v489 = vpop.f32.mrb[0].mxu0
    %v490 = vadd.f32 0.0, %v489
    %v491 = vpop.f32.mrb[0].mxu0
    %492 = vdwg.mxu0
    %v493 = vsel %vm179, %v490, -inf
    %494 = vmax.xlane.f32.xlu0 %v493
    %v495 = vpop.xlane.xlu0 %494
    %v496 = vsub.f32 %v490, %v495
    %v497 = vmul.f32 %v496, 1.442695
    %v498 = vpow.pop %v497
    %v499 = vsel %vm179, %v498, 0.0
    %500 = vadd.xlane.f32.xlu0 %v499
    %v501 = vpop.xlane.xlu0 %500
    %v502 = vrcp.pop %v501
    %v503 = vmul.f32 %v498, %v502
    %504 = vrot.lane.b32.xlu0 %v158, 56
    %v505 = vpop.permute.xlu0 %504
    %v508 = vsel %vm179, %v503, 0
    %510 = vmatprep.subr.mxu0 0.0
    %511 = vmatpush1.msra.mxu0 %v505
    %512 = vmatprep.subr.mxu0 0.0
    %513 = vmatpush1.msra.mxu0 0.0
    %514 = vmatprep.subr.mxu0 0.0
    %515 = vmatpush1.msra.mxu0 0.0
    %516 = vmatprep.subr.mxu0 0.0
    %517 = vmatpush1.msra.mxu0 0.0
    %518 = vmatprep.subr.mxu0 0.0
    %519 = vmatpush1.msra.mxu0 0.0
    %520 = vmatprep.subr.mxu0 0.0
    %521 = vmatpush1.msra.mxu0 0.0
    %522 = vmatprep.subr.mxu0 0.0
    %523 = vmatpush1.msra.mxu0 0.0
    %524 = vmatprep.subr.mxu0 0.0
    %525 = vmatpush1.msra.mxu0 0.0
    %526 = vmatprep.subr.mxu0 0.0
    %527 = vmatpush1.msra.mxu0 0.0
    %528 = vmatprep.subr.mxu0 0.0
    %529 = vmatpush1.msra.mxu0 0.0
    %530 = vmatprep.subr.mxu0 0.0
    %531 = vmatpush1.msra.mxu0 0.0
    %532 = vmatprep.subr.mxu0 0.0
    %533 = vmatpush1.msra.mxu0 0.0
    %534 = vmatprep.subr.mxu0 0.0
    %535 = vmatpush1.msra.mxu0 0.0
    %536 = vmatprep.subr.mxu0 0.0
    %537 = vmatpush1.msra.mxu0 0.0
    %538 = vmatprep.subr.mxu0 0.0
    %539 = vmatpush1.msra.mxu0 0.0
    %540 = vmatprep.subr.mxu0 0.0
    %541 = vmatpush1.msra.mxu0 0.0
    %542 = vmatprep.subr.mxu0 0.0
    %543 = vmatpush1.msra.mxu0 0.0
    %544 = vmatprep.subr.mxu0 0.0
    %545 = vmatpush1.msra.mxu0 0.0
    %546 = vmatprep.subr.mxu0 0.0
    %547 = vmatpush1.msra.mxu0 0.0
    %548 = vmatprep.subr.mxu0 0.0
    %549 = vmatpush1.msra.mxu0 0.0
    %550 = vmatprep.subr.mxu0 0.0
    %551 = vmatpush1.msra.mxu0 0.0
    %552 = vmatprep.subr.mxu0 0.0
    %553 = vmatpush1.msra.mxu0 0.0
    %554 = vmatprep.subr.mxu0 0.0
    %555 = vmatpush1.msra.mxu0 0.0
    %556 = vmatprep.subr.mxu0 0.0
    %557 = vmatpush1.msra.mxu0 0.0
    %558 = vmatprep.subr.mxu0 0.0
    %559 = vmatpush1.msra.mxu0 0.0
    %560 = vmatprep.subr.mxu0 0.0
    %561 = vmatpush1.msra.mxu0 0.0
    %562 = vmatprep.subr.mxu0 0.0
    %563 = vmatpush1.msra.mxu0 0.0
    %564 = vmatprep.subr.mxu0 0.0
    %565 = vmatpush1.msra.mxu0 0.0
    %566 = vmatprep.subr.mxu0 0.0
    %567 = vmatpush1.msra.mxu0 0.0
    %568 = vmatprep.subr.mxu0 0.0
    %569 = vmatpush1.msra.mxu0 0.0
    %570 = vmatprep.subr.mxu0 0.0
    %571 = vmatpush1.msra.mxu0 0.0
    %572 = vmatprep.subr.mxu0 0.0
    %573 = vmatpush1.msra.mxu0 0.0
    %574 = vmatprep.mubr.f32.mxu0 0.0
    %575 = vmatmul.mubr.f32.gmra.mrb[0].mxu0 %v508
    %v576 = vpop.f32.mrb[0].mxu0
    %v577 = vadd.f32 0.0, %v576
    %v578 = vpop.f32.mrb[0].mxu0
    %579 = vdwg.mxu0
    %v581 = vsel %vm179, %v577, 0
    %583 = vmatprep.subr.mxu0 0.0
    %584 = vmatpush1.msra.mxu0 %v167
    %585 = vmatprep.subr.mxu0 0.0
    %586 = vmatpush1.msra.mxu0 0.0
    %587 = vmatprep.subr.mxu0 0.0
    %588 = vmatpush1.msra.mxu0 0.0
    %589 = vmatprep.subr.mxu0 0.0
    %590 = vmatpush1.msra.mxu0 0.0
    %591 = vmatprep.subr.mxu0 0.0
    %592 = vmatpush1.msra.mxu0 0.0
    %593 = vmatprep.subr.mxu0 0.0
    %594 = vmatpush1.msra.mxu0 0.0
    %595 = vmatprep.subr.mxu0 0.0
    %596 = vmatpush1.msra.mxu0 0.0
    %597 = vmatprep.subr.mxu0 0.0
    %598 = vmatpush1.msra.mxu0 0.0
    %599 = vmatprep.subr.mxu0 0.0
    %600 = vmatpush1.msra.mxu0 0.0
    %601 = vmatprep.subr.mxu0 0.0
    %602 = vmatpush1.msra.mxu0 0.0
    %603 = vmatprep.subr.mxu0 0.0
    %604 = vmatpush1.msra.mxu0 0.0
    %605 = vmatprep.subr.mxu0 0.0
    %606 = vmatpush1.msra.mxu0 0.0
    %607 = vmatprep.subr.mxu0 0.0
    %608 = vmatpush1.msra.mxu0 0.0
    %609 = vmatprep.subr.mxu0 0.0
    %610 = vmatpush1.msra.mxu0 0.0
    %611 = vmatprep.subr.mxu0 0.0
    %612 = vmatpush1.msra.mxu0 0.0
    %613 = vmatprep.subr.mxu0 0.0
    %614 = vmatpush1.msra.mxu0 0.0
    %615 = vmatprep.subr.mxu0 0.0
    %616 = vmatpush1.msra.mxu0 0.0
    %617 = vmatprep.subr.mxu0 0.0
    %618 = vmatpush1.msra.mxu0 0.0
    %619 = vmatprep.subr.mxu0 0.0
    %620 = vmatpush1.msra.mxu0 0.0
    %621 = vmatprep.subr.mxu0 0.0
    %622 = vmatpush1.msra.mxu0 0.0
    %623 = vmatprep.subr.mxu0 0.0
    %624 = vmatpush1.msra.mxu0 0.0
    %625 = vmatprep.subr.mxu0 0.0
    %626 = vmatpush1.msra.mxu0 0.0
    %627 = vmatprep.subr.mxu0 0.0
    %628 = vmatpush1.msra.mxu0 0.0
    %629 = vmatprep.subr.mxu0 0.0
    %630 = vmatpush1.msra.mxu0 0.0
    %631 = vmatprep.subr.mxu0 0.0
    %632 = vmatpush1.msra.mxu0 0.0
    %633 = vmatprep.subr.mxu0 0.0
    %634 = vmatpush1.msra.mxu0 0.0
    %635 = vmatprep.subr.mxu0 0.0
    %636 = vmatpush1.msra.mxu0 0.0
    %637 = vmatprep.subr.mxu0 0.0
    %638 = vmatpush1.msra.mxu0 0.0
    %639 = vmatprep.subr.mxu0 0.0
    %640 = vmatpush1.msra.mxu0 0.0
    %641 = vmatprep.subr.mxu0 0.0
    %642 = vmatpush1.msra.mxu0 0.0
    %643 = vmatprep.subr.mxu0 0.0
    %644 = vmatpush1.msra.mxu0 0.0
    %645 = vmatprep.subr.mxu0 0.0
    %646 = vmatpush1.msra.mxu0 0.0
    %647 = vmatprep.mubr.f32.mxu0 0.0
    %648 = vmatmul.mubr.f32.gmra.mrb[0].mxu0 %v581
    %v649 = vpop.f32.mrb[0].mxu0
    %v650 = vadd.f32 0.0, %v649
    %v651 = vpop.f32.mrb[0].mxu0
    %652 = vdwg.mxu0
    %v653 = vadd.f32 %v414, %v650
    %654 = vrot.lane.b32.xlu0 %v158, 112
    %v655 = vpop.permute.xlu0 %654
    %656 = vrot.lane.b32.xlu0 %v158, 80
    %v657 = vpop.permute.xlu0 %656
    %v658 = vsel %vm179, %v655, 0
    %v660 = vsel %vm179, %v657, 0
    %662 = vmatprep.subr.mxu0 0.0
    %663 = vmatpush1.xpose.msra.mxu0 %v660
    %664 = vmatprep.subr.mxu0 0.0
    %665 = vmatpush1.xpose.msra.mxu0 0.0
    %666 = vmatprep.subr.mxu0 0.0
    %667 = vmatpush1.xpose.msra.mxu0 0.0
    %668 = vmatprep.subr.mxu0 0.0
    %669 = vmatpush1.xpose.msra.mxu0 0.0
    %670 = vmatprep.subr.mxu0 0.0
    %671 = vmatpush1.xpose.msra.mxu0 0.0
    %672 = vmatprep.subr.mxu0 0.0
    %673 = vmatpush1.xpose.msra.mxu0 0.0
    %674 = vmatprep.subr.mxu0 0.0
    %675 = vmatpush1.xpose.msra.mxu0 0.0
    %676 = vmatprep.subr.mxu0 0.0
    %677 = vmatpush1.xpose.msra.mxu0 0.0
    %678 = vmatprep.subr.mxu0 0.0
    %679 = vmatpush1.xpose.msra.mxu0 0.0
    %680 = vmatprep.subr.mxu0 0.0
    %681 = vmatpush1.xpose.msra.mxu0 0.0
    %682 = vmatprep.subr.mxu0 0.0
    %683 = vmatpush1.xpose.msra.mxu0 0.0
    %684 = vmatprep.subr.mxu0 0.0
    %685 = vmatpush1.xpose.msra.mxu0 0.0
    %686 = vmatprep.subr.mxu0 0.0
    %687 = vmatpush1.xpose.msra.mxu0 0.0
    %688 = vmatprep.subr.mxu0 0.0
    %689 = vmatpush1.xpose.msra.mxu0 0.0
    %690 = vmatprep.subr.mxu0 0.0
    %691 = vmatpush1.xpose.msra.mxu0 0.0
    %692 = vmatprep.subr.mxu0 0.0
    %693 = vmatpush1.xpose.msra.mxu0 0.0
    %694 = vmatprep.subr.mxu0 0.0
    %695 = vmatpush1.xpose.msra.mxu0 0.0
    %696 = vmatprep.subr.mxu0 0.0
    %697 = vmatpush1.xpose.msra.mxu0 0.0
    %698 = vmatprep.subr.mxu0 0.0
    %699 = vmatpush1.xpose.msra.mxu0 0.0
    %700 = vmatprep.subr.mxu0 0.0
    %701 = vmatpush1.xpose.msra.mxu0 0.0
    %702 = vmatprep.subr.mxu0 0.0
    %703 = vmatpush1.xpose.msra.mxu0 0.0
    %704 = vmatprep.subr.mxu0 0.0
    %705 = vmatpush1.xpose.msra.mxu0 0.0
    %706 = vmatprep.subr.mxu0 0.0
    %707 = vmatpush1.xpose.msra.mxu0 0.0
    %708 = vmatprep.subr.mxu0 0.0
    %709 = vmatpush1.xpose.msra.mxu0 0.0
    %710 = vmatprep.subr.mxu0 0.0
    %711 = vmatpush1.xpose.msra.mxu0 0.0
    %712 = vmatprep.subr.mxu0 0.0
    %713 = vmatpush1.xpose.msra.mxu0 0.0
    %714 = vmatprep.subr.mxu0 0.0
    %715 = vmatpush1.xpose.msra.mxu0 0.0
    %716 = vmatprep.subr.mxu0 0.0
    %717 = vmatpush1.xpose.msra.mxu0 0.0
    %718 = vmatprep.subr.mxu0 0.0
    %719 = vmatpush1.xpose.msra.mxu0 0.0
    %720 = vmatprep.subr.mxu0 0.0
    %721 = vmatpush1.xpose.msra.mxu0 0.0
    %722 = vmatprep.subr.mxu0 0.0
    %723 = vmatpush1.xpose.msra.mxu0 0.0
    %724 = vmatprep.subr.mxu0 0.0
    %725 = vmatpush1.xpose.msra.mxu0 0.0
    %726 = vmatprep.mubr.f32.mxu0 0.0
    %727 = vmatmul.mubr.f32.gmra.mrb[0].mxu0 %v658
    %v728 = vpop.f32.mrb[0].mxu0
    %v729 = vadd.f32 0.0, %v728
    %v730 = vpop.f32.mrb[0].mxu0
    %731 = vdwg.mxu0
    %v732 = vsel %vm179, %v729, -inf
    %733 = vmax.xlane.f32.xlu0 %v732
    %v734 = vpop.xlane.xlu0 %733
    %v735 = vsub.f32 %v729, %v734
    %v736 = vmul.f32 %v735, 1.442695
    %v737 = vpow.pop %v736
    %v738 = vsel %vm179, %v737, 0.0
    %739 = vadd.xlane.f32.xlu0 %v738
    %v740 = vpop.xlane.xlu0 %739
    %v741 = vrcp.pop %v740
    %v742 = vmul.f32 %v737, %v741
    %743 = vrot.lane.b32.xlu0 %v158, 48
    %v744 = vpop.permute.xlu0 %743
    %v747 = vsel %vm179, %v742, 0
    %749 = vmatprep.subr.mxu0 0.0
    %750 = vmatpush1.msra.mxu0 %v744
    %751 = vmatprep.subr.mxu0 0.0
    %752 = vmatpush1.msra.mxu0 0.0
    %753 = vmatprep.subr.mxu0 0.0
    %754 = vmatpush1.msra.mxu0 0.0
    %755 = vmatprep.subr.mxu0 0.0
    %756 = vmatpush1.msra.mxu0 0.0
    %757 = vmatprep.subr.mxu0 0.0
    %758 = vmatpush1.msra.mxu0 0.0
    %759 = vmatprep.subr.mxu0 0.0
    %760 = vmatpush1.msra.mxu0 0.0
    %761 = vmatprep.subr.mxu0 0.0
    %762 = vmatpush1.msra.mxu0 0.0
    %763 = vmatprep.subr.mxu0 0.0
    %764 = vmatpush1.msra.mxu0 0.0
    %765 = vmatprep.subr.mxu0 0.0
    %766 = vmatpush1.msra.mxu0 0.0
    %767 = vmatprep.subr.mxu0 0.0
    %768 = vmatpush1.msra.mxu0 0.0
    %769 = vmatprep.subr.mxu0 0.0
    %770 = vmatpush1.msra.mxu0 0.0
    %771 = vmatprep.subr.mxu0 0.0
    %772 = vmatpush1.msra.mxu0 0.0
    %773 = vmatprep.subr.mxu0 0.0
    %774 = vmatpush1.msra.mxu0 0.0
    %775 = vmatprep.subr.mxu0 0.0
    %776 = vmatpush1.msra.mxu0 0.0
    %777 = vmatprep.subr.mxu0 0.0
    %778 = vmatpush1.msra.mxu0 0.0
    %779 = vmatprep.subr.mxu0 0.0
    %780 = vmatpush1.msra.mxu0 0.0
    %781 = vmatprep.subr.mxu0 0.0
    %782 = vmatpush1.msra.mxu0 0.0
    %783 = vmatprep.subr.mxu0 0.0
    %784 = vmatpush1.msra.mxu0 0.0
    %785 = vmatprep.subr.mxu0 0.0
    %786 = vmatpush1.msra.mxu0 0.0
    %787 = vmatprep.subr.mxu0 0.0
    %788 = vmatpush1.msra.mxu0 0.0
    %789 = vmatprep.subr.mxu0 0.0
    %790 = vmatpush1.msra.mxu0 0.0
    %791 = vmatprep.subr.mxu0 0.0
    %792 = vmatpush1.msra.mxu0 0.0
    %793 = vmatprep.subr.mxu0 0.0
    %794 = vmatpush1.msra.mxu0 0.0
    %795 = vmatprep.subr.mxu0 0.0
    %796 = vmatpush1.msra.mxu0 0.0
    %797 = vmatprep.subr.mxu0 0.0
    %798 = vmatpush1.msra.mxu0 0.0
    %799 = vmatprep.subr.mxu0 0.0
    %800 = vmatpush1.msra.mxu0 0.0
    %801 = vmatprep.subr.mxu0 0.0
    %802 = vmatpush1.msra.mxu0 0.0
    %803 = vmatprep.subr.mxu0 0.0
    %804 = vmatpush1.msra.mxu0 0.0
    %805 = vmatprep.subr.mxu0 0.0
    %806 = vmatpush1.msra.mxu0 0.0
    %807 = vmatprep.subr.mxu0 0.0
    %808 = vmatpush1.msra.mxu0 0.0
    %809 = vmatprep.subr.mxu0 0.0
    %810 = vmatpush1.msra.mxu0 0.0
    %811 = vmatprep.subr.mxu0 0.0
    %812 = vmatpush1.msra.mxu0 0.0
    %813 = vmatprep.mubr.f32.mxu0 0.0
    %814 = vmatmul.mubr.f32.gmra.mrb[0].mxu0 %v747
    %v815 = vpop.f32.mrb[0].mxu0
    %v816 = vadd.f32 0.0, %v815
    %v817 = vpop.f32.mrb[0].mxu0
    %818 = vdwg.mxu0
    %v820 = vsel %vm179, %v816, 0
    %822 = vmatprep.subr.mxu0 0.0
    %823 = vmatpush1.msra.mxu0 %v168
    %824 = vmatprep.subr.mxu0 0.0
    %825 = vmatpush1.msra.mxu0 0.0
    %826 = vmatprep.subr.mxu0 0.0
    %827 = vmatpush1.msra.mxu0 0.0
    %828 = vmatprep.subr.mxu0 0.0
    %829 = vmatpush1.msra.mxu0 0.0
    %830 = vmatprep.subr.mxu0 0.0
    %831 = vmatpush1.msra.mxu0 0.0
    %832 = vmatprep.subr.mxu0 0.0
    %833 = vmatpush1.msra.mxu0 0.0
    %834 = vmatprep.subr.mxu0 0.0
    %835 = vmatpush1.msra.mxu0 0.0
    %836 = vmatprep.subr.mxu0 0.0
    %837 = vmatpush1.msra.mxu0 0.0
    %838 = vmatprep.subr.mxu0 0.0
    %839 = vmatpush1.msra.mxu0 0.0
    %840 = vmatprep.subr.mxu0 0.0
    %841 = vmatpush1.msra.mxu0 0.0
    %842 = vmatprep.subr.mxu0 0.0
    %843 = vmatpush1.msra.mxu0 0.0
    %844 = vmatprep.subr.mxu0 0.0
    %845 = vmatpush1.msra.mxu0 0.0
    %846 = vmatprep.subr.mxu0 0.0
    %847 = vmatpush1.msra.mxu0 0.0
    %848 = vmatprep.subr.mxu0 0.0
    %849 = vmatpush1.msra.mxu0 0.0
    %850 = vmatprep.subr.mxu0 0.0
    %851 = vmatpush1.msra.mxu0 0.0
    %852 = vmatprep.subr.mxu0 0.0
    %853 = vmatpush1.msra.mxu0 0.0
    %854 = vmatprep.subr.mxu0 0.0
    %855 = vmatpush1.msra.mxu0 0.0
    %856 = vmatprep.subr.mxu0 0.0
    %857 = vmatpush1.msra.mxu0 0.0
    %858 = vmatprep.subr.mxu0 0.0
    %859 = vmatpush1.msra.mxu0 0.0
    %860 = vmatprep.subr.mxu0 0.0
    %861 = vmatpush1.msra.mxu0 0.0
    %862 = vmatprep.subr.mxu0 0.0
    %863 = vmatpush1.msra.mxu0 0.0
    %864 = vmatprep.subr.mxu0 0.0
    %865 = vmatpush1.msra.mxu0 0.0
    %866 = vmatprep.subr.mxu0 0.0
    %867 = vmatpush1.msra.mxu0 0.0
    %868 = vmatprep.subr.mxu0 0.0
    %869 = vmatpush1.msra.mxu0 0.0
    %870 = vmatprep.subr.mxu0 0.0
    %871 = vmatpush1.msra.mxu0 0.0
    %872 = vmatprep.subr.mxu0 0.0
    %873 = vmatpush1.msra.mxu0 0.0
    %874 = vmatprep.subr.mxu0 0.0
    %875 = vmatpush1.msra.mxu0 0.0
    %876 = vmatprep.subr.mxu0 0.0
    %877 = vmatpush1.msra.mxu0 0.0
    %878 = vmatprep.subr.mxu0 0.0
    %879 = vmatpush1.msra.mxu0 0.0
    %880 = vmatprep.subr.mxu0 0.0
    %881 = vmatpush1.msra.mxu0 0.0
    %882 = vmatprep.subr.mxu0 0.0
    %883 = vmatpush1.msra.mxu0 0.0
    %884 = vmatprep.subr.mxu0 0.0
    %885 = vmatpush1.msra.mxu0 0.0
    %886 = vmatprep.mubr.f32.mxu0 0.0
    %887 = vmatmul.mubr.f32.gmra.mrb[0].mxu0 %v820
    %v888 = vpop.f32.mrb[0].mxu0
    %v889 = vadd.f32 0.0, %v888
    %v890 = vpop.f32.mrb[0].mxu0
    %891 = vdwg.mxu0
    %v892 = vadd.f32 %v653, %v889
    %893 = vrot.lane.b32.xlu0 %v158, 104
    %v894 = vpop.permute.xlu0 %893
    %895 = vrot.lane.b32.xlu0 %v158, 72
    %v896 = vpop.permute.xlu0 %895
    %v897 = vsel %vm179, %v894, 0
    %v899 = vsel %vm179, %v896, 0
    %901 = vmatprep.subr.mxu0 0.0
    %902 = vmatpush1.xpose.msra.mxu0 %v899
    %903 = vmatprep.subr.mxu0 0.0
    %904 = vmatpush1.xpose.msra.mxu0 0.0
    %905 = vmatprep.subr.mxu0 0.0
    %906 = vmatpush1.xpose.msra.mxu0 0.0
    %907 = vmatprep.subr.mxu0 0.0
    %908 = vmatpush1.xpose.msra.mxu0 0.0
    %909 = vmatprep.subr.mxu0 0.0
    %910 = vmatpush1.xpose.msra.mxu0 0.0
    %911 = vmatprep.subr.mxu0 0.0
    %912 = vmatpush1.xpose.msra.mxu0 0.0
    %913 = vmatprep.subr.mxu0 0.0
    %914 = vmatpush1.xpose.msra.mxu0 0.0
    %915 = vmatprep.subr.mxu0 0.0
    %916 = vmatpush1.xpose.msra.mxu0 0.0
    %917 = vmatprep.subr.mxu0 0.0
    %918 = vmatpush1.xpose.msra.mxu0 0.0
    %919 = vmatprep.subr.mxu0 0.0
    %920 = vmatpush1.xpose.msra.mxu0 0.0
    %921 = vmatprep.subr.mxu0 0.0
    %922 = vmatpush1.xpose.msra.mxu0 0.0
    %923 = vmatprep.subr.mxu0 0.0
    %924 = vmatpush1.xpose.msra.mxu0 0.0
    %925 = vmatprep.subr.mxu0 0.0
    %926 = vmatpush1.xpose.msra.mxu0 0.0
    %927 = vmatprep.subr.mxu0 0.0
    %928 = vmatpush1.xpose.msra.mxu0 0.0
    %929 = vmatprep.subr.mxu0 0.0
    %930 = vmatpush1.xpose.msra.mxu0 0.0
    %931 = vmatprep.subr.mxu0 0.0
    %932 = vmatpush1.xpose.msra.mxu0 0.0
    %933 = vmatprep.subr.mxu0 0.0
    %934 = vmatpush1.xpose.msra.mxu0 0.0
    %935 = vmatprep.subr.mxu0 0.0
    %936 = vmatpush1.xpose.msra.mxu0 0.0
    %937 = vmatprep.subr.mxu0 0.0
    %938 = vmatpush1.xpose.msra.mxu0 0.0
    %939 = vmatprep.subr.mxu0 0.0
    %940 = vmatpush1.xpose.msra.mxu0 0.0
    %941 = vmatprep.subr.mxu0 0.0
    %942 = vmatpush1.xpose.msra.mxu0 0.0
    %943 = vmatprep.subr.mxu0 0.0
    %944 = vmatpush1.xpose.msra.mxu0 0.0
    %945 = vmatprep.subr.mxu0 0.0
    %946 = vmatpush1.xpose.msra.mxu0 0.0
    %947 = vmatprep.subr.mxu0 0.0
    %948 = vmatpush1.xpose.msra.mxu0 0.0
    %949 = vmatprep.subr.mxu0 0.0
    %950 = vmatpush1.xpose.msra.mxu0 0.0
    %951 = vmatprep.subr.mxu0 0.0
    %952 = vmatpush1.xpose.msra.mxu0 0.0
    %953 = vmatprep.subr.mxu0 0.0
    %954 = vmatpush1.xpose.msra.mxu0 0.0
    %955 = vmatprep.subr.mxu0 0.0
    %956 = vmatpush1.xpose.msra.mxu0 0.0
    %957 = vmatprep.subr.mxu0 0.0
    %958 = vmatpush1.xpose.msra.mxu0 0.0
    %959 = vmatprep.subr.mxu0 0.0
    %960 = vmatpush1.xpose.msra.mxu0 0.0
    %961 = vmatprep.subr.mxu0 0.0
    %962 = vmatpush1.xpose.msra.mxu0 0.0
    %963 = vmatprep.subr.mxu0 0.0
    %964 = vmatpush1.xpose.msra.mxu0 0.0
    %965 = vmatprep.mubr.f32.mxu0 0.0
    %966 = vmatmul.mubr.f32.gmra.mrb[0].mxu0 %v897
    %v967 = vpop.f32.mrb[0].mxu0
    %v968 = vadd.f32 0.0, %v967
    %v969 = vpop.f32.mrb[0].mxu0
    %970 = vdwg.mxu0
    %v971 = vsel %vm179, %v968, -inf
    %972 = vmax.xlane.f32.xlu0 %v971
    %v973 = vpop.xlane.xlu0 %972
    %v974 = vsub.f32 %v968, %v973
    %v975 = vmul.f32 %v974, 1.442695
    %v976 = vpow.pop %v975
    %v977 = vsel %vm179, %v976, 0.0
    %978 = vadd.xlane.f32.xlu0 %v977
    %v979 = vpop.xlane.xlu0 %978
    %v980 = vrcp.pop %v979
    %v981 = vmul.f32 %v976, %v980
    %982 = vrot.lane.b32.xlu0 %v158, 40
    %v983 = vpop.permute.xlu0 %982
    %v986 = vsel %vm179, %v981, 0
    %988 = vmatprep.subr.mxu0 0.0
    %989 = vmatpush1.msra.mxu0 %v983
    %990 = vmatprep.subr.mxu0 0.0
    %991 = vmatpush1.msra.mxu0 0.0
    %992 = vmatprep.subr.mxu0 0.0
    %993 = vmatpush1.msra.mxu0 0.0
    %994 = vmatprep.subr.mxu0 0.0
    %995 = vmatpush1.msra.mxu0 0.0
    %996 = vmatprep.subr.mxu0 0.0
    %997 = vmatpush1.msra.mxu0 0.0
    %998 = vmatprep.subr.mxu0 0.0
    %999 = vmatpush1.msra.mxu0 0.0
    %1000 = vmatprep.subr.mxu0 0.0
    %1001 = vmatpush1.msra.mxu0 0.0
    %1002 = vmatprep.subr.mxu0 0.0
    %1003 = vmatpush1.msra.mxu0 0.0
    %1004 = vmatprep.subr.mxu0 0.0
    %1005 = vmatpush1.msra.mxu0 0.0
    %1006 = vmatprep.subr.mxu0 0.0
    %1007 = vmatpush1.msra.mxu0 0.0
    %1008 = vmatprep.subr.mxu0 0.0
    %1009 = vmatpush1.msra.mxu0 0.0
    %1010 = vmatprep.subr.mxu0 0.0
    %1011 = vmatpush1.msra.mxu0 0.0
    %1012 = vmatprep.subr.mxu0 0.0
    %1013 = vmatpush1.msra.mxu0 0.0
    %1014 = vmatprep.subr.mxu0 0.0
    %1015 = vmatpush1.msra.mxu0 0.0
    %1016 = vmatprep.subr.mxu0 0.0
    %1017 = vmatpush1.msra.mxu0 0.0
    %1018 = vmatprep.subr.mxu0 0.0
    %1019 = vmatpush1.msra.mxu0 0.0
    %1020 = vmatprep.subr.mxu0 0.0
    %1021 = vmatpush1.msra.mxu0 0.0
    %1022 = vmatprep.subr.mxu0 0.0
    %1023 = vmatpush1.msra.mxu0 0.0
    %1024 = vmatprep.subr.mxu0 0.0
    %1025 = vmatpush1.msra.mxu0 0.0
    %1026 = vmatprep.subr.mxu0 0.0
    %1027 = vmatpush1.msra.mxu0 0.0
    %1028 = vmatprep.subr.mxu0 0.0
    %1029 = vmatpush1.msra.mxu0 0.0
    %1030 = vmatprep.subr.mxu0 0.0
    %1031 = vmatpush1.msra.mxu0 0.0
    %1032 = vmatprep.subr.mxu0 0.0
    %1033 = vmatpush1.msra.mxu0 0.0
    %1034 = vmatprep.subr.mxu0 0.0
    %1035 = vmatpush1.msra.mxu0 0.0
    %1036 = vmatprep.subr.mxu0 0.0
    %1037 = vmatpush1.msra.mxu0 0.0
    %1038 = vmatprep.subr.mxu0 0.0
    %1039 = vmatpush1.msra.mxu0 0.0
    %1040 = vmatprep.subr.mxu0 0.0
    %1041 = vmatpush1.msra.mxu0 0.0
    %1042 = vmatprep.subr.mxu0 0.0
    %1043 = vmatpush1.msra.mxu0 0.0
    %1044 = vmatprep.subr.mxu0 0.0
    %1045 = vmatpush1.msra.mxu0 0.0
    %1046 = vmatprep.subr.mxu0 0.0
    %1047 = vmatpush1.msra.mxu0 0.0
    %1048 = vmatprep.subr.mxu0 0.0
    %1049 = vmatpush1.msra.mxu0 0.0
    %1050 = vmatprep.subr.mxu0 0.0
    %1051 = vmatpush1.msra.mxu0 0.0
    %1052 = vmatprep.mubr.f32.mxu0 0.0
    %1053 = vmatmul.mubr.f32.gmra.mrb[0].mxu0 %v986
    %v1054 = vpop.f32.mrb[0].mxu0
    %v1055 = vadd.f32 0.0, %v1054
    %v1056 = vpop.f32.mrb[0].mxu0
    %1057 = vdwg.mxu0
    %v1059 = vsel %vm179, %v1055, 0
    %1061 = vmatprep.subr.mxu0 0.0
    %1062 = vmatpush1.msra.mxu0 %v169
    %1063 = vmatprep.subr.mxu0 0.0
    %1064 = vmatpush1.msra.mxu0 0.0
    %1065 = vmatprep.subr.mxu0 0.0
    %1066 = vmatpush1.msra.mxu0 0.0
    %1067 = vmatprep.subr.mxu0 0.0
    %1068 = vmatpush1.msra.mxu0 0.0
    %1069 = vmatprep.subr.mxu0 0.0
    %1070 = vmatpush1.msra.mxu0 0.0
    %1071 = vmatprep.subr.mxu0 0.0
    %1072 = vmatpush1.msra.mxu0 0.0
    %1073 = vmatprep.subr.mxu0 0.0
    %1074 = vmatpush1.msra.mxu0 0.0
    %1075 = vmatprep.subr.mxu0 0.0
    %1076 = vmatpush1.msra.mxu0 0.0
    %1077 = vmatprep.subr.mxu0 0.0
    %1078 = vmatpush1.msra.mxu0 0.0
    %1079 = vmatprep.subr.mxu0 0.0
    %1080 = vmatpush1.msra.mxu0 0.0
    %1081 = vmatprep.subr.mxu0 0.0
    %1082 = vmatpush1.msra.mxu0 0.0
    %1083 = vmatprep.subr.mxu0 0.0
    %1084 = vmatpush1.msra.mxu0 0.0
    %1085 = vmatprep.subr.mxu0 0.0
    %1086 = vmatpush1.msra.mxu0 0.0
    %1087 = vmatprep.subr.mxu0 0.0
    %1088 = vmatpush1.msra.mxu0 0.0
    %1089 = vmatprep.subr.mxu0 0.0
    %1090 = vmatpush1.msra.mxu0 0.0
    %1091 = vmatprep.subr.mxu0 0.0
    %1092 = vmatpush1.msra.mxu0 0.0
    %1093 = vmatprep.subr.mxu0 0.0
    %1094 = vmatpush1.msra.mxu0 0.0
    %1095 = vmatprep.subr.mxu0 0.0
    %1096 = vmatpush1.msra.mxu0 0.0
    %1097 = vmatprep.subr.mxu0 0.0
    %1098 = vmatpush1.msra.mxu0 0.0
    %1099 = vmatprep.subr.mxu0 0.0
    %1100 = vmatpush1.msra.mxu0 0.0
    %1101 = vmatprep.subr.mxu0 0.0
    %1102 = vmatpush1.msra.mxu0 0.0
    %1103 = vmatprep.subr.mxu0 0.0
    %1104 = vmatpush1.msra.mxu0 0.0
    %1105 = vmatprep.subr.mxu0 0.0
    %1106 = vmatpush1.msra.mxu0 0.0
    %1107 = vmatprep.subr.mxu0 0.0
    %1108 = vmatpush1.msra.mxu0 0.0
    %1109 = vmatprep.subr.mxu0 0.0
    %1110 = vmatpush1.msra.mxu0 0.0
    %1111 = vmatprep.subr.mxu0 0.0
    %1112 = vmatpush1.msra.mxu0 0.0
    %1113 = vmatprep.subr.mxu0 0.0
    %1114 = vmatpush1.msra.mxu0 0.0
    %1115 = vmatprep.subr.mxu0 0.0
    %1116 = vmatpush1.msra.mxu0 0.0
    %1117 = vmatprep.subr.mxu0 0.0
    %1118 = vmatpush1.msra.mxu0 0.0
    %1119 = vmatprep.subr.mxu0 0.0
    %1120 = vmatpush1.msra.mxu0 0.0
    %1121 = vmatprep.subr.mxu0 0.0
    %1122 = vmatpush1.msra.mxu0 0.0
    %1123 = vmatprep.subr.mxu0 0.0
    %1124 = vmatpush1.msra.mxu0 0.0
    %1125 = vmatprep.mubr.f32.mxu0 0.0
    %1126 = vmatmul.mubr.f32.gmra.mrb[0].mxu0 %v1059
    %v1127 = vpop.f32.mrb[0].mxu0
    %v1128 = vadd.f32 0.0, %v1127
    %v1129 = vpop.f32.mrb[0].mxu0
    %1130 = vdwg.mxu0
    %v1131 = vadd.f32 %v892, %v1128
    %1132 = vst.msk [vmem:[#allocation2] sm:$0xff] %vm84, %v1131
    %v1133 = vadd.f32 %v74, %v174
    %1135 = vrot.lane.b32.xlu0 %v163, 96
    %v1136 = vpop.permute.xlu0 %1135
    %v1137 = vsel %vm179, %v163, 0
    %v1139 = vsel %vm179, %v1136, 0
    %1141 = vmatprep.subr.mxu0 0.0
    %1142 = vmatpush1.xpose.msra.mxu0 %v1139
    %1143 = vmatprep.subr.mxu0 0.0
    %1144 = vmatpush1.xpose.msra.mxu0 0.0
    %1145 = vmatprep.subr.mxu0 0.0
    %1146 = vmatpush1.xpose.msra.mxu0 0.0
    %1147 = vmatprep.subr.mxu0 0.0
    %1148 = vmatpush1.xpose.msra.mxu0 0.0
    %1149 = vmatprep.subr.mxu0 0.0
    %1150 = vmatpush1.xpose.msra.mxu0 0.0
    %1151 = vmatprep.subr.mxu0 0.0
    %1152 = vmatpush1.xpose.msra.mxu0 0.0
    %1153 = vmatprep.subr.mxu0 0.0
    %1154 = vmatpush1.xpose.msra.mxu0 0.0
    %1155 = vmatprep.subr.mxu0 0.0
    %1156 = vmatpush1.xpose.msra.mxu0 0.0
    %1157 = vmatprep.subr.mxu0 0.0
    %1158 = vmatpush1.xpose.msra.mxu0 0.0
    %1159 = vmatprep.subr.mxu0 0.0
    %1160 = vmatpush1.xpose.msra.mxu0 0.0
    %1161 = vmatprep.subr.mxu0 0.0
    %1162 = vmatpush1.xpose.msra.mxu0 0.0
    %1163 = vmatprep.subr.mxu0 0.0
    %1164 = vmatpush1.xpose.msra.mxu0 0.0
    %1165 = vmatprep.subr.mxu0 0.0
    %1166 = vmatpush1.xpose.msra.mxu0 0.0
    %1167 = vmatprep.subr.mxu0 0.0
    %1168 = vmatpush1.xpose.msra.mxu0 0.0
    %1169 = vmatprep.subr.mxu0 0.0
    %1170 = vmatpush1.xpose.msra.mxu0 0.0
    %1171 = vmatprep.subr.mxu0 0.0
    %1172 = vmatpush1.xpose.msra.mxu0 0.0
    %1173 = vmatprep.subr.mxu0 0.0
    %1174 = vmatpush1.xpose.msra.mxu0 0.0
    %1175 = vmatprep.subr.mxu0 0.0
    %1176 = vmatpush1.xpose.msra.mxu0 0.0
    %1177 = vmatprep.subr.mxu0 0.0
    %1178 = vmatpush1.xpose.msra.mxu0 0.0
    %1179 = vmatprep.subr.mxu0 0.0
    %1180 = vmatpush1.xpose.msra.mxu0 0.0
    %1181 = vmatprep.subr.mxu0 0.0
    %1182 = vmatpush1.xpose.msra.mxu0 0.0
    %1183 = vmatprep.subr.mxu0 0.0
    %1184 = vmatpush1.xpose.msra.mxu0 0.0
    %1185 = vmatprep.subr.mxu0 0.0
    %1186 = vmatpush1.xpose.msra.mxu0 0.0
    %1187 = vmatprep.subr.mxu0 0.0
    %1188 = vmatpush1.xpose.msra.mxu0 0.0
    %1189 = vmatprep.subr.mxu0 0.0
    %1190 = vmatpush1.xpose.msra.mxu0 0.0
    %1191 = vmatprep.subr.mxu0 0.0
    %1192 = vmatpush1.xpose.msra.mxu0 0.0
    %1193 = vmatprep.subr.mxu0 0.0
    %1194 = vmatpush1.xpose.msra.mxu0 0.0
    %1195 = vmatprep.subr.mxu0 0.0
    %1196 = vmatpush1.xpose.msra.mxu0 0.0
    %1197 = vmatprep.subr.mxu0 0.0
    %1198 = vmatpush1.xpose.msra.mxu0 0.0
    %1199 = vmatprep.subr.mxu0 0.0
    %1200 = vmatpush1.xpose.msra.mxu0 0.0
    %1201 = vmatprep.subr.mxu0 0.0
    %1202 = vmatpush1.xpose.msra.mxu0 0.0
    %1203 = vmatprep.subr.mxu0 0.0
    %1204 = vmatpush1.xpose.msra.mxu0 0.0
    %1205 = vmatprep.mubr.f32.mxu0 0.0
    %1206 = vmatmul.mubr.f32.gmra.mrb[0].mxu0 %v1137
    %v1207 = vpop.f32.mrb[0].mxu0
    %v1208 = vadd.f32 0.0, %v1207
    %v1209 = vpop.f32.mrb[0].mxu0
    %1210 = vdwg.mxu0
    %v1211 = vsel %vm179, %v1208, -inf
    %1212 = vmax.xlane.f32.xlu0 %v1211
    %v1213 = vpop.xlane.xlu0 %1212
    %v1214 = vsub.f32 %v1208, %v1213
    %v1215 = vmul.f32 %v1214, 1.442695
    %v1216 = vpow.pop %v1215
    %v1217 = vsel %vm179, %v1216, 0.0
    %1218 = vadd.xlane.f32.xlu0 %v1217
    %v1219 = vpop.xlane.xlu0 %1218
    %v1220 = vrcp.pop %v1219
    %v1221 = vmul.f32 %v1216, %v1220
    %1222 = vrot.lane.b32.xlu0 %v163, 64
    %v1223 = vpop.permute.xlu0 %1222
    %v1226 = vsel %vm179, %v1221, 0
    %1228 = vmatprep.subr.mxu0 0.0
    %1229 = vmatpush1.msra.mxu0 %v1223
    %1230 = vmatprep.subr.mxu0 0.0
    %1231 = vmatpush1.msra.mxu0 0.0
    %1232 = vmatprep.subr.mxu0 0.0
    %1233 = vmatpush1.msra.mxu0 0.0
    %1234 = vmatprep.subr.mxu0 0.0
    %1235 = vmatpush1.msra.mxu0 0.0
    %1236 = vmatprep.subr.mxu0 0.0
    %1237 = vmatpush1.msra.mxu0 0.0
    %1238 = vmatprep.subr.mxu0 0.0
    %1239 = vmatpush1.msra.mxu0 0.0
    %1240 = vmatprep.subr.mxu0 0.0
    %1241 = vmatpush1.msra.mxu0 0.0
    %1242 = vmatprep.subr.mxu0 0.0
    %1243 = vmatpush1.msra.mxu0 0.0
    %1244 = vmatprep.subr.mxu0 0.0
    %1245 = vmatpush1.msra.mxu0 0.0
    %1246 = vmatprep.subr.mxu0 0.0
    %1247 = vmatpush1.msra.mxu0 0.0
    %1248 = vmatprep.subr.mxu0 0.0
    %1249 = vmatpush1.msra.mxu0 0.0
    %1250 = vmatprep.subr.mxu0 0.0
    %1251 = vmatpush1.msra.mxu0 0.0
    %1252 = vmatprep.subr.mxu0 0.0
    %1253 = vmatpush1.msra.mxu0 0.0
    %1254 = vmatprep.subr.mxu0 0.0
    %1255 = vmatpush1.msra.mxu0 0.0
    %1256 = vmatprep.subr.mxu0 0.0
    %1257 = vmatpush1.msra.mxu0 0.0
    %1258 = vmatprep.subr.mxu0 0.0
    %1259 = vmatpush1.msra.mxu0 0.0
    %1260 = vmatprep.subr.mxu0 0.0
    %1261 = vmatpush1.msra.mxu0 0.0
    %1262 = vmatprep.subr.mxu0 0.0
    %1263 = vmatpush1.msra.mxu0 0.0
    %1264 = vmatprep.subr.mxu0 0.0
    %1265 = vmatpush1.msra.mxu0 0.0
    %1266 = vmatprep.subr.mxu0 0.0
    %1267 = vmatpush1.msra.mxu0 0.0
    %1268 = vmatprep.subr.mxu0 0.0
    %1269 = vmatpush1.msra.mxu0 0.0
    %1270 = vmatprep.subr.mxu0 0.0
    %1271 = vmatpush1.msra.mxu0 0.0
    %1272 = vmatprep.subr.mxu0 0.0
    %1273 = vmatpush1.msra.mxu0 0.0
    %1274 = vmatprep.subr.mxu0 0.0
    %1275 = vmatpush1.msra.mxu0 0.0
    %1276 = vmatprep.subr.mxu0 0.0
    %1277 = vmatpush1.msra.mxu0 0.0
    %1278 = vmatprep.subr.mxu0 0.0
    %1279 = vmatpush1.msra.mxu0 0.0
    %1280 = vmatprep.subr.mxu0 0.0
    %1281 = vmatpush1.msra.mxu0 0.0
    %1282 = vmatprep.subr.mxu0 0.0
    %1283 = vmatpush1.msra.mxu0 0.0
    %1284 = vmatprep.subr.mxu0 0.0
    %1285 = vmatpush1.msra.mxu0 0.0
    %1286 = vmatprep.subr.mxu0 0.0
    %1287 = vmatpush1.msra.mxu0 0.0
    %1288 = vmatprep.subr.mxu0 0.0
    %1289 = vmatpush1.msra.mxu0 0.0
    %1290 = vmatprep.subr.mxu0 0.0
    %1291 = vmatpush1.msra.mxu0 0.0
    %1292 = vmatprep.mubr.f32.mxu0 0.0
    %1293 = vmatmul.mubr.f32.gmra.mrb[0].mxu0 %v1226
    %v1294 = vpop.f32.mrb[0].mxu0
    %v1295 = vadd.f32 0.0, %v1294
    %v1296 = vpop.f32.mrb[0].mxu0
    %1297 = vdwg.mxu0
    %v1299 = vsel %vm179, %v1295, 0
    %1301 = vmatprep.subr.mxu0 0.0
    %1302 = vmatpush1.msra.mxu0 %v166
    %1303 = vmatprep.subr.mxu0 0.0
    %1304 = vmatpush1.msra.mxu0 0.0
    %1305 = vmatprep.subr.mxu0 0.0
    %1306 = vmatpush1.msra.mxu0 0.0
    %1307 = vmatprep.subr.mxu0 0.0
    %1308 = vmatpush1.msra.mxu0 0.0
    %1309 = vmatprep.subr.mxu0 0.0
    %1310 = vmatpush1.msra.mxu0 0.0
    %1311 = vmatprep.subr.mxu0 0.0
    %1312 = vmatpush1.msra.mxu0 0.0
    %1313 = vmatprep.subr.mxu0 0.0
    %1314 = vmatpush1.msra.mxu0 0.0
    %1315 = vmatprep.subr.mxu0 0.0
    %1316 = vmatpush1.msra.mxu0 0.0
    %1317 = vmatprep.subr.mxu0 0.0
    %1318 = vmatpush1.msra.mxu0 0.0
    %1319 = vmatprep.subr.mxu0 0.0
    %1320 = vmatpush1.msra.mxu0 0.0
    %1321 = vmatprep.subr.mxu0 0.0
    %1322 = vmatpush1.msra.mxu0 0.0
    %1323 = vmatprep.subr.mxu0 0.0
    %1324 = vmatpush1.msra.mxu0 0.0
    %1325 = vmatprep.subr.mxu0 0.0
    %1326 = vmatpush1.msra.mxu0 0.0
    %1327 = vmatprep.subr.mxu0 0.0
    %1328 = vmatpush1.msra.mxu0 0.0
    %1329 = vmatprep.subr.mxu0 0.0
    %1330 = vmatpush1.msra.mxu0 0.0
    %1331 = vmatprep.subr.mxu0 0.0
    %1332 = vmatpush1.msra.mxu0 0.0
    %1333 = vmatprep.subr.mxu0 0.0
    %1334 = vmatpush1.msra.mxu0 0.0
    %1335 = vmatprep.subr.mxu0 0.0
    %1336 = vmatpush1.msra.mxu0 0.0
    %1337 = vmatprep.subr.mxu0 0.0
    %1338 = vmatpush1.msra.mxu0 0.0
    %1339 = vmatprep.subr.mxu0 0.0
    %1340 = vmatpush1.msra.mxu0 0.0
    %1341 = vmatprep.subr.mxu0 0.0
    %1342 = vmatpush1.msra.mxu0 0.0
    %1343 = vmatprep.subr.mxu0 0.0
    %1344 = vmatpush1.msra.mxu0 0.0
    %1345 = vmatprep.subr.mxu0 0.0
    %1346 = vmatpush1.msra.mxu0 0.0
    %1347 = vmatprep.subr.mxu0 0.0
    %1348 = vmatpush1.msra.mxu0 0.0
    %1349 = vmatprep.subr.mxu0 0.0
    %1350 = vmatpush1.msra.mxu0 0.0
    %1351 = vmatprep.subr.mxu0 0.0
    %1352 = vmatpush1.msra.mxu0 0.0
    %1353 = vmatprep.subr.mxu0 0.0
    %1354 = vmatpush1.msra.mxu0 0.0
    %1355 = vmatprep.subr.mxu0 0.0
    %1356 = vmatpush1.msra.mxu0 0.0
    %1357 = vmatprep.subr.mxu0 0.0
    %1358 = vmatpush1.msra.mxu0 0.0
    %1359 = vmatprep.subr.mxu0 0.0
    %1360 = vmatpush1.msra.mxu0 0.0
    %1361 = vmatprep.subr.mxu0 0.0
    %1362 = vmatpush1.msra.mxu0 0.0
    %1363 = vmatprep.subr.mxu0 0.0
    %1364 = vmatpush1.msra.mxu0 0.0
    %1365 = vmatprep.mubr.f32.mxu0 0.0
    %1366 = vmatmul.mubr.f32.gmra.mrb[0].mxu0 %v1299
    %v1367 = vpop.f32.mrb[0].mxu0
    %v1368 = vadd.f32 0.0, %v1367
    %v1369 = vpop.f32.mrb[0].mxu0
    %1370 = vdwg.mxu0
    %v1371 = vadd.f32 %v1133, %v1368
    %1372 = vrot.lane.b32.xlu0 %v163, 120
    %v1373 = vpop.permute.xlu0 %1372
    %1374 = vrot.lane.b32.xlu0 %v163, 88
    %v1375 = vpop.permute.xlu0 %1374
    %v1376 = vsel %vm179, %v1373, 0
    %v1378 = vsel %vm179, %v1375, 0
    %1380 = vmatprep.subr.mxu0 0.0
    %1381 = vmatpush1.xpose.msra.mxu0 %v1378
    %1382 = vmatprep.subr.mxu0 0.0
    %1383 = vmatpush1.xpose.msra.mxu0 0.0
    %1384 = vmatprep.subr.mxu0 0.0
    %1385 = vmatpush1.xpose.msra.mxu0 0.0
    %1386 = vmatprep.subr.mxu0 0.0
    %1387 = vmatpush1.xpose.msra.mxu0 0.0
    %1388 = vmatprep.subr.mxu0 0.0
    %1389 = vmatpush1.xpose.msra.mxu0 0.0
    %1390 = vmatprep.subr.mxu0 0.0
    %1391 = vmatpush1.xpose.msra.mxu0 0.0
    %1392 = vmatprep.subr.mxu0 0.0
    %1393 = vmatpush1.xpose.msra.mxu0 0.0
    %1394 = vmatprep.subr.mxu0 0.0
    %1395 = vmatpush1.xpose.msra.mxu0 0.0
    %1396 = vmatprep.subr.mxu0 0.0
    %1397 = vmatpush1.xpose.msra.mxu0 0.0
    %1398 = vmatprep.subr.mxu0 0.0
    %1399 = vmatpush1.xpose.msra.mxu0 0.0
    %1400 = vmatprep.subr.mxu0 0.0
    %1401 = vmatpush1.xpose.msra.mxu0 0.0
    %1402 = vmatprep.subr.mxu0 0.0
    %1403 = vmatpush1.xpose.msra.mxu0 0.0
    %1404 = vmatprep.subr.mxu0 0.0
    %1405 = vmatpush1.xpose.msra.mxu0 0.0
    %1406 = vmatprep.subr.mxu0 0.0
    %1407 = vmatpush1.xpose.msra.mxu0 0.0
    %1408 = vmatprep.subr.mxu0 0.0
    %1409 = vmatpush1.xpose.msra.mxu0 0.0
    %1410 = vmatprep.subr.mxu0 0.0
    %1411 = vmatpush1.xpose.msra.mxu0 0.0
    %1412 = vmatprep.subr.mxu0 0.0
    %1413 = vmatpush1.xpose.msra.mxu0 0.0
    %1414 = vmatprep.subr.mxu0 0.0
    %1415 = vmatpush1.xpose.msra.mxu0 0.0
    %1416 = vmatprep.subr.mxu0 0.0
    %1417 = vmatpush1.xpose.msra.mxu0 0.0
    %1418 = vmatprep.subr.mxu0 0.0
    %1419 = vmatpush1.xpose.msra.mxu0 0.0
    %1420 = vmatprep.subr.mxu0 0.0
    %1421 = vmatpush1.xpose.msra.mxu0 0.0
    %1422 = vmatprep.subr.mxu0 0.0
    %1423 = vmatpush1.xpose.msra.mxu0 0.0
    %1424 = vmatprep.subr.mxu0 0.0
    %1425 = vmatpush1.xpose.msra.mxu0 0.0
    %1426 = vmatprep.subr.mxu0 0.0
    %1427 = vmatpush1.xpose.msra.mxu0 0.0
    %1428 = vmatprep.subr.mxu0 0.0
    %1429 = vmatpush1.xpose.msra.mxu0 0.0
    %1430 = vmatprep.subr.mxu0 0.0
    %1431 = vmatpush1.xpose.msra.mxu0 0.0
    %1432 = vmatprep.subr.mxu0 0.0
    %1433 = vmatpush1.xpose.msra.mxu0 0.0
    %1434 = vmatprep.subr.mxu0 0.0
    %1435 = vmatpush1.xpose.msra.mxu0 0.0
    %1436 = vmatprep.subr.mxu0 0.0
    %1437 = vmatpush1.xpose.msra.mxu0 0.0
    %1438 = vmatprep.subr.mxu0 0.0
    %1439 = vmatpush1.xpose.msra.mxu0 0.0
    %1440 = vmatprep.subr.mxu0 0.0
    %1441 = vmatpush1.xpose.msra.mxu0 0.0
    %1442 = vmatprep.subr.mxu0 0.0
    %1443 = vmatpush1.xpose.msra.mxu0 0.0
    %1444 = vmatprep.mubr.f32.mxu0 0.0
    %1445 = vmatmul.mubr.f32.gmra.mrb[0].mxu0 %v1376
    %v1446 = vpop.f32.mrb[0].mxu0
    %v1447 = vadd.f32 0.0, %v1446
    %v1448 = vpop.f32.mrb[0].mxu0
    %1449 = vdwg.mxu0
    %v1450 = vsel %vm179, %v1447, -inf
    %1451 = vmax.xlane.f32.xlu0 %v1450
    %v1452 = vpop.xlane.xlu0 %1451
    %v1453 = vsub.f32 %v1447, %v1452
    %v1454 = vmul.f32 %v1453, 1.442695
    %v1455 = vpow.pop %v1454
    %v1456 = vsel %vm179, %v1455, 0.0
    %1457 = vadd.xlane.f32.xlu0 %v1456
    %v1458 = vpop.xlane.xlu0 %1457
    %v1459 = vrcp.pop %v1458
    %v1460 = vmul.f32 %v1455, %v1459
    %1461 = vrot.lane.b32.xlu0 %v163, 56
    %v1462 = vpop.permute.xlu0 %1461
    %v1465 = vsel %vm179, %v1460, 0
    %1467 = vmatprep.subr.mxu0 0.0
    %1468 = vmatpush1.msra.mxu0 %v1462
    %1469 = vmatprep.subr.mxu0 0.0
    %1470 = vmatpush1.msra.mxu0 0.0
    %1471 = vmatprep.subr.mxu0 0.0
    %1472 = vmatpush1.msra.mxu0 0.0
    %1473 = vmatprep.subr.mxu0 0.0
    %1474 = vmatpush1.msra.mxu0 0.0
    %1475 = vmatprep.subr.mxu0 0.0
    %1476 = vmatpush1.msra.mxu0 0.0
    %1477 = vmatprep.subr.mxu0 0.0
    %1478 = vmatpush1.msra.mxu0 0.0
    %1479 = vmatprep.subr.mxu0 0.0
    %1480 = vmatpush1.msra.mxu0 0.0
    %1481 = vmatprep.subr.mxu0 0.0
    %1482 = vmatpush1.msra.mxu0 0.0
    %1483 = vmatprep.subr.mxu0 0.0
    %1484 = vmatpush1.msra.mxu0 0.0
    %1485 = vmatprep.subr.mxu0 0.0
    %1486 = vmatpush1.msra.mxu0 0.0
    %1487 = vmatprep.subr.mxu0 0.0
    %1488 = vmatpush1.msra.mxu0 0.0
    %1489 = vmatprep.subr.mxu0 0.0
    %1490 = vmatpush1.msra.mxu0 0.0
    %1491 = vmatprep.subr.mxu0 0.0
    %1492 = vmatpush1.msra.mxu0 0.0
    %1493 = vmatprep.subr.mxu0 0.0
    %1494 = vmatpush1.msra.mxu0 0.0
    %1495 = vmatprep.subr.mxu0 0.0
    %1496 = vmatpush1.msra.mxu0 0.0
    %1497 = vmatprep.subr.mxu0 0.0
    %1498 = vmatpush1.msra.mxu0 0.0
    %1499 = vmatprep.subr.mxu0 0.0
    %1500 = vmatpush1.msra.mxu0 0.0
    %1501 = vmatprep.subr.mxu0 0.0
    %1502 = vmatpush1.msra.mxu0 0.0
    %1503 = vmatprep.subr.mxu0 0.0
    %1504 = vmatpush1.msra.mxu0 0.0
    %1505 = vmatprep.subr.mxu0 0.0
    %1506 = vmatpush1.msra.mxu0 0.0
    %1507 = vmatprep.subr.mxu0 0.0
    %1508 = vmatpush1.msra.mxu0 0.0
    %1509 = vmatprep.subr.mxu0 0.0
    %1510 = vmatpush1.msra.mxu0 0.0
    %1511 = vmatprep.subr.mxu0 0.0
    %1512 = vmatpush1.msra.mxu0 0.0
    %1513 = vmatprep.subr.mxu0 0.0
    %1514 = vmatpush1.msra.mxu0 0.0
    %1515 = vmatprep.subr.mxu0 0.0
    %1516 = vmatpush1.msra.mxu0 0.0
    %1517 = vmatprep.subr.mxu0 0.0
    %1518 = vmatpush1.msra.mxu0 0.0
    %1519 = vmatprep.subr.mxu0 0.0
    %1520 = vmatpush1.msra.mxu0 0.0
    %1521 = vmatprep.subr.mxu0 0.0
    %1522 = vmatpush1.msra.mxu0 0.0
    %1523 = vmatprep.subr.mxu0 0.0
    %1524 = vmatpush1.msra.mxu0 0.0
    %1525 = vmatprep.subr.mxu0 0.0
    %1526 = vmatpush1.msra.mxu0 0.0
    %1527 = vmatprep.subr.mxu0 0.0
    %1528 = vmatpush1.msra.mxu0 0.0
    %1529 = vmatprep.subr.mxu0 0.0
    %1530 = vmatpush1.msra.mxu0 0.0
    %1531 = vmatprep.mubr.f32.mxu0 0.0
    %1532 = vmatmul.mubr.f32.gmra.mrb[0].mxu0 %v1465
    %v1533 = vpop.f32.mrb[0].mxu0
    %v1534 = vadd.f32 0.0, %v1533
    %v1535 = vpop.f32.mrb[0].mxu0
    %1536 = vdwg.mxu0
    %v1538 = vsel %vm179, %v1534, 0
    %1540 = vmatprep.subr.mxu0 0.0
    %1541 = vmatpush1.msra.mxu0 %v167
    %1542 = vmatprep.subr.mxu0 0.0
    %1543 = vmatpush1.msra.mxu0 0.0
    %1544 = vmatprep.subr.mxu0 0.0
    %1545 = vmatpush1.msra.mxu0 0.0
    %1546 = vmatprep.subr.mxu0 0.0
    %1547 = vmatpush1.msra.mxu0 0.0
    %1548 = vmatprep.subr.mxu0 0.0
    %1549 = vmatpush1.msra.mxu0 0.0
    %1550 = vmatprep.subr.mxu0 0.0
    %1551 = vmatpush1.msra.mxu0 0.0
    %1552 = vmatprep.subr.mxu0 0.0
    %1553 = vmatpush1.msra.mxu0 0.0
    %1554 = vmatprep.subr.mxu0 0.0
    %1555 = vmatpush1.msra.mxu0 0.0
    %1556 = vmatprep.subr.mxu0 0.0
    %1557 = vmatpush1.msra.mxu0 0.0
    %1558 = vmatprep.subr.mxu0 0.0
    %1559 = vmatpush1.msra.mxu0 0.0
    %1560 = vmatprep.subr.mxu0 0.0
    %1561 = vmatpush1.msra.mxu0 0.0
    %1562 = vmatprep.subr.mxu0 0.0
    %1563 = vmatpush1.msra.mxu0 0.0
    %1564 = vmatprep.subr.mxu0 0.0
    %1565 = vmatpush1.msra.mxu0 0.0
    %1566 = vmatprep.subr.mxu0 0.0
    %1567 = vmatpush1.msra.mxu0 0.0
    %1568 = vmatprep.subr.mxu0 0.0
    %1569 = vmatpush1.msra.mxu0 0.0
    %1570 = vmatprep.subr.mxu0 0.0
    %1571 = vmatpush1.msra.mxu0 0.0
    %1572 = vmatprep.subr.mxu0 0.0
    %1573 = vmatpush1.msra.mxu0 0.0
    %1574 = vmatprep.subr.mxu0 0.0
    %1575 = vmatpush1.msra.mxu0 0.0
    %1576 = vmatprep.subr.mxu0 0.0
    %1577 = vmatpush1.msra.mxu0 0.0
    %1578 = vmatprep.subr.mxu0 0.0
    %1579 = vmatpush1.msra.mxu0 0.0
    %1580 = vmatprep.subr.mxu0 0.0
    %1581 = vmatpush1.msra.mxu0 0.0
    %1582 = vmatprep.subr.mxu0 0.0
    %1583 = vmatpush1.msra.mxu0 0.0
    %1584 = vmatprep.subr.mxu0 0.0
    %1585 = vmatpush1.msra.mxu0 0.0
    %1586 = vmatprep.subr.mxu0 0.0
    %1587 = vmatpush1.msra.mxu0 0.0
    %1588 = vmatprep.subr.mxu0 0.0
    %1589 = vmatpush1.msra.mxu0 0.0
    %1590 = vmatprep.subr.mxu0 0.0
    %1591 = vmatpush1.msra.mxu0 0.0
    %1592 = vmatprep.subr.mxu0 0.0
    %1593 = vmatpush1.msra.mxu0 0.0
    %1594 = vmatprep.subr.mxu0 0.0
    %1595 = vmatpush1.msra.mxu0 0.0
    %1596 = vmatprep.subr.mxu0 0.0
    %1597 = vmatpush1.msra.mxu0 0.0
    %1598 = vmatprep.subr.mxu0 0.0
    %1599 = vmatpush1.msra.mxu0 0.0
    %1600 = vmatprep.subr.mxu0 0.0
    %1601 = vmatpush1.msra.mxu0 0.0
    %1602 = vmatprep.subr.mxu0 0.0
    %1603 = vmatpush1.msra.mxu0 0.0
    %1604 = vmatprep.mubr.f32.mxu0 0.0
    %1605 = vmatmul.mubr.f32.gmra.mrb[0].mxu0 %v1538
    %v1606 = vpop.f32.mrb[0].mxu0
    %v1607 = vadd.f32 0.0, %v1606
    %v1608 = vpop.f32.mrb[0].mxu0
    %1609 = vdwg.mxu0
    %v1610 = vadd.f32 %v1371, %v1607
    %1611 = vrot.lane.b32.xlu0 %v163, 112
    %v1612 = vpop.permute.xlu0 %1611
    %1613 = vrot.lane.b32.xlu0 %v163, 80
    %v1614 = vpop.permute.xlu0 %1613
    %v1615 = vsel %vm179, %v1612, 0
    %v1617 = vsel %vm179, %v1614, 0
    %1619 = vmatprep.subr.mxu0 0.0
    %1620 = vmatpush1.xpose.msra.mxu0 %v1617
    %1621 = vmatprep.subr.mxu0 0.0
    %1622 = vmatpush1.xpose.msra.mxu0 0.0
    %1623 = vmatprep.subr.mxu0 0.0
    %1624 = vmatpush1.xpose.msra.mxu0 0.0
    %1625 = vmatprep.subr.mxu0 0.0
    %1626 = vmatpush1.xpose.msra.mxu0 0.0
    %1627 = vmatprep.subr.mxu0 0.0
    %1628 = vmatpush1.xpose.msra.mxu0 0.0
    %1629 = vmatprep.subr.mxu0 0.0
    %1630 = vmatpush1.xpose.msra.mxu0 0.0
    %1631 = vmatprep.subr.mxu0 0.0
    %1632 = vmatpush1.xpose.msra.mxu0 0.0
    %1633 = vmatprep.subr.mxu0 0.0
    %1634 = vmatpush1.xpose.msra.mxu0 0.0
    %1635 = vmatprep.subr.mxu0 0.0
    %1636 = vmatpush1.xpose.msra.mxu0 0.0
    %1637 = vmatprep.subr.mxu0 0.0
    %1638 = vmatpush1.xpose.msra.mxu0 0.0
    %1639 = vmatprep.subr.mxu0 0.0
    %1640 = vmatpush1.xpose.msra.mxu0 0.0
    %1641 = vmatprep.subr.mxu0 0.0
    %1642 = vmatpush1.xpose.msra.mxu0 0.0
    %1643 = vmatprep.subr.mxu0 0.0
    %1644 = vmatpush1.xpose.msra.mxu0 0.0
    %1645 = vmatprep.subr.mxu0 0.0
    %1646 = vmatpush1.xpose.msra.mxu0 0.0
    %1647 = vmatprep.subr.mxu0 0.0
    %1648 = vmatpush1.xpose.msra.mxu0 0.0
    %1649 = vmatprep.subr.mxu0 0.0
    %1650 = vmatpush1.xpose.msra.mxu0 0.0
    %1651 = vmatprep.subr.mxu0 0.0
    %1652 = vmatpush1.xpose.msra.mxu0 0.0
    %1653 = vmatprep.subr.mxu0 0.0
    %1654 = vmatpush1.xpose.msra.mxu0 0.0
    %1655 = vmatprep.subr.mxu0 0.0
    %1656 = vmatpush1.xpose.msra.mxu0 0.0
    %1657 = vmatprep.subr.mxu0 0.0
    %1658 = vmatpush1.xpose.msra.mxu0 0.0
    %1659 = vmatprep.subr.mxu0 0.0
    %1660 = vmatpush1.xpose.msra.mxu0 0.0
    %1661 = vmatprep.subr.mxu0 0.0
    %1662 = vmatpush1.xpose.msra.mxu0 0.0
    %1663 = vmatprep.subr.mxu0 0.0
    %1664 = vmatpush1.xpose.msra.mxu0 0.0
    %1665 = vmatprep.subr.mxu0 0.0
    %1666 = vmatpush1.xpose.msra.mxu0 0.0
    %1667 = vmatprep.subr.mxu0 0.0
    %1668 = vmatpush1.xpose.msra.mxu0 0.0
    %1669 = vmatprep.subr.mxu0 0.0
    %1670 = vmatpush1.xpose.msra.mxu0 0.0
    %1671 = vmatprep.subr.mxu0 0.0
    %1672 = vmatpush1.xpose.msra.mxu0 0.0
    %1673 = vmatprep.subr.mxu0 0.0
    %1674 = vmatpush1.xpose.msra.mxu0 0.0
    %1675 = vmatprep.subr.mxu0 0.0
    %1676 = vmatpush1.xpose.msra.mxu0 0.0
    %1677 = vmatprep.subr.mxu0 0.0
    %1678 = vmatpush1.xpose.msra.mxu0 0.0
    %1679 = vmatprep.subr.mxu0 0.0
    %1680 = vmatpush1.xpose.msra.mxu0 0.0
    %1681 = vmatprep.subr.mxu0 0.0
    %1682 = vmatpush1.xpose.msra.mxu0 0.0
    %1683 = vmatprep.mubr.f32.mxu0 0.0
    %1684 = vmatmul.mubr.f32.gmra.mrb[0].mxu0 %v1615
    %v1685 = vpop.f32.mrb[0].mxu0
    %v1686 = vadd.f32 0.0, %v1685
    %v1687 = vpop.f32.mrb[0].mxu0
    %1688 = vdwg.mxu0
    %v1689 = vsel %vm179, %v1686, -inf
    %1690 = vmax.xlane.f32.xlu0 %v1689
    %v1691 = vpop.xlane.xlu0 %1690
    %v1692 = vsub.f32 %v1686, %v1691
    %v1693 = vmul.f32 %v1692, 1.442695
    %v1694 = vpow.pop %v1693
    %v1695 = vsel %vm179, %v1694, 0.0
    %1696 = vadd.xlane.f32.xlu0 %v1695
    %v1697 = vpop.xlane.xlu0 %1696
    %v1698 = vrcp.pop %v1697
    %v1699 = vmul.f32 %v1694, %v1698
    %1700 = vrot.lane.b32.xlu0 %v163, 48
    %v1701 = vpop.permute.xlu0 %1700
    %v1704 = vsel %vm179, %v1699, 0
    %1706 = vmatprep.subr.mxu0 0.0
    %1707 = vmatpush1.msra.mxu0 %v1701
    %1708 = vmatprep.subr.mxu0 0.0
    %1709 = vmatpush1.msra.mxu0 0.0
    %1710 = vmatprep.subr.mxu0 0.0
    %1711 = vmatpush1.msra.mxu0 0.0
    %1712 = vmatprep.subr.mxu0 0.0
    %1713 = vmatpush1.msra.mxu0 0.0
    %1714 = vmatprep.subr.mxu0 0.0
    %1715 = vmatpush1.msra.mxu0 0.0
    %1716 = vmatprep.subr.mxu0 0.0
    %1717 = vmatpush1.msra.mxu0 0.0
    %1718 = vmatprep.subr.mxu0 0.0
    %1719 = vmatpush1.msra.mxu0 0.0
    %1720 = vmatprep.subr.mxu0 0.0
    %1721 = vmatpush1.msra.mxu0 0.0
    %1722 = vmatprep.subr.mxu0 0.0
    %1723 = vmatpush1.msra.mxu0 0.0
    %1724 = vmatprep.subr.mxu0 0.0
    %1725 = vmatpush1.msra.mxu0 0.0
    %1726 = vmatprep.subr.mxu0 0.0
    %1727 = vmatpush1.msra.mxu0 0.0
    %1728 = vmatprep.subr.mxu0 0.0
    %1729 = vmatpush1.msra.mxu0 0.0
    %1730 = vmatprep.subr.mxu0 0.0
    %1731 = vmatpush1.msra.mxu0 0.0
    %1732 = vmatprep.subr.mxu0 0.0
    %1733 = vmatpush1.msra.mxu0 0.0
    %1734 = vmatprep.subr.mxu0 0.0
    %1735 = vmatpush1.msra.mxu0 0.0
    %1736 = vmatprep.subr.mxu0 0.0
    %1737 = vmatpush1.msra.mxu0 0.0
    %1738 = vmatprep.subr.mxu0 0.0
    %1739 = vmatpush1.msra.mxu0 0.0
    %1740 = vmatprep.subr.mxu0 0.0
    %1741 = vmatpush1.msra.mxu0 0.0
    %1742 = vmatprep.subr.mxu0 0.0
    %1743 = vmatpush1.msra.mxu0 0.0
    %1744 = vmatprep.subr.mxu0 0.0
    %1745 = vmatpush1.msra.mxu0 0.0
    %1746 = vmatprep.subr.mxu0 0.0
    %1747 = vmatpush1.msra.mxu0 0.0
    %1748 = vmatprep.subr.mxu0 0.0
    %1749 = vmatpush1.msra.mxu0 0.0
    %1750 = vmatprep.subr.mxu0 0.0
    %1751 = vmatpush1.msra.mxu0 0.0
    %1752 = vmatprep.subr.mxu0 0.0
    %1753 = vmatpush1.msra.mxu0 0.0
    %1754 = vmatprep.subr.mxu0 0.0
    %1755 = vmatpush1.msra.mxu0 0.0
    %1756 = vmatprep.subr.mxu0 0.0
    %1757 = vmatpush1.msra.mxu0 0.0
    %1758 = vmatprep.subr.mxu0 0.0
    %1759 = vmatpush1.msra.mxu0 0.0
    %1760 = vmatprep.subr.mxu0 0.0
    %1761 = vmatpush1.msra.mxu0 0.0
    %1762 = vmatprep.subr.mxu0 0.0
    %1763 = vmatpush1.msra.mxu0 0.0
    %1764 = vmatprep.subr.mxu0 0.0
    %1765 = vmatpush1.msra.mxu0 0.0
    %1766 = vmatprep.subr.mxu0 0.0
    %1767 = vmatpush1.msra.mxu0 0.0
    %1768 = vmatprep.subr.mxu0 0.0
    %1769 = vmatpush1.msra.mxu0 0.0
    %1770 = vmatprep.mubr.f32.mxu0 0.0
    %1771 = vmatmul.mubr.f32.gmra.mrb[0].mxu0 %v1704
    %v1772 = vpop.f32.mrb[0].mxu0
    %v1773 = vadd.f32 0.0, %v1772
    %v1774 = vpop.f32.mrb[0].mxu0
    %1775 = vdwg.mxu0
    %v1777 = vsel %vm179, %v1773, 0
    %1779 = vmatprep.subr.mxu0 0.0
    %1780 = vmatpush1.msra.mxu0 %v168
    %1781 = vmatprep.subr.mxu0 0.0
    %1782 = vmatpush1.msra.mxu0 0.0
    %1783 = vmatprep.subr.mxu0 0.0
    %1784 = vmatpush1.msra.mxu0 0.0
    %1785 = vmatprep.subr.mxu0 0.0
    %1786 = vmatpush1.msra.mxu0 0.0
    %1787 = vmatprep.subr.mxu0 0.0
    %1788 = vmatpush1.msra.mxu0 0.0
    %1789 = vmatprep.subr.mxu0 0.0
    %1790 = vmatpush1.msra.mxu0 0.0
    %1791 = vmatprep.subr.mxu0 0.0
    %1792 = vmatpush1.msra.mxu0 0.0
    %1793 = vmatprep.subr.mxu0 0.0
    %1794 = vmatpush1.msra.mxu0 0.0
    %1795 = vmatprep.subr.mxu0 0.0
    %1796 = vmatpush1.msra.mxu0 0.0
    %1797 = vmatprep.subr.mxu0 0.0
    %1798 = vmatpush1.msra.mxu0 0.0
    %1799 = vmatprep.subr.mxu0 0.0
    %1800 = vmatpush1.msra.mxu0 0.0
    %1801 = vmatprep.subr.mxu0 0.0
    %1802 = vmatpush1.msra.mxu0 0.0
    %1803 = vmatprep.subr.mxu0 0.0
    %1804 = vmatpush1.msra.mxu0 0.0
    %1805 = vmatprep.subr.mxu0 0.0
    %1806 = vmatpush1.msra.mxu0 0.0
    %1807 = vmatprep.subr.mxu0 0.0
    %1808 = vmatpush1.msra.mxu0 0.0
    %1809 = vmatprep.subr.mxu0 0.0
    %1810 = vmatpush1.msra.mxu0 0.0
    %1811 = vmatprep.subr.mxu0 0.0
    %1812 = vmatpush1.msra.mxu0 0.0
    %1813 = vmatprep.subr.mxu0 0.0
    %1814 = vmatpush1.msra.mxu0 0.0
    %1815 = vmatprep.subr.mxu0 0.0
    %1816 = vmatpush1.msra.mxu0 0.0
    %1817 = vmatprep.subr.mxu0 0.0
    %1818 = vmatpush1.msra.mxu0 0.0
    %1819 = vmatprep.subr.mxu0 0.0
    %1820 = vmatpush1.msra.mxu0 0.0
    %1821 = vmatprep.subr.mxu0 0.0
    %1822 = vmatpush1.msra.mxu0 0.0
    %1823 = vmatprep.subr.mxu0 0.0
    %1824 = vmatpush1.msra.mxu0 0.0
    %1825 = vmatprep.subr.mxu0 0.0
    %1826 = vmatpush1.msra.mxu0 0.0
    %1827 = vmatprep.subr.mxu0 0.0
    %1828 = vmatpush1.msra.mxu0 0.0
    %1829 = vmatprep.subr.mxu0 0.0
    %1830 = vmatpush1.msra.mxu0 0.0
    %1831 = vmatprep.subr.mxu0 0.0
    %1832 = vmatpush1.msra.mxu0 0.0
    %1833 = vmatprep.subr.mxu0 0.0
    %1834 = vmatpush1.msra.mxu0 0.0
    %1835 = vmatprep.subr.mxu0 0.0
    %1836 = vmatpush1.msra.mxu0 0.0
    %1837 = vmatprep.subr.mxu0 0.0
    %1838 = vmatpush1.msra.mxu0 0.0
    %1839 = vmatprep.subr.mxu0 0.0
    %1840 = vmatpush1.msra.mxu0 0.0
    %1841 = vmatprep.subr.mxu0 0.0
    %1842 = vmatpush1.msra.mxu0 0.0
    %1843 = vmatprep.mubr.f32.mxu0 0.0
    %1844 = vmatmul.mubr.f32.gmra.mrb[0].mxu0 %v1777
    %v1845 = vpop.f32.mrb[0].mxu0
    %v1846 = vadd.f32 0.0, %v1845
    %v1847 = vpop.f32.mrb[0].mxu0
    %1848 = vdwg.mxu0
    %v1849 = vadd.f32 %v1610, %v1846
    %1850 = vrot.lane.b32.xlu0 %v163, 104
    %v1851 = vpop.permute.xlu0 %1850
    %1852 = vrot.lane.b32.xlu0 %v163, 72
    %v1853 = vpop.permute.xlu0 %1852
    %v1854 = vsel %vm179, %v1851, 0
    %v1856 = vsel %vm179, %v1853, 0
    %1858 = vmatprep.subr.mxu0 0.0
    %1859 = vmatpush1.xpose.msra.mxu0 %v1856
    %1860 = vmatprep.subr.mxu0 0.0
    %1861 = vmatpush1.xpose.msra.mxu0 0.0
    %1862 = vmatprep.subr.mxu0 0.0
    %1863 = vmatpush1.xpose.msra.mxu0 0.0
    %1864 = vmatprep.subr.mxu0 0.0
    %1865 = vmatpush1.xpose.msra.mxu0 0.0
    %1866 = vmatprep.subr.mxu0 0.0
    %1867 = vmatpush1.xpose.msra.mxu0 0.0
    %1868 = vmatprep.subr.mxu0 0.0
    %1869 = vmatpush1.xpose.msra.mxu0 0.0
    %1870 = vmatprep.subr.mxu0 0.0
    %1871 = vmatpush1.xpose.msra.mxu0 0.0
    %1872 = vmatprep.subr.mxu0 0.0
    %1873 = vmatpush1.xpose.msra.mxu0 0.0
    %1874 = vmatprep.subr.mxu0 0.0
    %1875 = vmatpush1.xpose.msra.mxu0 0.0
    %1876 = vmatprep.subr.mxu0 0.0
    %1877 = vmatpush1.xpose.msra.mxu0 0.0
    %1878 = vmatprep.subr.mxu0 0.0
    %1879 = vmatpush1.xpose.msra.mxu0 0.0
    %1880 = vmatprep.subr.mxu0 0.0
    %1881 = vmatpush1.xpose.msra.mxu0 0.0
    %1882 = vmatprep.subr.mxu0 0.0
    %1883 = vmatpush1.xpose.msra.mxu0 0.0
    %1884 = vmatprep.subr.mxu0 0.0
    %1885 = vmatpush1.xpose.msra.mxu0 0.0
    %1886 = vmatprep.subr.mxu0 0.0
    %1887 = vmatpush1.xpose.msra.mxu0 0.0
    %1888 = vmatprep.subr.mxu0 0.0
    %1889 = vmatpush1.xpose.msra.mxu0 0.0
    %1890 = vmatprep.subr.mxu0 0.0
    %1891 = vmatpush1.xpose.msra.mxu0 0.0
    %1892 = vmatprep.subr.mxu0 0.0
    %1893 = vmatpush1.xpose.msra.mxu0 0.0
    %1894 = vmatprep.subr.mxu0 0.0
    %1895 = vmatpush1.xpose.msra.mxu0 0.0
    %1896 = vmatprep.subr.mxu0 0.0
    %1897 = vmatpush1.xpose.msra.mxu0 0.0
    %1898 = vmatprep.subr.mxu0 0.0
    %1899 = vmatpush1.xpose.msra.mxu0 0.0
    %1900 = vmatprep.subr.mxu0 0.0
    %1901 = vmatpush1.xpose.msra.mxu0 0.0
    %1902 = vmatprep.subr.mxu0 0.0
    %1903 = vmatpush1.xpose.msra.mxu0 0.0
    %1904 = vmatprep.subr.mxu0 0.0
    %1905 = vmatpush1.xpose.msra.mxu0 0.0
    %1906 = vmatprep.subr.mxu0 0.0
    %1907 = vmatpush1.xpose.msra.mxu0 0.0
    %1908 = vmatprep.subr.mxu0 0.0
    %1909 = vmatpush1.xpose.msra.mxu0 0.0
    %1910 = vmatprep.subr.mxu0 0.0
    %1911 = vmatpush1.xpose.msra.mxu0 0.0
    %1912 = vmatprep.subr.mxu0 0.0
    %1913 = vmatpush1.xpose.msra.mxu0 0.0
    %1914 = vmatprep.subr.mxu0 0.0
    %1915 = vmatpush1.xpose.msra.mxu0 0.0
    %1916 = vmatprep.subr.mxu0 0.0
    %1917 = vmatpush1.xpose.msra.mxu0 0.0
    %1918 = vmatprep.subr.mxu0 0.0
    %1919 = vmatpush1.xpose.msra.mxu0 0.0
    %1920 = vmatprep.subr.mxu0 0.0
    %1921 = vmatpush1.xpose.msra.mxu0 0.0
    %1922 = vmatprep.mubr.f32.mxu0 0.0
    %1923 = vmatmul.mubr.f32.gmra.mrb[0].mxu0 %v1854
    %v1924 = vpop.f32.mrb[0].mxu0
    %v1925 = vadd.f32 0.0, %v1924
    %v1926 = vpop.f32.mrb[0].mxu0
    %1927 = vdwg.mxu0
    %v1928 = vsel %vm179, %v1925, -inf
    %1929 = vmax.xlane.f32.xlu0 %v1928
    %v1930 = vpop.xlane.xlu0 %1929
    %v1931 = vsub.f32 %v1925, %v1930
    %v1932 = vmul.f32 %v1931, 1.442695
    %v1933 = vpow.pop %v1932
    %v1934 = vsel %vm179, %v1933, 0.0
    %1935 = vadd.xlane.f32.xlu0 %v1934
    %v1936 = vpop.xlane.xlu0 %1935
    %v1937 = vrcp.pop %v1936
    %v1938 = vmul.f32 %v1933, %v1937
    %1939 = vrot.lane.b32.xlu0 %v163, 40
    %v1940 = vpop.permute.xlu0 %1939
    %v1943 = vsel %vm179, %v1938, 0
    %1945 = vmatprep.subr.mxu0 0.0
    %1946 = vmatpush1.msra.mxu0 %v1940
    %1947 = vmatprep.subr.mxu0 0.0
    %1948 = vmatpush1.msra.mxu0 0.0
    %1949 = vmatprep.subr.mxu0 0.0
    %1950 = vmatpush1.msra.mxu0 0.0
    %1951 = vmatprep.subr.mxu0 0.0
    %1952 = vmatpush1.msra.mxu0 0.0
    %1953 = vmatprep.subr.mxu0 0.0
    %1954 = vmatpush1.msra.mxu0 0.0
    %1955 = vmatprep.subr.mxu0 0.0
    %1956 = vmatpush1.msra.mxu0 0.0
    %1957 = vmatprep.subr.mxu0 0.0
    %1958 = vmatpush1.msra.mxu0 0.0
    %1959 = vmatprep.subr.mxu0 0.0
    %1960 = vmatpush1.msra.mxu0 0.0
    %1961 = vmatprep.subr.mxu0 0.0
    %1962 = vmatpush1.msra.mxu0 0.0
    %1963 = vmatprep.subr.mxu0 0.0
    %1964 = vmatpush1.msra.mxu0 0.0
    %1965 = vmatprep.subr.mxu0 0.0
    %1966 = vmatpush1.msra.mxu0 0.0
    %1967 = vmatprep.subr.mxu0 0.0
    %1968 = vmatpush1.msra.mxu0 0.0
    %1969 = vmatprep.subr.mxu0 0.0
    %1970 = vmatpush1.msra.mxu0 0.0
    %1971 = vmatprep.subr.mxu0 0.0
    %1972 = vmatpush1.msra.mxu0 0.0
    %1973 = vmatprep.subr.mxu0 0.0
    %1974 = vmatpush1.msra.mxu0 0.0
    %1975 = vmatprep.subr.mxu0 0.0
    %1976 = vmatpush1.msra.mxu0 0.0
    %1977 = vmatprep.subr.mxu0 0.0
    %1978 = vmatpush1.msra.mxu0 0.0
    %1979 = vmatprep.subr.mxu0 0.0
    %1980 = vmatpush1.msra.mxu0 0.0
    %1981 = vmatprep.subr.mxu0 0.0
    %1982 = vmatpush1.msra.mxu0 0.0
    %1983 = vmatprep.subr.mxu0 0.0
    %1984 = vmatpush1.msra.mxu0 0.0
    %1985 = vmatprep.subr.mxu0 0.0
    %1986 = vmatpush1.msra.mxu0 0.0
    %1987 = vmatprep.subr.mxu0 0.0
    %1988 = vmatpush1.msra.mxu0 0.0
    %1989 = vmatprep.subr.mxu0 0.0
    %1990 = vmatpush1.msra.mxu0 0.0
    %1991 = vmatprep.subr.mxu0 0.0
    %1992 = vmatpush1.msra.mxu0 0.0
    %1993 = vmatprep.subr.mxu0 0.0
    %1994 = vmatpush1.msra.mxu0 0.0
    %1995 = vmatprep.subr.mxu0 0.0
    %1996 = vmatpush1.msra.mxu0 0.0
    %1997 = vmatprep.subr.mxu0 0.0
    %1998 = vmatpush1.msra.mxu0 0.0
    %1999 = vmatprep.subr.mxu0 0.0
    %2000 = vmatpush1.msra.mxu0 0.0
    %2001 = vmatprep.subr.mxu0 0.0
    %2002 = vmatpush1.msra.mxu0 0.0
    %2003 = vmatprep.subr.mxu0 0.0
    %2004 = vmatpush1.msra.mxu0 0.0
    %2005 = vmatprep.subr.mxu0 0.0
    %2006 = vmatpush1.msra.mxu0 0.0
    %2007 = vmatprep.subr.mxu0 0.0
    %2008 = vmatpush1.msra.mxu0 0.0
    %2009 = vmatprep.mubr.f32.mxu0 0.0
    %2010 = vmatmul.mubr.f32.gmra.mrb[0].mxu0 %v1943
    %v2011 = vpop.f32.mrb[0].mxu0
    %v2012 = vadd.f32 0.0, %v2011
    %v2013 = vpop.f32.mrb[0].mxu0
    %2014 = vdwg.mxu0
    %v2016 = vsel %vm179, %v2012, 0
    %2018 = vmatprep.subr.mxu0 0.0
    %2019 = vmatpush1.msra.mxu0 %v169
    %2020 = vmatprep.subr.mxu0 0.0
    %2021 = vmatpush1.msra.mxu0 0.0
    %2022 = vmatprep.subr.mxu0 0.0
    %2023 = vmatpush1.msra.mxu0 0.0
    %2024 = vmatprep.subr.mxu0 0.0
    %2025 = vmatpush1.msra.mxu0 0.0
    %2026 = vmatprep.subr.mxu0 0.0
    %2027 = vmatpush1.msra.mxu0 0.0
    %2028 = vmatprep.subr.mxu0 0.0
    %2029 = vmatpush1.msra.mxu0 0.0
    %2030 = vmatprep.subr.mxu0 0.0
    %2031 = vmatpush1.msra.mxu0 0.0
    %2032 = vmatprep.subr.mxu0 0.0
    %2033 = vmatpush1.msra.mxu0 0.0
    %2034 = vmatprep.subr.mxu0 0.0
    %2035 = vmatpush1.msra.mxu0 0.0
    %2036 = vmatprep.subr.mxu0 0.0
    %2037 = vmatpush1.msra.mxu0 0.0
    %2038 = vmatprep.subr.mxu0 0.0
    %2039 = vmatpush1.msra.mxu0 0.0
    %2040 = vmatprep.subr.mxu0 0.0
    %2041 = vmatpush1.msra.mxu0 0.0
    %2042 = vmatprep.subr.mxu0 0.0
    %2043 = vmatpush1.msra.mxu0 0.0
    %2044 = vmatprep.subr.mxu0 0.0
    %2045 = vmatpush1.msra.mxu0 0.0
    %2046 = vmatprep.subr.mxu0 0.0
    %2047 = vmatpush1.msra.mxu0 0.0
    %2048 = vmatprep.subr.mxu0 0.0
    %2049 = vmatpush1.msra.mxu0 0.0
    %2050 = vmatprep.subr.mxu0 0.0
    %2051 = vmatpush1.msra.mxu0 0.0
    %2052 = vmatprep.subr.mxu0 0.0
    %2053 = vmatpush1.msra.mxu0 0.0
    %2054 = vmatprep.subr.mxu0 0.0
    %2055 = vmatpush1.msra.mxu0 0.0
    %2056 = vmatprep.subr.mxu0 0.0
    %2057 = vmatpush1.msra.mxu0 0.0
    %2058 = vmatprep.subr.mxu0 0.0
    %2059 = vmatpush1.msra.mxu0 0.0
    %2060 = vmatprep.subr.mxu0 0.0
    %2061 = vmatpush1.msra.mxu0 0.0
    %2062 = vmatprep.subr.mxu0 0.0
    %2063 = vmatpush1.msra.mxu0 0.0
    %2064 = vmatprep.subr.mxu0 0.0
    %2065 = vmatpush1.msra.mxu0 0.0
    %2066 = vmatprep.subr.mxu0 0.0
    %2067 = vmatpush1.msra.mxu0 0.0
    %2068 = vmatprep.subr.mxu0 0.0
    %2069 = vmatpush1.msra.mxu0 0.0
    %2070 = vmatprep.subr.mxu0 0.0
    %2071 = vmatpush1.msra.mxu0 0.0
    %2072 = vmatprep.subr.mxu0 0.0
    %2073 = vmatpush1.msra.mxu0 0.0
    %2074 = vmatprep.subr.mxu0 0.0
    %2075 = vmatpush1.msra.mxu0 0.0
    %2076 = vmatprep.subr.mxu0 0.0
    %2077 = vmatpush1.msra.mxu0 0.0
    %2078 = vmatprep.subr.mxu0 0.0
    %2079 = vmatpush1.msra.mxu0 0.0
    %2080 = vmatprep.subr.mxu0 0.0
    %2081 = vmatpush1.msra.mxu0 0.0
    %2082 = vmatprep.mubr.f32.mxu0 0.0
    %2083 = vmatmul.mubr.f32.gmra.mrb[0].mxu0 %v2016
    %v2084 = vpop.f32.mrb[0].mxu0
    %v2085 = vadd.f32 0.0, %v2084
    %v2086 = vpop.f32.mrb[0].mxu0
    %2087 = vdwg.mxu0
    %v2088 = vadd.f32 %v1849, %v2085
    %2089 = vst.msk [vmem:[#allocation2 + $0x8] sm:$0xff] %vm84, %v2088
    %v2090 = vld [vmem:[#allocation2] sm:$0xff]
    %v2091 = vld [vmem:[#allocation2 + $0x8] sm:$0xff]
    %v2092 = vld [vmem:[#allocation9 + $0x7] sm:$0x1]
    %v2093 = vld [vmem:[#allocation9 + $0x8] sm:$0x1]
    %v2094 = vsel %vm84, %v2090, 0.0
    %2095 = vadd.xlane.f32.xlu0 %v2094
    %v2096 = vpop.xlane.xlu0 %2095
    %v2097 = vsel %vm84, %v2091, 0.0
    %2098 = vadd.xlane.f32.xlu0 %v2097
    %v2099 = vpop.xlane.xlu0 %2098
    %v2100 = vrcp.pop 32.0
    %v2101 = vmul.f32 %v2096, %v2100
    %v2102 = vmul.f32 %v2099, %v2100
    %v2103 = vmul.f32 %v2090, %v2090
    %v2104 = vmul.f32 %v2091, %v2091
    %v2105 = vsel %vm84, %v2103, 0.0
    %2106 = vadd.xlane.f32.xlu0 %v2105
    %v2107 = vpop.xlane.xlu0 %2106
    %v2108 = vsel %vm84, %v2104, 0.0
    %2109 = vadd.xlane.f32.xlu0 %v2108
    %v2110 = vpop.xlane.xlu0 %2109
    %v2111 = vmul.f32 %v2107, %v2100
    %v2112 = vmul.f32 %v2110, %v2100
    %v2113 = vmul.f32 %v2101, %v2101
    %v2114 = vmul.f32 %v2102, %v2102
    %v2115 = vsub.f32 %v2111, %v2113
    %v2116 = vsub.f32 %v2112, %v2114
    %v2117 = vsub.f32 %v2090, %v2101
    %v2118 = vsub.f32 %v2091, %v2102
    %v2119 = vadd.f32 %v2115, 1e-05
    %v2120 = vadd.f32 %v2116, 1e-05
    %v2121 = vrsqrt.pop %v2119
    %v2122 = vrsqrt.pop %v2120
    %v2123 = vmul.f32 %v2117, %v2121
    %v2124 = vmul.f32 %v2118, %v2122
    %v2125 = vlaneseq
    %v2126 = vshrl.u32 %v2125, 7
    %v2127 = vsub.s32 0, %v2126
    %v2128 = vrot.slane %v2092, %v2127
    %v2129 = vmul.f32 %v2123, %v2128
    %v2130 = vmul.f32 %v2124, %v2128
    %v2131 = vlaneseq
    %v2132 = vshrl.u32 %v2131, 7
    %v2133 = vsub.s32 0, %v2132
    %v2134 = vrot.slane %v2093, %v2133
    %v2135 = vadd.f32 %v2129, %v2134
    %v2136 = vadd.f32 %v2130, %v2134
    %v2137 = vld [vmem:[#allocation6] sm:$0xff]
    %v2138 = vld [vmem:[#allocation6 + $0x8] sm:$0xff]
    %v2139 = vld [vmem:[#allocation6 + $0x10] sm:$0xf]
    %v2140 = vld [vmem:[#allocation8 + $0x20] sm:$0xff]
    %v2141 = vld [vmem:[#allocation8 + $0x28] sm:$0xff]
    %v2142 = vld [vmem:[#allocation8 + $0x30] sm:$0xff]
    %v2143 = vld [vmem:[#allocation8 + $0x38] sm:$0xff]
    %v2144 = vld [vmem:[#allocation9 + $0x1] sm:$0x1]
    %v2145 = vlaneseq
    %v2146 = vshrl.u32 %v2145, 7
    %v2147 = vsub.s32 0, %v2146
    %v2148 = vrot.slane %v2144, %v2147
    %v2150 = vsel %vm84, %v2135, 0
    %v2153 = vsel %vm84, %v2136, 0
    %2155 = vmatprep.subr.mxu0 0.0
    %2156 = vmatpush1.msra.mxu0 %v2140
    %2157 = vmatprep.subr.mxu0 0.0
    %2158 = vmatpush1.msra.mxu0 %v2141
    %2159 = vmatprep.subr.mxu0 0.0
    %2160 = vmatpush1.msra.mxu0 %v2142
    %2161 = vmatprep.subr.mxu0 0.0
    %2162 = vmatpush1.msra.mxu0 %v2143
    %2163 = vmatprep.subr.mxu0 0.0
    %2164 = vmatpush1.msra.mxu0 0.0
    %2165 = vmatprep.subr.mxu0 0.0
    %2166 = vmatpush1.msra.mxu0 0.0
    %2167 = vmatprep.subr.mxu0 0.0
    %2168 = vmatpush1.msra.mxu0 0.0
    %2169 = vmatprep.subr.mxu0 0.0
    %2170 = vmatpush1.msra.mxu0 0.0
    %2171 = vmatprep.subr.mxu0 0.0
    %2172 = vmatpush1.msra.mxu0 0.0
    %2173 = vmatprep.subr.mxu0 0.0
    %2174 = vmatpush1.msra.mxu0 0.0
    %2175 = vmatprep.subr.mxu0 0.0
    %2176 = vmatpush1.msra.mxu0 0.0
    %2177 = vmatprep.subr.mxu0 0.0
    %2178 = vmatpush1.msra.mxu0 0.0
    %2179 = vmatprep.subr.mxu0 0.0
    %2180 = vmatpush1.msra.mxu0 0.0
    %2181 = vmatprep.subr.mxu0 0.0
    %2182 = vmatpush1.msra.mxu0 0.0
    %2183 = vmatprep.subr.mxu0 0.0
    %2184 = vmatpush1.msra.mxu0 0.0
    %2185 = vmatprep.subr.mxu0 0.0
    %2186 = vmatpush1.msra.mxu0 0.0
    %2187 = vmatprep.subr.mxu0 0.0
    %2188 = vmatpush1.msra.mxu0 0.0
    %2189 = vmatprep.subr.mxu0 0.0
    %2190 = vmatpush1.msra.mxu0 0.0
    %2191 = vmatprep.subr.mxu0 0.0
    %2192 = vmatpush1.msra.mxu0 0.0
    %2193 = vmatprep.subr.mxu0 0.0
    %2194 = vmatpush1.msra.mxu0 0.0
    %2195 = vmatprep.subr.mxu0 0.0
    %2196 = vmatpush1.msra.mxu0 0.0
    %2197 = vmatprep.subr.mxu0 0.0
    %2198 = vmatpush1.msra.mxu0 0.0
    %2199 = vmatprep.subr.mxu0 0.0
    %2200 = vmatpush1.msra.mxu0 0.0
    %2201 = vmatprep.subr.mxu0 0.0
    %2202 = vmatpush1.msra.mxu0 0.0
    %2203 = vmatprep.subr.mxu0 0.0
    %2204 = vmatpush1.msra.mxu0 0.0
    %2205 = vmatprep.subr.mxu0 0.0
    %2206 = vmatpush1.msra.mxu0 0.0
    %2207 = vmatprep.subr.mxu0 0.0
    %2208 = vmatpush1.msra.mxu0 0.0
    %2209 = vmatprep.subr.mxu0 0.0
    %2210 = vmatpush1.msra.mxu0 0.0
    %2211 = vmatprep.subr.mxu0 0.0
    %2212 = vmatpush1.msra.mxu0 0.0
    %2213 = vmatprep.subr.mxu0 0.0
    %2214 = vmatpush1.msra.mxu0 0.0
    %2215 = vmatprep.subr.mxu0 0.0
    %2216 = vmatpush1.msra.mxu0 0.0
    %2217 = vmatprep.subr.mxu0 0.0
    %2218 = vmatpush1.msra.mxu0 0.0
    %2219 = vmatprep.mubr.f32.mxu0 0.0
    %2220 = vmatmul.mubr.f32.gmra.mrb[0].mxu0 %v2150
    %v2221 = vpop.f32.mrb[0].mxu0
    %v2222 = vadd.f32 %v2148, %v2221
    %v2223 = vpop.f32.mrb[0].mxu0
    %2224 = vmatprep.mubr.f32.mxu0 0.0
    %2225 = vmatmul.mubr.f32.gmra.mrb[0].mxu0 %v2153
    %v2226 = vpop.f32.mrb[0].mxu0
    %v2227 = vadd.f32 %v2148, %v2226
    %v2228 = vpop.f32.mrb[0].mxu0
    %2229 = vdwg.mxu0
    %v2230 = vld [vmem:[#allocation8 + $0x40] sm:$0xff]
    %v2231 = vld [vmem:[#allocation8 + $0x48] sm:$0xff]
    %v2232 = vld [vmem:[#allocation8 + $0x50] sm:$0xff]
    %v2233 = vld [vmem:[#allocation8 + $0x58] sm:$0xff]
    %v2234 = vld [vmem:[#allocation9 + $0x2] sm:$0x1]
    %v2235 = vlaneseq
    %v2236 = vshrl.u32 %v2235, 7
    %v2237 = vsub.s32 0, %v2236
    %v2238 = vrot.slane %v2234, %v2237
    %v2240 = vsel %vm84, %v2137, 0
    %v2243 = vsel %vm84, %v2138, 0
    %v2246 = vsel %vm84, %v2139, 0
    %2248 = vmatprep.subr.mxu0 0.0
    %2249 = vmatpush1.msra.mxu0 %v2230
    %2250 = vmatprep.subr.mxu0 0.0
    %2251 = vmatpush1.msra.mxu0 %v2231
    %2252 = vmatprep.subr.mxu0 0.0
    %2253 = vmatpush1.msra.mxu0 %v2232
    %2254 = vmatprep.subr.mxu0 0.0
    %2255 = vmatpush1.msra.mxu0 %v2233
    %2256 = vmatprep.subr.mxu0 0.0
    %2257 = vmatpush1.msra.mxu0 0.0
    %2258 = vmatprep.subr.mxu0 0.0
    %2259 = vmatpush1.msra.mxu0 0.0
    %2260 = vmatprep.subr.mxu0 0.0
    %2261 = vmatpush1.msra.mxu0 0.0
    %2262 = vmatprep.subr.mxu0 0.0
    %2263 = vmatpush1.msra.mxu0 0.0
    %2264 = vmatprep.subr.mxu0 0.0
    %2265 = vmatpush1.msra.mxu0 0.0
    %2266 = vmatprep.subr.mxu0 0.0
    %2267 = vmatpush1.msra.mxu0 0.0
    %2268 = vmatprep.subr.mxu0 0.0
    %2269 = vmatpush1.msra.mxu0 0.0
    %2270 = vmatprep.subr.mxu0 0.0
    %2271 = vmatpush1.msra.mxu0 0.0
    %2272 = vmatprep.subr.mxu0 0.0
    %2273 = vmatpush1.msra.mxu0 0.0
    %2274 = vmatprep.subr.mxu0 0.0
    %2275 = vmatpush1.msra.mxu0 0.0
    %2276 = vmatprep.subr.mxu0 0.0
    %2277 = vmatpush1.msra.mxu0 0.0
    %2278 = vmatprep.subr.mxu0 0.0
    %2279 = vmatpush1.msra.mxu0 0.0
    %2280 = vmatprep.subr.mxu0 0.0
    %2281 = vmatpush1.msra.mxu0 0.0
    %2282 = vmatprep.subr.mxu0 0.0
    %2283 = vmatpush1.msra.mxu0 0.0
    %2284 = vmatprep.subr.mxu0 0.0
    %2285 = vmatpush1.msra.mxu0 0.0
    %2286 = vmatprep.subr.mxu0 0.0
    %2287 = vmatpush1.msra.mxu0 0.0
    %2288 = vmatprep.subr.mxu0 0.0
    %2289 = vmatpush1.msra.mxu0 0.0
    %2290 = vmatprep.subr.mxu0 0.0
    %2291 = vmatpush1.msra.mxu0 0.0
    %2292 = vmatprep.subr.mxu0 0.0
    %2293 = vmatpush1.msra.mxu0 0.0
    %2294 = vmatprep.subr.mxu0 0.0
    %2295 = vmatpush1.msra.mxu0 0.0
    %2296 = vmatprep.subr.mxu0 0.0
    %2297 = vmatpush1.msra.mxu0 0.0
    %2298 = vmatprep.subr.mxu0 0.0
    %2299 = vmatpush1.msra.mxu0 0.0
    %2300 = vmatprep.subr.mxu0 0.0
    %2301 = vmatpush1.msra.mxu0 0.0
    %2302 = vmatprep.subr.mxu0 0.0
    %2303 = vmatpush1.msra.mxu0 0.0
    %2304 = vmatprep.subr.mxu0 0.0
    %2305 = vmatpush1.msra.mxu0 0.0
    %2306 = vmatprep.subr.mxu0 0.0
    %2307 = vmatpush1.msra.mxu0 0.0
    %2308 = vmatprep.subr.mxu0 0.0
    %2309 = vmatpush1.msra.mxu0 0.0
    %2310 = vmatprep.subr.mxu0 0.0
    %2311 = vmatpush1.msra.mxu0 0.0
    %2312 = vmatprep.mubr.f32.mxu0 0.0
    %2313 = vmatmul.mubr.f32.gmra.mrb[0].mxu0 %v2240
    %v2314 = vpop.f32.mrb[0].mxu0
    %v2315 = vadd.f32 %v2238, %v2314
    %v2316 = vpop.f32.mrb[0].mxu0
    %2317 = vmatprep.mubr.f32.mxu0 0.0
    %2318 = vmatmul.mubr.f32.gmra.mrb[0].mxu0 %v2243
    %v2319 = vpop.f32.mrb[0].mxu0
    %v2320 = vadd.f32 %v2238, %v2319
    %v2321 = vpop.f32.mrb[0].mxu0
    %2322 = vmatprep.mubr.f32.mxu0 0.0
    %2323 = vmatmul.mubr.f32.gmra.mrb[0].mxu0 %v2246
    %v2324 = vpop.f32.mrb[0].mxu0
    %v2325 = vadd.f32 %v2238, %v2324
    %v2326 = vpop.f32.mrb[0].mxu0
    %2327 = vdwg.mxu0
    %v2328 = vld [vmem:[#allocation8 + $0x80] sm:$0xff]
    %v2329 = vld [vmem:[#allocation8 + $0x88] sm:$0xff]
    %v2330 = vld [vmem:[#allocation8 + $0x90] sm:$0xff]
    %v2331 = vld [vmem:[#allocation8 + $0x98] sm:$0xff]
    %v2332 = vld [vmem:[#allocation9 + $0x4] sm:$0x1]
    %v2333 = vlaneseq
    %v2334 = vshrl.u32 %v2333, 7
    %v2335 = vsub.s32 0, %v2334
    %v2336 = vrot.slane %v2332, %v2335
    %v2337 = vadd.f32 %v2135, %v2336
    %v2339 = vsel %vm179, %v2222, 0
    %v2342 = vsel %vm179, %v2315, 0
    %v2345 = vsel %vm179, %v2320, 0
    %2347 = vmatprep.subr.mxu0 0.0
    %2348 = vmatpush1.xpose.msra.mxu0 %v2342
    %2349 = vmatprep.subr.mxu0 0.0
    %2350 = vmatpush1.xpose.msra.mxu0 %v2345
    %2351 = vmatprep.subr.mxu0 0.0
    %2352 = vmatpush1.xpose.msra.mxu0 0.0
    %2353 = vmatprep.subr.mxu0 0.0
    %2354 = vmatpush1.xpose.msra.mxu0 0.0
    %2355 = vmatprep.subr.mxu0 0.0
    %2356 = vmatpush1.xpose.msra.mxu0 0.0
    %2357 = vmatprep.subr.mxu0 0.0
    %2358 = vmatpush1.xpose.msra.mxu0 0.0
    %2359 = vmatprep.subr.mxu0 0.0
    %2360 = vmatpush1.xpose.msra.mxu0 0.0
    %2361 = vmatprep.subr.mxu0 0.0
    %2362 = vmatpush1.xpose.msra.mxu0 0.0
    %2363 = vmatprep.subr.mxu0 0.0
    %2364 = vmatpush1.xpose.msra.mxu0 0.0
    %2365 = vmatprep.subr.mxu0 0.0
    %2366 = vmatpush1.xpose.msra.mxu0 0.0
    %2367 = vmatprep.subr.mxu0 0.0
    %2368 = vmatpush1.xpose.msra.mxu0 0.0
    %2369 = vmatprep.subr.mxu0 0.0
    %2370 = vmatpush1.xpose.msra.mxu0 0.0
    %2371 = vmatprep.subr.mxu0 0.0
    %2372 = vmatpush1.xpose.msra.mxu0 0.0
    %2373 = vmatprep.subr.mxu0 0.0
    %2374 = vmatpush1.xpose.msra.mxu0 0.0
    %2375 = vmatprep.subr.mxu0 0.0
    %2376 = vmatpush1.xpose.msra.mxu0 0.0
    %2377 = vmatprep.subr.mxu0 0.0
    %2378 = vmatpush1.xpose.msra.mxu0 0.0
    %2379 = vmatprep.subr.mxu0 0.0
    %2380 = vmatpush1.xpose.msra.mxu0 0.0
    %2381 = vmatprep.subr.mxu0 0.0
    %2382 = vmatpush1.xpose.msra.mxu0 0.0
    %2383 = vmatprep.subr.mxu0 0.0
    %2384 = vmatpush1.xpose.msra.mxu0 0.0
    %2385 = vmatprep.subr.mxu0 0.0
    %2386 = vmatpush1.xpose.msra.mxu0 0.0
    %2387 = vmatprep.subr.mxu0 0.0
    %2388 = vmatpush1.xpose.msra.mxu0 0.0
    %2389 = vmatprep.subr.mxu0 0.0
    %2390 = vmatpush1.xpose.msra.mxu0 0.0
    %2391 = vmatprep.subr.mxu0 0.0
    %2392 = vmatpush1.xpose.msra.mxu0 0.0
    %2393 = vmatprep.subr.mxu0 0.0
    %2394 = vmatpush1.xpose.msra.mxu0 0.0
    %2395 = vmatprep.subr.mxu0 0.0
    %2396 = vmatpush1.xpose.msra.mxu0 0.0
    %2397 = vmatprep.subr.mxu0 0.0
    %2398 = vmatpush1.xpose.msra.mxu0 0.0
    %2399 = vmatprep.subr.mxu0 0.0
    %2400 = vmatpush1.xpose.msra.mxu0 0.0
    %2401 = vmatprep.subr.mxu0 0.0
    %2402 = vmatpush1.xpose.msra.mxu0 0.0
    %2403 = vmatprep.subr.mxu0 0.0
    %2404 = vmatpush1.xpose.msra.mxu0 0.0
    %2405 = vmatprep.subr.mxu0 0.0
    %2406 = vmatpush1.xpose.msra.mxu0 0.0
    %2407 = vmatprep.subr.mxu0 0.0
    %2408 = vmatpush1.xpose.msra.mxu0 0.0
    %2409 = vmatprep.subr.mxu0 0.0
    %2410 = vmatpush1.xpose.msra.mxu0 0.0
    %2411 = vmatprep.mubr.f32.mxu0 0.0
    %2412 = vmatmul.mubr.f32.gmra.mrb[0].mxu0 %v2339
    %v2413 = vpop.f32.mrb[0].mxu0
    %v2414 = vadd.f32 0.0, %v2413
    %v2415 = vpop.f32.mrb[0].mxu0
    %2416 = vdwg.mxu0
    %vm2417 = vcmask 80896
    %v2418 = vsel %vm2417, %v2414, -inf
    %2419 = vmax.xlane.f32.xlu0 %v2418
    %v2420 = vpop.xlane.xlu0 %2419
    %v2421 = vsub.f32 %v2414, %v2420
    %v2422 = vmul.f32 %v2421, 1.442695
    %v2423 = vpow.pop %v2422
    %v2424 = vsel %vm2417, %v2423, 0.0
    %2425 = vadd.xlane.f32.xlu0 %v2424
    %v2426 = vpop.xlane.xlu0 %2425
    %v2427 = vrcp.pop %v2426
    %v2428 = vmul.f32 %v2423, %v2427
    %2429 = vrot.lane.b32.xlu0 %v2315, 96
    %v2430 = vpop.permute.xlu0 %2429
    %2431 = vrot.lane.b32.xlu0 %v2320, 96
    %v2432 = vpop.permute.xlu0 %2431
    %v2435 = vsel %vm2417, %v2428, 0
    %vm2437 = vcmask 1041408
    %v2438 = vsel %vm2437, %v2432, 0
    %2440 = vmatprep.subr.mxu0 0.0
    %2441 = vmatpush1.msra.mxu0 %v2430
    %2442 = vmatprep.subr.mxu0 0.0
    %2443 = vmatpush1.msra.mxu0 %v2438
    %2444 = vmatprep.subr.mxu0 0.0
    %2445 = vmatpush1.msra.mxu0 0.0
    %2446 = vmatprep.subr.mxu0 0.0
    %2447 = vmatpush1.msra.mxu0 0.0
    %2448 = vmatprep.subr.mxu0 0.0
    %2449 = vmatpush1.msra.mxu0 0.0
    %2450 = vmatprep.subr.mxu0 0.0
    %2451 = vmatpush1.msra.mxu0 0.0
    %2452 = vmatprep.subr.mxu0 0.0
    %2453 = vmatpush1.msra.mxu0 0.0
    %2454 = vmatprep.subr.mxu0 0.0
    %2455 = vmatpush1.msra.mxu0 0.0
    %2456 = vmatprep.subr.mxu0 0.0
    %2457 = vmatpush1.msra.mxu0 0.0
    %2458 = vmatprep.subr.mxu0 0.0
    %2459 = vmatpush1.msra.mxu0 0.0
    %2460 = vmatprep.subr.mxu0 0.0
    %2461 = vmatpush1.msra.mxu0 0.0
    %2462 = vmatprep.subr.mxu0 0.0
    %2463 = vmatpush1.msra.mxu0 0.0
    %2464 = vmatprep.subr.mxu0 0.0
    %2465 = vmatpush1.msra.mxu0 0.0
    %2466 = vmatprep.subr.mxu0 0.0
    %2467 = vmatpush1.msra.mxu0 0.0
    %2468 = vmatprep.subr.mxu0 0.0
    %2469 = vmatpush1.msra.mxu0 0.0
    %2470 = vmatprep.subr.mxu0 0.0
    %2471 = vmatpush1.msra.mxu0 0.0
    %2472 = vmatprep.subr.mxu0 0.0
    %2473 = vmatpush1.msra.mxu0 0.0
    %2474 = vmatprep.subr.mxu0 0.0
    %2475 = vmatpush1.msra.mxu0 0.0
    %2476 = vmatprep.subr.mxu0 0.0
    %2477 = vmatpush1.msra.mxu0 0.0
    %2478 = vmatprep.subr.mxu0 0.0
    %2479 = vmatpush1.msra.mxu0 0.0
    %2480 = vmatprep.subr.mxu0 0.0
    %2481 = vmatpush1.msra.mxu0 0.0
    %2482 = vmatprep.subr.mxu0 0.0
    %2483 = vmatpush1.msra.mxu0 0.0
    %2484 = vmatprep.subr.mxu0 0.0
    %2485 = vmatpush1.msra.mxu0 0.0
    %2486 = vmatprep.subr.mxu0 0.0
    %2487 = vmatpush1.msra.mxu0 0.0
    %2488 = vmatprep.subr.mxu0 0.0
    %2489 = vmatpush1.msra.mxu0 0.0
    %2490 = vmatprep.subr.mxu0 0.0
    %2491 = vmatpush1.msra.mxu0 0.0
    %2492 = vmatprep.subr.mxu0 0.0
    %2493 = vmatpush1.msra.mxu0 0.0
    %2494 = vmatprep.subr.mxu0 0.0
    %2495 = vmatpush1.msra.mxu0 0.0
    %2496 = vmatprep.subr.mxu0 0.0
    %2497 = vmatpush1.msra.mxu0 0.0
    %2498 = vmatprep.subr.mxu0 0.0
    %2499 = vmatpush1.msra.mxu0 0.0
    %2500 = vmatprep.subr.mxu0 0.0
    %2501 = vmatpush1.msra.mxu0 0.0
    %2502 = vmatprep.subr.mxu0 0.0
    %2503 = vmatpush1.msra.mxu0 0.0
    %2504 = vmatprep.mubr.f32.mxu0 0.0
    %2505 = vmatmul.mubr.f32.gmra.mrb[0].mxu0 %v2435
    %v2506 = vpop.f32.mrb[0].mxu0
    %v2507 = vadd.f32 0.0, %v2506
    %v2508 = vpop.f32.mrb[0].mxu0
    %2509 = vdwg.mxu0
    %v2511 = vsel %vm179, %v2507, 0
    %2513 = vmatprep.subr.mxu0 0.0
    %2514 = vmatpush1.msra.mxu0 %v2328
    %2515 = vmatprep.subr.mxu0 0.0
    %2516 = vmatpush1.msra.mxu0 0.0
    %2517 = vmatprep.subr.mxu0 0.0
    %2518 = vmatpush1.msra.mxu0 0.0
    %2519 = vmatprep.subr.mxu0 0.0
    %2520 = vmatpush1.msra.mxu0 0.0
    %2521 = vmatprep.subr.mxu0 0.0
    %2522 = vmatpush1.msra.mxu0 0.0
    %2523 = vmatprep.subr.mxu0 0.0
    %2524 = vmatpush1.msra.mxu0 0.0
    %2525 = vmatprep.subr.mxu0 0.0
    %2526 = vmatpush1.msra.mxu0 0.0
    %2527 = vmatprep.subr.mxu0 0.0
    %2528 = vmatpush1.msra.mxu0 0.0
    %2529 = vmatprep.subr.mxu0 0.0
    %2530 = vmatpush1.msra.mxu0 0.0
    %2531 = vmatprep.subr.mxu0 0.0
    %2532 = vmatpush1.msra.mxu0 0.0
    %2533 = vmatprep.subr.mxu0 0.0
    %2534 = vmatpush1.msra.mxu0 0.0
    %2535 = vmatprep.subr.mxu0 0.0
    %2536 = vmatpush1.msra.mxu0 0.0
    %2537 = vmatprep.subr.mxu0 0.0
    %2538 = vmatpush1.msra.mxu0 0.0
    %2539 = vmatprep.subr.mxu0 0.0
    %2540 = vmatpush1.msra.mxu0 0.0
    %2541 = vmatprep.subr.mxu0 0.0
    %2542 = vmatpush1.msra.mxu0 0.0
    %2543 = vmatprep.subr.mxu0 0.0
    %2544 = vmatpush1.msra.mxu0 0.0
    %2545 = vmatprep.subr.mxu0 0.0
    %2546 = vmatpush1.msra.mxu0 0.0
    %2547 = vmatprep.subr.mxu0 0.0
    %2548 = vmatpush1.msra.mxu0 0.0
    %2549 = vmatprep.subr.mxu0 0.0
    %2550 = vmatpush1.msra.mxu0 0.0
    %2551 = vmatprep.subr.mxu0 0.0
    %2552 = vmatpush1.msra.mxu0 0.0
    %2553 = vmatprep.subr.mxu0 0.0
    %2554 = vmatpush1.msra.mxu0 0.0
    %2555 = vmatprep.subr.mxu0 0.0
    %2556 = vmatpush1.msra.mxu0 0.0
    %2557 = vmatprep.subr.mxu0 0.0
    %2558 = vmatpush1.msra.mxu0 0.0
    %2559 = vmatprep.subr.mxu0 0.0
    %2560 = vmatpush1.msra.mxu0 0.0
    %2561 = vmatprep.subr.mxu0 0.0
    %2562 = vmatpush1.msra.mxu0 0.0
    %2563 = vmatprep.subr.mxu0 0.0
    %2564 = vmatpush1.msra.mxu0 0.0
    %2565 = vmatprep.subr.mxu0 0.0
    %2566 = vmatpush1.msra.mxu0 0.0
    %2567 = vmatprep.subr.mxu0 0.0
    %2568 = vmatpush1.msra.mxu0 0.0
    %2569 = vmatprep.subr.mxu0 0.0
    %2570 = vmatpush1.msra.mxu0 0.0
    %2571 = vmatprep.subr.mxu0 0.0
    %2572 = vmatpush1.msra.mxu0 0.0
    %2573 = vmatprep.subr.mxu0 0.0
    %2574 = vmatpush1.msra.mxu0 0.0
    %2575 = vmatprep.subr.mxu0 0.0
    %2576 = vmatpush1.msra.mxu0 0.0
    %2577 = vmatprep.mubr.f32.mxu0 0.0
    %2578 = vmatmul.mubr.f32.gmra.mrb[0].mxu0 %v2511
    %v2579 = vpop.f32.mrb[0].mxu0
    %v2580 = vadd.f32 0.0, %v2579
    %v2581 = vpop.f32.mrb[0].mxu0
    %2582 = vdwg.mxu0
    %v2583 = vadd.f32 %v2337, %v2580
    %2584 = vrot.lane.b32.xlu0 %v2222, 120
    %v2585 = vpop.permute.xlu0 %2584
    %2586 = vrot.lane.b32.xlu0 %v2315, 120
    %v2587 = vpop.permute.xlu0 %2586
    %2588 = vrot.lane.b32.xlu0 %v2320, 120
    %v2589 = vpop.permute.xlu0 %2588
    %v2590 = vsel %vm179, %v2585, 0
    %v2592 = vsel %vm179, %v2587, 0
    %v2594 = vsel %vm179, %v2589, 0
    %2596 = vmatprep.subr.mxu0 0.0
    %2597 = vmatpush1.xpose.msra.mxu0 %v2592
    %2598 = vmatprep.subr.mxu0 0.0
    %2599 = vmatpush1.xpose.msra.mxu0 %v2594
    %2600 = vmatprep.subr.mxu0 0.0
    %2601 = vmatpush1.xpose.msra.mxu0 0.0
    %2602 = vmatprep.subr.mxu0 0.0
    %2603 = vmatpush1.xpose.msra.mxu0 0.0
    %2604 = vmatprep.subr.mxu0 0.0
    %2605 = vmatpush1.xpose.msra.mxu0 0.0
    %2606 = vmatprep.subr.mxu0 0.0
    %2607 = vmatpush1.xpose.msra.mxu0 0.0
    %2608 = vmatprep.subr.mxu0 0.0
    %2609 = vmatpush1.xpose.msra.mxu0 0.0
    %2610 = vmatprep.subr.mxu0 0.0
    %2611 = vmatpush1.xpose.msra.mxu0 0.0
    %2612 = vmatprep.subr.mxu0 0.0
    %2613 = vmatpush1.xpose.msra.mxu0 0.0
    %2614 = vmatprep.subr.mxu0 0.0
    %2615 = vmatpush1.xpose.msra.mxu0 0.0
    %2616 = vmatprep.subr.mxu0 0.0
    %2617 = vmatpush1.xpose.msra.mxu0 0.0
    %2618 = vmatprep.subr.mxu0 0.0
    %2619 = vmatpush1.xpose.msra.mxu0 0.0
    %2620 = vmatprep.subr.mxu0 0.0
    %2621 = vmatpush1.xpose.msra.mxu0 0.0
    %2622 = vmatprep.subr.mxu0 0.0
    %2623 = vmatpush1.xpose.msra.mxu0 0.0
    %2624 = vmatprep.subr.mxu0 0.0
    %2625 = vmatpush1.xpose.msra.mxu0 0.0
    %2626 = vmatprep.subr.mxu0 0.0
    %2627 = vmatpush1.xpose.msra.mxu0 0.0
    %2628 = vmatprep.subr.mxu0 0.0
    %2629 = vmatpush1.xpose.msra.mxu0 0.0
    %2630 = vmatprep.subr.mxu0 0.0
    %2631 = vmatpush1.xpose.msra.mxu0 0.0
    %2632 = vmatprep.subr.mxu0 0.0
    %2633 = vmatpush1.xpose.msra.mxu0 0.0
    %2634 = vmatprep.subr.mxu0 0.0
    %2635 = vmatpush1.xpose.msra.mxu0 0.0
    %2636 = vmatprep.subr.mxu0 0.0
    %2637 = vmatpush1.xpose.msra.mxu0 0.0
    %2638 = vmatprep.subr.mxu0 0.0
    %2639 = vmatpush1.xpose.msra.mxu0 0.0
    %2640 = vmatprep.subr.mxu0 0.0
    %2641 = vmatpush1.xpose.msra.mxu0 0.0
    %2642 = vmatprep.subr.mxu0 0.0
    %2643 = vmatpush1.xpose.msra.mxu0 0.0
    %2644 = vmatprep.subr.mxu0 0.0
    %2645 = vmatpush1.xpose.msra.mxu0 0.0
    %2646 = vmatprep.subr.mxu0 0.0
    %2647 = vmatpush1.xpose.msra.mxu0 0.0
    %2648 = vmatprep.subr.mxu0 0.0
    %2649 = vmatpush1.xpose.msra.mxu0 0.0
    %2650 = vmatprep.subr.mxu0 0.0
    %2651 = vmatpush1.xpose.msra.mxu0 0.0
    %2652 = vmatprep.subr.mxu0 0.0
    %2653 = vmatpush1.xpose.msra.mxu0 0.0
    %2654 = vmatprep.subr.mxu0 0.0
    %2655 = vmatpush1.xpose.msra.mxu0 0.0
    %2656 = vmatprep.subr.mxu0 0.0
    %2657 = vmatpush1.xpose.msra.mxu0 0.0
    %2658 = vmatprep.subr.mxu0 0.0
    %2659 = vmatpush1.xpose.msra.mxu0 0.0
    %2660 = vmatprep.mubr.f32.mxu0 0.0
    %2661 = vmatmul.mubr.f32.gmra.mrb[0].mxu0 %v2590
    %v2662 = vpop.f32.mrb[0].mxu0
    %v2663 = vadd.f32 0.0, %v2662
    %v2664 = vpop.f32.mrb[0].mxu0
    %2665 = vdwg.mxu0
    %v2666 = vsel %vm2417, %v2663, -inf
    %2667 = vmax.xlane.f32.xlu0 %v2666
    %v2668 = vpop.xlane.xlu0 %2667
    %v2669 = vsub.f32 %v2663, %v2668
    %v2670 = vmul.f32 %v2669, 1.442695
    %v2671 = vpow.pop %v2670
    %v2672 = vsel %vm2417, %v2671, 0.0
    %2673 = vadd.xlane.f32.xlu0 %v2672
    %v2674 = vpop.xlane.xlu0 %2673
    %v2675 = vrcp.pop %v2674
    %v2676 = vmul.f32 %v2671, %v2675
    %2677 = vrot.lane.b32.xlu0 %v2315, 88
    %v2678 = vpop.permute.xlu0 %2677
    %2679 = vrot.lane.b32.xlu0 %v2320, 88
    %v2680 = vpop.permute.xlu0 %2679
    %v2683 = vsel %vm2417, %v2676, 0
    %v2685 = vsel %vm2437, %v2680, 0
    %2687 = vmatprep.subr.mxu0 0.0
    %2688 = vmatpush1.msra.mxu0 %v2678
    %2689 = vmatprep.subr.mxu0 0.0
    %2690 = vmatpush1.msra.mxu0 %v2685
    %2691 = vmatprep.subr.mxu0 0.0
    %2692 = vmatpush1.msra.mxu0 0.0
    %2693 = vmatprep.subr.mxu0 0.0
    %2694 = vmatpush1.msra.mxu0 0.0
    %2695 = vmatprep.subr.mxu0 0.0
    %2696 = vmatpush1.msra.mxu0 0.0
    %2697 = vmatprep.subr.mxu0 0.0
    %2698 = vmatpush1.msra.mxu0 0.0
    %2699 = vmatprep.subr.mxu0 0.0
    %2700 = vmatpush1.msra.mxu0 0.0
    %2701 = vmatprep.subr.mxu0 0.0
    %2702 = vmatpush1.msra.mxu0 0.0
    %2703 = vmatprep.subr.mxu0 0.0
    %2704 = vmatpush1.msra.mxu0 0.0
    %2705 = vmatprep.subr.mxu0 0.0
    %2706 = vmatpush1.msra.mxu0 0.0
    %2707 = vmatprep.subr.mxu0 0.0
    %2708 = vmatpush1.msra.mxu0 0.0
    %2709 = vmatprep.subr.mxu0 0.0
    %2710 = vmatpush1.msra.mxu0 0.0
    %2711 = vmatprep.subr.mxu0 0.0
    %2712 = vmatpush1.msra.mxu0 0.0
    %2713 = vmatprep.subr.mxu0 0.0
    %2714 = vmatpush1.msra.mxu0 0.0
    %2715 = vmatprep.subr.mxu0 0.0
    %2716 = vmatpush1.msra.mxu0 0.0
    %2717 = vmatprep.subr.mxu0 0.0
    %2718 = vmatpush1.msra.mxu0 0.0
    %2719 = vmatprep.subr.mxu0 0.0
    %2720 = vmatpush1.msra.mxu0 0.0
    %2721 = vmatprep.subr.mxu0 0.0
    %2722 = vmatpush1.msra.mxu0 0.0
    %2723 = vmatprep.subr.mxu0 0.0
    %2724 = vmatpush1.msra.mxu0 0.0
    %2725 = vmatprep.subr.mxu0 0.0
    %2726 = vmatpush1.msra.mxu0 0.0
    %2727 = vmatprep.subr.mxu0 0.0
    %2728 = vmatpush1.msra.mxu0 0.0
    %2729 = vmatprep.subr.mxu0 0.0
    %2730 = vmatpush1.msra.mxu0 0.0
    %2731 = vmatprep.subr.mxu0 0.0
    %2732 = vmatpush1.msra.mxu0 0.0
    %2733 = vmatprep.subr.mxu0 0.0
    %2734 = vmatpush1.msra.mxu0 0.0
    %2735 = vmatprep.subr.mxu0 0.0
    %2736 = vmatpush1.msra.mxu0 0.0
    %2737 = vmatprep.subr.mxu0 0.0
    %2738 = vmatpush1.msra.mxu0 0.0
    %2739 = vmatprep.subr.mxu0 0.0
    %2740 = vmatpush1.msra.mxu0 0.0
    %2741 = vmatprep.subr.mxu0 0.0
    %2742 = vmatpush1.msra.mxu0 0.0
    %2743 = vmatprep.subr.mxu0 0.0
    %2744 = vmatpush1.msra.mxu0 0.0
    %2745 = vmatprep.subr.mxu0 0.0
    %2746 = vmatpush1.msra.mxu0 0.0
    %2747 = vmatprep.subr.mxu0 0.0
    %2748 = vmatpush1.msra.mxu0 0.0
    %2749 = vmatprep.subr.mxu0 0.0
    %2750 = vmatpush1.msra.mxu0 0.0
    %2751 = vmatprep.mubr.f32.mxu0 0.0
    %2752 = vmatmul.mubr.f32.gmra.mrb[0].mxu0 %v2683
    %v2753 = vpop.f32.mrb[0].mxu0
    %v2754 = vadd.f32 0.0, %v2753
    %v2755 = vpop.f32.mrb[0].mxu0
    %2756 = vdwg.mxu0
    %v2758 = vsel %vm179, %v2754, 0
    %2760 = vmatprep.subr.mxu0 0.0
    %2761 = vmatpush1.msra.mxu0 %v2329
    %2762 = vmatprep.subr.mxu0 0.0
    %2763 = vmatpush1.msra.mxu0 0.0
    %2764 = vmatprep.subr.mxu0 0.0
    %2765 = vmatpush1.msra.mxu0 0.0
    %2766 = vmatprep.subr.mxu0 0.0
    %2767 = vmatpush1.msra.mxu0 0.0
    %2768 = vmatprep.subr.mxu0 0.0
    %2769 = vmatpush1.msra.mxu0 0.0
    %2770 = vmatprep.subr.mxu0 0.0
    %2771 = vmatpush1.msra.mxu0 0.0
    %2772 = vmatprep.subr.mxu0 0.0
    %2773 = vmatpush1.msra.mxu0 0.0
    %2774 = vmatprep.subr.mxu0 0.0
    %2775 = vmatpush1.msra.mxu0 0.0
    %2776 = vmatprep.subr.mxu0 0.0
    %2777 = vmatpush1.msra.mxu0 0.0
    %2778 = vmatprep.subr.mxu0 0.0
    %2779 = vmatpush1.msra.mxu0 0.0
    %2780 = vmatprep.subr.mxu0 0.0
    %2781 = vmatpush1.msra.mxu0 0.0
    %2782 = vmatprep.subr.mxu0 0.0
    %2783 = vmatpush1.msra.mxu0 0.0
    %2784 = vmatprep.subr.mxu0 0.0
    %2785 = vmatpush1.msra.mxu0 0.0
    %2786 = vmatprep.subr.mxu0 0.0
    %2787 = vmatpush1.msra.mxu0 0.0
    %2788 = vmatprep.subr.mxu0 0.0
    %2789 = vmatpush1.msra.mxu0 0.0
    %2790 = vmatprep.subr.mxu0 0.0
    %2791 = vmatpush1.msra.mxu0 0.0
    %2792 = vmatprep.subr.mxu0 0.0
    %2793 = vmatpush1.msra.mxu0 0.0
    %2794 = vmatprep.subr.mxu0 0.0
    %2795 = vmatpush1.msra.mxu0 0.0
    %2796 = vmatprep.subr.mxu0 0.0
    %2797 = vmatpush1.msra.mxu0 0.0
    %2798 = vmatprep.subr.mxu0 0.0
    %2799 = vmatpush1.msra.mxu0 0.0
    %2800 = vmatprep.subr.mxu0 0.0
    %2801 = vmatpush1.msra.mxu0 0.0
    %2802 = vmatprep.subr.mxu0 0.0
    %2803 = vmatpush1.msra.mxu0 0.0
    %2804 = vmatprep.subr.mxu0 0.0
    %2805 = vmatpush1.msra.mxu0 0.0
    %2806 = vmatprep.subr.mxu0 0.0
    %2807 = vmatpush1.msra.mxu0 0.0
    %2808 = vmatprep.subr.mxu0 0.0
    %2809 = vmatpush1.msra.mxu0 0.0
    %2810 = vmatprep.subr.mxu0 0.0
    %2811 = vmatpush1.msra.mxu0 0.0
    %2812 = vmatprep.subr.mxu0 0.0
    %2813 = vmatpush1.msra.mxu0 0.0
    %2814 = vmatprep.subr.mxu0 0.0
    %2815 = vmatpush1.msra.mxu0 0.0
    %2816 = vmatprep.subr.mxu0 0.0
    %2817 = vmatpush1.msra.mxu0 0.0
    %2818 = vmatprep.subr.mxu0 0.0
    %2819 = vmatpush1.msra.mxu0 0.0
    %2820 = vmatprep.subr.mxu0 0.0
    %2821 = vmatpush1.msra.mxu0 0.0
    %2822 = vmatprep.subr.mxu0 0.0
    %2823 = vmatpush1.msra.mxu0 0.0
    %2824 = vmatprep.mubr.f32.mxu0 0.0
    %2825 = vmatmul.mubr.f32.gmra.mrb[0].mxu0 %v2758
    %v2826 = vpop.f32.mrb[0].mxu0
    %v2827 = vadd.f32 0.0, %v2826
    %v2828 = vpop.f32.mrb[0].mxu0
    %2829 = vdwg.mxu0
    %v2830 = vadd.f32 %v2583, %v2827
    %2831 = vrot.lane.b32.xlu0 %v2222, 112
    %v2832 = vpop.permute.xlu0 %2831
    %2833 = vrot.lane.b32.xlu0 %v2315, 112
    %v2834 = vpop.permute.xlu0 %2833
    %2835 = vrot.lane.b32.xlu0 %v2320, 112
    %v2836 = vpop.permute.xlu0 %2835
    %v2837 = vsel %vm179, %v2832, 0
    %v2839 = vsel %vm179, %v2834, 0
    %v2841 = vsel %vm179, %v2836, 0
    %2843 = vmatprep.subr.mxu0 0.0
    %2844 = vmatpush1.xpose.msra.mxu0 %v2839
    %2845 = vmatprep.subr.mxu0 0.0
    %2846 = vmatpush1.xpose.msra.mxu0 %v2841
    %2847 = vmatprep.subr.mxu0 0.0
    %2848 = vmatpush1.xpose.msra.mxu0 0.0
    %2849 = vmatprep.subr.mxu0 0.0
    %2850 = vmatpush1.xpose.msra.mxu0 0.0
    %2851 = vmatprep.subr.mxu0 0.0
    %2852 = vmatpush1.xpose.msra.mxu0 0.0
    %2853 = vmatprep.subr.mxu0 0.0
    %2854 = vmatpush1.xpose.msra.mxu0 0.0
    %2855 = vmatprep.subr.mxu0 0.0
    %2856 = vmatpush1.xpose.msra.mxu0 0.0
    %2857 = vmatprep.subr.mxu0 0.0
    %2858 = vmatpush1.xpose.msra.mxu0 0.0
    %2859 = vmatprep.subr.mxu0 0.0
    %2860 = vmatpush1.xpose.msra.mxu0 0.0
    %2861 = vmatprep.subr.mxu0 0.0
    %2862 = vmatpush1.xpose.msra.mxu0 0.0
    %2863 = vmatprep.subr.mxu0 0.0
    %2864 = vmatpush1.xpose.msra.mxu0 0.0
    %2865 = vmatprep.subr.mxu0 0.0
    %2866 = vmatpush1.xpose.msra.mxu0 0.0
    %2867 = vmatprep.subr.mxu0 0.0
    %2868 = vmatpush1.xpose.msra.mxu0 0.0
    %2869 = vmatprep.subr.mxu0 0.0
    %2870 = vmatpush1.xpose.msra.mxu0 0.0
    %2871 = vmatprep.subr.mxu0 0.0
    %2872 = vmatpush1.xpose.msra.mxu0 0.0
    %2873 = vmatprep.subr.mxu0 0.0
    %2874 = vmatpush1.xpose.msra.mxu0 0.0
    %2875 = vmatprep.subr.mxu0 0.0
    %2876 = vmatpush1.xpose.msra.mxu0 0.0
    %2877 = vmatprep.subr.mxu0 0.0
    %2878 = vmatpush1.xpose.msra.mxu0 0.0
    %2879 = vmatprep.subr.mxu0 0.0
    %2880 = vmatpush1.xpose.msra.mxu0 0.0
    %2881 = vmatprep.subr.mxu0 0.0
    %2882 = vmatpush1.xpose.msra.mxu0 0.0
    %2883 = vmatprep.subr.mxu0 0.0
    %2884 = vmatpush1.xpose.msra.mxu0 0.0
    %2885 = vmatprep.subr.mxu0 0.0
    %2886 = vmatpush1.xpose.msra.mxu0 0.0
    %2887 = vmatprep.subr.mxu0 0.0
    %2888 = vmatpush1.xpose.msra.mxu0 0.0
    %2889 = vmatprep.subr.mxu0 0.0
    %2890 = vmatpush1.xpose.msra.mxu0 0.0
    %2891 = vmatprep.subr.mxu0 0.0
    %2892 = vmatpush1.xpose.msra.mxu0 0.0
    %2893 = vmatprep.subr.mxu0 0.0
    %2894 = vmatpush1.xpose.msra.mxu0 0.0
    %2895 = vmatprep.subr.mxu0 0.0
    %2896 = vmatpush1.xpose.msra.mxu0 0.0
    %2897 = vmatprep.subr.mxu0 0.0
    %2898 = vmatpush1.xpose.msra.mxu0 0.0
    %2899 = vmatprep.subr.mxu0 0.0
    %2900 = vmatpush1.xpose.msra.mxu0 0.0
    %2901 = vmatprep.subr.mxu0 0.0
    %2902 = vmatpush1.xpose.msra.mxu0 0.0
    %2903 = vmatprep.subr.mxu0 0.0
    %2904 = vmatpush1.xpose.msra.mxu0 0.0
    %2905 = vmatprep.subr.mxu0 0.0
    %2906 = vmatpush1.xpose.msra.mxu0 0.0
    %2907 = vmatprep.mubr.f32.mxu0 0.0
    %2908 = vmatmul.mubr.f32.gmra.mrb[0].mxu0 %v2837
    %v2909 = vpop.f32.mrb[0].mxu0
    %v2910 = vadd.f32 0.0, %v2909
    %v2911 = vpop.f32.mrb[0].mxu0
    %2912 = vdwg.mxu0
    %v2913 = vsel %vm2417, %v2910, -inf
    %2914 = vmax.xlane.f32.xlu0 %v2913
    %v2915 = vpop.xlane.xlu0 %2914
    %v2916 = vsub.f32 %v2910, %v2915
    %v2917 = vmul.f32 %v2916, 1.442695
    %v2918 = vpow.pop %v2917
    %v2919 = vsel %vm2417, %v2918, 0.0
    %2920 = vadd.xlane.f32.xlu0 %v2919
    %v2921 = vpop.xlane.xlu0 %2920
    %v2922 = vrcp.pop %v2921
    %v2923 = vmul.f32 %v2918, %v2922
    %2924 = vrot.lane.b32.xlu0 %v2315, 80
    %v2925 = vpop.permute.xlu0 %2924
    %2926 = vrot.lane.b32.xlu0 %v2320, 80
    %v2927 = vpop.permute.xlu0 %2926
    %v2930 = vsel %vm2417, %v2923, 0
    %v2932 = vsel %vm2437, %v2927, 0
    %2934 = vmatprep.subr.mxu0 0.0
    %2935 = vmatpush1.msra.mxu0 %v2925
    %2936 = vmatprep.subr.mxu0 0.0
    %2937 = vmatpush1.msra.mxu0 %v2932
    %2938 = vmatprep.subr.mxu0 0.0
    %2939 = vmatpush1.msra.mxu0 0.0
    %2940 = vmatprep.subr.mxu0 0.0
    %2941 = vmatpush1.msra.mxu0 0.0
    %2942 = vmatprep.subr.mxu0 0.0
    %2943 = vmatpush1.msra.mxu0 0.0
    %2944 = vmatprep.subr.mxu0 0.0
    %2945 = vmatpush1.msra.mxu0 0.0
    %2946 = vmatprep.subr.mxu0 0.0
    %2947 = vmatpush1.msra.mxu0 0.0
    %2948 = vmatprep.subr.mxu0 0.0
    %2949 = vmatpush1.msra.mxu0 0.0
    %2950 = vmatprep.subr.mxu0 0.0
    %2951 = vmatpush1.msra.mxu0 0.0
    %2952 = vmatprep.subr.mxu0 0.0
    %2953 = vmatpush1.msra.mxu0 0.0
    %2954 = vmatprep.subr.mxu0 0.0
    %2955 = vmatpush1.msra.mxu0 0.0
    %2956 = vmatprep.subr.mxu0 0.0
    %2957 = vmatpush1.msra.mxu0 0.0
    %2958 = vmatprep.subr.mxu0 0.0
    %2959 = vmatpush1.msra.mxu0 0.0
    %2960 = vmatprep.subr.mxu0 0.0
    %2961 = vmatpush1.msra.mxu0 0.0
    %2962 = vmatprep.subr.mxu0 0.0
    %2963 = vmatpush1.msra.mxu0 0.0
    %2964 = vmatprep.subr.mxu0 0.0
    %2965 = vmatpush1.msra.mxu0 0.0
    %2966 = vmatprep.subr.mxu0 0.0
    %2967 = vmatpush1.msra.mxu0 0.0
    %2968 = vmatprep.subr.mxu0 0.0
    %2969 = vmatpush1.msra.mxu0 0.0
    %2970 = vmatprep.subr.mxu0 0.0
    %2971 = vmatpush1.msra.mxu0 0.0
    %2972 = vmatprep.subr.mxu0 0.0
    %2973 = vmatpush1.msra.mxu0 0.0
    %2974 = vmatprep.subr.mxu0 0.0
    %2975 = vmatpush1.msra.mxu0 0.0
    %2976 = vmatprep.subr.mxu0 0.0
    %2977 = vmatpush1.msra.mxu0 0.0
    %2978 = vmatprep.subr.mxu0 0.0
    %2979 = vmatpush1.msra.mxu0 0.0
    %2980 = vmatprep.subr.mxu0 0.0
    %2981 = vmatpush1.msra.mxu0 0.0
    %2982 = vmatprep.subr.mxu0 0.0
    %2983 = vmatpush1.msra.mxu0 0.0
    %2984 = vmatprep.subr.mxu0 0.0
    %2985 = vmatpush1.msra.mxu0 0.0
    %2986 = vmatprep.subr.mxu0 0.0
    %2987 = vmatpush1.msra.mxu0 0.0
    %2988 = vmatprep.subr.mxu0 0.0
    %2989 = vmatpush1.msra.mxu0 0.0
    %2990 = vmatprep.subr.mxu0 0.0
    %2991 = vmatpush1.msra.mxu0 0.0
    %2992 = vmatprep.subr.mxu0 0.0
    %2993 = vmatpush1.msra.mxu0 0.0
    %2994 = vmatprep.subr.mxu0 0.0
    %2995 = vmatpush1.msra.mxu0 0.0
    %2996 = vmatprep.subr.mxu0 0.0
    %2997 = vmatpush1.msra.mxu0 0.0
    %2998 = vmatprep.mubr.f32.mxu0 0.0
    %2999 = vmatmul.mubr.f32.gmra.mrb[0].mxu0 %v2930
    %v3000 = vpop.f32.mrb[0].mxu0
    %v3001 = vadd.f32 0.0, %v3000
    %v3002 = vpop.f32.mrb[0].mxu0
    %3003 = vdwg.mxu0
    %v3005 = vsel %vm179, %v3001, 0
    %3007 = vmatprep.subr.mxu0 0.0
    %3008 = vmatpush1.msra.mxu0 %v2330
    %3009 = vmatprep.subr.mxu0 0.0
    %3010 = vmatpush1.msra.mxu0 0.0
    %3011 = vmatprep.subr.mxu0 0.0
    %3012 = vmatpush1.msra.mxu0 0.0
    %3013 = vmatprep.subr.mxu0 0.0
    %3014 = vmatpush1.msra.mxu0 0.0
    %3015 = vmatprep.subr.mxu0 0.0
    %3016 = vmatpush1.msra.mxu0 0.0
    %3017 = vmatprep.subr.mxu0 0.0
    %3018 = vmatpush1.msra.mxu0 0.0
    %3019 = vmatprep.subr.mxu0 0.0
    %3020 = vmatpush1.msra.mxu0 0.0
    %3021 = vmatprep.subr.mxu0 0.0
    %3022 = vmatpush1.msra.mxu0 0.0
    %3023 = vmatprep.subr.mxu0 0.0
    %3024 = vmatpush1.msra.mxu0 0.0
    %3025 = vmatprep.subr.mxu0 0.0
    %3026 = vmatpush1.msra.mxu0 0.0
    %3027 = vmatprep.subr.mxu0 0.0
    %3028 = vmatpush1.msra.mxu0 0.0
    %3029 = vmatprep.subr.mxu0 0.0
    %3030 = vmatpush1.msra.mxu0 0.0
    %3031 = vmatprep.subr.mxu0 0.0
    %3032 = vmatpush1.msra.mxu0 0.0
    %3033 = vmatprep.subr.mxu0 0.0
    %3034 = vmatpush1.msra.mxu0 0.0
    %3035 = vmatprep.subr.mxu0 0.0
    %3036 = vmatpush1.msra.mxu0 0.0
    %3037 = vmatprep.subr.mxu0 0.0
    %3038 = vmatpush1.msra.mxu0 0.0
    %3039 = vmatprep.subr.mxu0 0.0
    %3040 = vmatpush1.msra.mxu0 0.0
    %3041 = vmatprep.subr.mxu0 0.0
    %3042 = vmatpush1.msra.mxu0 0.0
    %3043 = vmatprep.subr.mxu0 0.0
    %3044 = vmatpush1.msra.mxu0 0.0
    %3045 = vmatprep.subr.mxu0 0.0
    %3046 = vmatpush1.msra.mxu0 0.0
    %3047 = vmatprep.subr.mxu0 0.0
    %3048 = vmatpush1.msra.mxu0 0.0
    %3049 = vmatprep.subr.mxu0 0.0
    %3050 = vmatpush1.msra.mxu0 0.0
    %3051 = vmatprep.subr.mxu0 0.0
    %3052 = vmatpush1.msra.mxu0 0.0
    %3053 = vmatprep.subr.mxu0 0.0
    %3054 = vmatpush1.msra.mxu0 0.0
    %3055 = vmatprep.subr.mxu0 0.0
    %3056 = vmatpush1.msra.mxu0 0.0
    %3057 = vmatprep.subr.mxu0 0.0
    %3058 = vmatpush1.msra.mxu0 0.0
    %3059 = vmatprep.subr.mxu0 0.0
    %3060 = vmatpush1.msra.mxu0 0.0
    %3061 = vmatprep.subr.mxu0 0.0
    %3062 = vmatpush1.msra.mxu0 0.0
    %3063 = vmatprep.subr.mxu0 0.0
    %3064 = vmatpush1.msra.mxu0 0.0
    %3065 = vmatprep.subr.mxu0 0.0
    %3066 = vmatpush1.msra.mxu0 0.0
    %3067 = vmatprep.subr.mxu0 0.0
    %3068 = vmatpush1.msra.mxu0 0.0
    %3069 = vmatprep.subr.mxu0 0.0
    %3070 = vmatpush1.msra.mxu0 0.0
    %3071 = vmatprep.mubr.f32.mxu0 0.0
    %3072 = vmatmul.mubr.f32.gmra.mrb[0].mxu0 %v3005
    %v3073 = vpop.f32.mrb[0].mxu0
    %v3074 = vadd.f32 0.0, %v3073
    %v3075 = vpop.f32.mrb[0].mxu0
    %3076 = vdwg.mxu0
    %v3077 = vadd.f32 %v2830, %v3074
    %3078 = vrot.lane.b32.xlu0 %v2222, 104
    %v3079 = vpop.permute.xlu0 %3078
    %3080 = vrot.lane.b32.xlu0 %v2315, 104
    %v3081 = vpop.permute.xlu0 %3080
    %3082 = vrot.lane.b32.xlu0 %v2320, 104
    %v3083 = vpop.permute.xlu0 %3082
    %v3084 = vsel %vm179, %v3079, 0
    %v3086 = vsel %vm179, %v3081, 0
    %v3088 = vsel %vm179, %v3083, 0
    %3090 = vmatprep.subr.mxu0 0.0
    %3091 = vmatpush1.xpose.msra.mxu0 %v3086
    %3092 = vmatprep.subr.mxu0 0.0
    %3093 = vmatpush1.xpose.msra.mxu0 %v3088
    %3094 = vmatprep.subr.mxu0 0.0
    %3095 = vmatpush1.xpose.msra.mxu0 0.0
    %3096 = vmatprep.subr.mxu0 0.0
    %3097 = vmatpush1.xpose.msra.mxu0 0.0
    %3098 = vmatprep.subr.mxu0 0.0
    %3099 = vmatpush1.xpose.msra.mxu0 0.0
    %3100 = vmatprep.subr.mxu0 0.0
    %3101 = vmatpush1.xpose.msra.mxu0 0.0
    %3102 = vmatprep.subr.mxu0 0.0
    %3103 = vmatpush1.xpose.msra.mxu0 0.0
    %3104 = vmatprep.subr.mxu0 0.0
    %3105 = vmatpush1.xpose.msra.mxu0 0.0
    %3106 = vmatprep.subr.mxu0 0.0
    %3107 = vmatpush1.xpose.msra.mxu0 0.0
    %3108 = vmatprep.subr.mxu0 0.0
    %3109 = vmatpush1.xpose.msra.mxu0 0.0
    %3110 = vmatprep.subr.mxu0 0.0
    %3111 = vmatpush1.xpose.msra.mxu0 0.0
    %3112 = vmatprep.subr.mxu0 0.0
    %3113 = vmatpush1.xpose.msra.mxu0 0.0
    %3114 = vmatprep.subr.mxu0 0.0
    %3115 = vmatpush1.xpose.msra.mxu0 0.0
    %3116 = vmatprep.subr.mxu0 0.0
    %3117 = vmatpush1.xpose.msra.mxu0 0.0
    %3118 = vmatprep.subr.mxu0 0.0
    %3119 = vmatpush1.xpose.msra.mxu0 0.0
    %3120 = vmatprep.subr.mxu0 0.0
    %3121 = vmatpush1.xpose.msra.mxu0 0.0
    %3122 = vmatprep.subr.mxu0 0.0
    %3123 = vmatpush1.xpose.msra.mxu0 0.0
    %3124 = vmatprep.subr.mxu0 0.0
    %3125 = vmatpush1.xpose.msra.mxu0 0.0
    %3126 = vmatprep.subr.mxu0 0.0
    %3127 = vmatpush1.xpose.msra.mxu0 0.0
    %3128 = vmatprep.subr.mxu0 0.0
    %3129 = vmatpush1.xpose.msra.mxu0 0.0
    %3130 = vmatprep.subr.mxu0 0.0
    %3131 = vmatpush1.xpose.msra.mxu0 0.0
    %3132 = vmatprep.subr.mxu0 0.0
    %3133 = vmatpush1.xpose.msra.mxu0 0.0
    %3134 = vmatprep.subr.mxu0 0.0
    %3135 = vmatpush1.xpose.msra.mxu0 0.0
    %3136 = vmatprep.subr.mxu0 0.0
    %3137 = vmatpush1.xpose.msra.mxu0 0.0
    %3138 = vmatprep.subr.mxu0 0.0
    %3139 = vmatpush1.xpose.msra.mxu0 0.0
    %3140 = vmatprep.subr.mxu0 0.0
    %3141 = vmatpush1.xpose.msra.mxu0 0.0
    %3142 = vmatprep.subr.mxu0 0.0
    %3143 = vmatpush1.xpose.msra.mxu0 0.0
    %3144 = vmatprep.subr.mxu0 0.0
    %3145 = vmatpush1.xpose.msra.mxu0 0.0
    %3146 = vmatprep.subr.mxu0 0.0
    %3147 = vmatpush1.xpose.msra.mxu0 0.0
    %3148 = vmatprep.subr.mxu0 0.0
    %3149 = vmatpush1.xpose.msra.mxu0 0.0
    %3150 = vmatprep.subr.mxu0 0.0
    %3151 = vmatpush1.xpose.msra.mxu0 0.0
    %3152 = vmatprep.subr.mxu0 0.0
    %3153 = vmatpush1.xpose.msra.mxu0 0.0
    %3154 = vmatprep.mubr.f32.mxu0 0.0
    %3155 = vmatmul.mubr.f32.gmra.mrb[0].mxu0 %v3084
    %v3156 = vpop.f32.mrb[0].mxu0
    %v3157 = vadd.f32 0.0, %v3156
    %v3158 = vpop.f32.mrb[0].mxu0
    %3159 = vdwg.mxu0
    %v3160 = vsel %vm2417, %v3157, -inf
    %3161 = vmax.xlane.f32.xlu0 %v3160
    %v3162 = vpop.xlane.xlu0 %3161
    %v3163 = vsub.f32 %v3157, %v3162
    %v3164 = vmul.f32 %v3163, 1.442695
    %v3165 = vpow.pop %v3164
    %v3166 = vsel %vm2417, %v3165, 0.0
    %3167 = vadd.xlane.f32.xlu0 %v3166
    %v3168 = vpop.xlane.xlu0 %3167
    %v3169 = vrcp.pop %v3168
    %v3170 = vmul.f32 %v3165, %v3169
    %3171 = vrot.lane.b32.xlu0 %v2315, 72
    %v3172 = vpop.permute.xlu0 %3171
    %3173 = vrot.lane.b32.xlu0 %v2320, 72
    %v3174 = vpop.permute.xlu0 %3173
    %v3177 = vsel %vm2417, %v3170, 0
    %v3179 = vsel %vm2437, %v3174, 0
    %3181 = vmatprep.subr.mxu0 0.0
    %3182 = vmatpush1.msra.mxu0 %v3172
    %3183 = vmatprep.subr.mxu0 0.0
    %3184 = vmatpush1.msra.mxu0 %v3179
    %3185 = vmatprep.subr.mxu0 0.0
    %3186 = vmatpush1.msra.mxu0 0.0
    %3187 = vmatprep.subr.mxu0 0.0
    %3188 = vmatpush1.msra.mxu0 0.0
    %3189 = vmatprep.subr.mxu0 0.0
    %3190 = vmatpush1.msra.mxu0 0.0
    %3191 = vmatprep.subr.mxu0 0.0
    %3192 = vmatpush1.msra.mxu0 0.0
    %3193 = vmatprep.subr.mxu0 0.0
    %3194 = vmatpush1.msra.mxu0 0.0
    %3195 = vmatprep.subr.mxu0 0.0
    %3196 = vmatpush1.msra.mxu0 0.0
    %3197 = vmatprep.subr.mxu0 0.0
    %3198 = vmatpush1.msra.mxu0 0.0
    %3199 = vmatprep.subr.mxu0 0.0
    %3200 = vmatpush1.msra.mxu0 0.0
    %3201 = vmatprep.subr.mxu0 0.0
    %3202 = vmatpush1.msra.mxu0 0.0
    %3203 = vmatprep.subr.mxu0 0.0
    %3204 = vmatpush1.msra.mxu0 0.0
    %3205 = vmatprep.subr.mxu0 0.0
    %3206 = vmatpush1.msra.mxu0 0.0
    %3207 = vmatprep.subr.mxu0 0.0
    %3208 = vmatpush1.msra.mxu0 0.0
    %3209 = vmatprep.subr.mxu0 0.0
    %3210 = vmatpush1.msra.mxu0 0.0
    %3211 = vmatprep.subr.mxu0 0.0
    %3212 = vmatpush1.msra.mxu0 0.0
    %3213 = vmatprep.subr.mxu0 0.0
    %3214 = vmatpush1.msra.mxu0 0.0
    %3215 = vmatprep.subr.mxu0 0.0
    %3216 = vmatpush1.msra.mxu0 0.0
    %3217 = vmatprep.subr.mxu0 0.0
    %3218 = vmatpush1.msra.mxu0 0.0
    %3219 = vmatprep.subr.mxu0 0.0
    %3220 = vmatpush1.msra.mxu0 0.0
    %3221 = vmatprep.subr.mxu0 0.0
    %3222 = vmatpush1.msra.mxu0 0.0
    %3223 = vmatprep.subr.mxu0 0.0
    %3224 = vmatpush1.msra.mxu0 0.0
    %3225 = vmatprep.subr.mxu0 0.0
    %3226 = vmatpush1.msra.mxu0 0.0
    %3227 = vmatprep.subr.mxu0 0.0
    %3228 = vmatpush1.msra.mxu0 0.0
    %3229 = vmatprep.subr.mxu0 0.0
    %3230 = vmatpush1.msra.mxu0 0.0
    %3231 = vmatprep.subr.mxu0 0.0
    %3232 = vmatpush1.msra.mxu0 0.0
    %3233 = vmatprep.subr.mxu0 0.0
    %3234 = vmatpush1.msra.mxu0 0.0
    %3235 = vmatprep.subr.mxu0 0.0
    %3236 = vmatpush1.msra.mxu0 0.0
    %3237 = vmatprep.subr.mxu0 0.0
    %3238 = vmatpush1.msra.mxu0 0.0
    %3239 = vmatprep.subr.mxu0 0.0
    %3240 = vmatpush1.msra.mxu0 0.0
    %3241 = vmatprep.subr.mxu0 0.0
    %3242 = vmatpush1.msra.mxu0 0.0
    %3243 = vmatprep.subr.mxu0 0.0
    %3244 = vmatpush1.msra.mxu0 0.0
    %3245 = vmatprep.mubr.f32.mxu0 0.0
    %3246 = vmatmul.mubr.f32.gmra.mrb[0].mxu0 %v3177
    %v3247 = vpop.f32.mrb[0].mxu0
    %v3248 = vadd.f32 0.0, %v3247
    %v3249 = vpop.f32.mrb[0].mxu0
    %3250 = vdwg.mxu0
    %v3252 = vsel %vm179, %v3248, 0
    %3254 = vmatprep.subr.mxu0 0.0
    %3255 = vmatpush1.msra.mxu0 %v2331
    %3256 = vmatprep.subr.mxu0 0.0
    %3257 = vmatpush1.msra.mxu0 0.0
    %3258 = vmatprep.subr.mxu0 0.0
    %3259 = vmatpush1.msra.mxu0 0.0
    %3260 = vmatprep.subr.mxu0 0.0
    %3261 = vmatpush1.msra.mxu0 0.0
    %3262 = vmatprep.subr.mxu0 0.0
    %3263 = vmatpush1.msra.mxu0 0.0
    %3264 = vmatprep.subr.mxu0 0.0
    %3265 = vmatpush1.msra.mxu0 0.0
    %3266 = vmatprep.subr.mxu0 0.0
    %3267 = vmatpush1.msra.mxu0 0.0
    %3268 = vmatprep.subr.mxu0 0.0
    %3269 = vmatpush1.msra.mxu0 0.0
    %3270 = vmatprep.subr.mxu0 0.0
    %3271 = vmatpush1.msra.mxu0 0.0
    %3272 = vmatprep.subr.mxu0 0.0
    %3273 = vmatpush1.msra.mxu0 0.0
    %3274 = vmatprep.subr.mxu0 0.0
    %3275 = vmatpush1.msra.mxu0 0.0
    %3276 = vmatprep.subr.mxu0 0.0
    %3277 = vmatpush1.msra.mxu0 0.0
    %3278 = vmatprep.subr.mxu0 0.0
    %3279 = vmatpush1.msra.mxu0 0.0
    %3280 = vmatprep.subr.mxu0 0.0
    %3281 = vmatpush1.msra.mxu0 0.0
    %3282 = vmatprep.subr.mxu0 0.0
    %3283 = vmatpush1.msra.mxu0 0.0
    %3284 = vmatprep.subr.mxu0 0.0
    %3285 = vmatpush1.msra.mxu0 0.0
    %3286 = vmatprep.subr.mxu0 0.0
    %3287 = vmatpush1.msra.mxu0 0.0
    %3288 = vmatprep.subr.mxu0 0.0
    %3289 = vmatpush1.msra.mxu0 0.0
    %3290 = vmatprep.subr.mxu0 0.0
    %3291 = vmatpush1.msra.mxu0 0.0
    %3292 = vmatprep.subr.mxu0 0.0
    %3293 = vmatpush1.msra.mxu0 0.0
    %3294 = vmatprep.subr.mxu0 0.0
    %3295 = vmatpush1.msra.mxu0 0.0
    %3296 = vmatprep.subr.mxu0 0.0
    %3297 = vmatpush1.msra.mxu0 0.0
    %3298 = vmatprep.subr.mxu0 0.0
    %3299 = vmatpush1.msra.mxu0 0.0
    %3300 = vmatprep.subr.mxu0 0.0
    %3301 = vmatpush1.msra.mxu0 0.0
    %3302 = vmatprep.subr.mxu0 0.0
    %3303 = vmatpush1.msra.mxu0 0.0
    %3304 = vmatprep.subr.mxu0 0.0
    %3305 = vmatpush1.msra.mxu0 0.0
    %3306 = vmatprep.subr.mxu0 0.0
    %3307 = vmatpush1.msra.mxu0 0.0
    %3308 = vmatprep.subr.mxu0 0.0
    %3309 = vmatpush1.msra.mxu0 0.0
    %3310 = vmatprep.subr.mxu0 0.0
    %3311 = vmatpush1.msra.mxu0 0.0
    %3312 = vmatprep.subr.mxu0 0.0
    %3313 = vmatpush1.msra.mxu0 0.0
    %3314 = vmatprep.subr.mxu0 0.0
    %3315 = vmatpush1.msra.mxu0 0.0
    %3316 = vmatprep.subr.mxu0 0.0
    %3317 = vmatpush1.msra.mxu0 0.0
    %3318 = vmatprep.mubr.f32.mxu0 0.0
    %3319 = vmatmul.mubr.f32.gmra.mrb[0].mxu0 %v3252
    %v3320 = vpop.f32.mrb[0].mxu0
    %v3321 = vadd.f32 0.0, %v3320
    %v3322 = vpop.f32.mrb[0].mxu0
    %3323 = vdwg.mxu0
    %v3324 = vadd.f32 %v3077, %v3321
    %3325 = vst.msk [vmem:[#allocation2] sm:$0xff] %vm84, %v3324
    %v3326 = vadd.f32 %v2136, %v2336
    %vm3328 = vcmask 1045504
    %v3329 = vrot.slane %v2320, 2
    %v3330 = vrot.slane %v2325, 2
    %v3331 = vsel %vm3328, %v3329, %v3330
    %v3333 = vsel %vm179, %v2227, 0
    %v3335 = vsel %vm179, %v3331, 0
    %v3337 = vsel %vm179, %v3330, 0
    %3339 = vmatprep.subr.mxu0 0.0
    %3340 = vmatpush1.xpose.msra.mxu0 %v3335
    %3341 = vmatprep.subr.mxu0 0.0
    %3342 = vmatpush1.xpose.msra.mxu0 %v3337
    %3343 = vmatprep.subr.mxu0 0.0
    %3344 = vmatpush1.xpose.msra.mxu0 0.0
    %3345 = vmatprep.subr.mxu0 0.0
    %3346 = vmatpush1.xpose.msra.mxu0 0.0
    %3347 = vmatprep.subr.mxu0 0.0
    %3348 = vmatpush1.xpose.msra.mxu0 0.0
    %3349 = vmatprep.subr.mxu0 0.0
    %3350 = vmatpush1.xpose.msra.mxu0 0.0
    %3351 = vmatprep.subr.mxu0 0.0
    %3352 = vmatpush1.xpose.msra.mxu0 0.0
    %3353 = vmatprep.subr.mxu0 0.0
    %3354 = vmatpush1.xpose.msra.mxu0 0.0
    %3355 = vmatprep.subr.mxu0 0.0
    %3356 = vmatpush1.xpose.msra.mxu0 0.0
    %3357 = vmatprep.subr.mxu0 0.0
    %3358 = vmatpush1.xpose.msra.mxu0 0.0
    %3359 = vmatprep.subr.mxu0 0.0
    %3360 = vmatpush1.xpose.msra.mxu0 0.0
    %3361 = vmatprep.subr.mxu0 0.0
    %3362 = vmatpush1.xpose.msra.mxu0 0.0
    %3363 = vmatprep.subr.mxu0 0.0
    %3364 = vmatpush1.xpose.msra.mxu0 0.0
    %3365 = vmatprep.subr.mxu0 0.0
    %3366 = vmatpush1.xpose.msra.mxu0 0.0
    %3367 = vmatprep.subr.mxu0 0.0
    %3368 = vmatpush1.xpose.msra.mxu0 0.0
    %3369 = vmatprep.subr.mxu0 0.0
    %3370 = vmatpush1.xpose.msra.mxu0 0.0
    %3371 = vmatprep.subr.mxu0 0.0
    %3372 = vmatpush1.xpose.msra.mxu0 0.0
    %3373 = vmatprep.subr.mxu0 0.0
    %3374 = vmatpush1.xpose.msra.mxu0 0.0
    %3375 = vmatprep.subr.mxu0 0.0
    %3376 = vmatpush1.xpose.msra.mxu0 0.0
    %3377 = vmatprep.subr.mxu0 0.0
    %3378 = vmatpush1.xpose.msra.mxu0 0.0
    %3379 = vmatprep.subr.mxu0 0.0
    %3380 = vmatpush1.xpose.msra.mxu0 0.0
    %3381 = vmatprep.subr.mxu0 0.0
    %3382 = vmatpush1.xpose.msra.mxu0 0.0
    %3383 = vmatprep.subr.mxu0 0.0
    %3384 = vmatpush1.xpose.msra.mxu0 0.0
    %3385 = vmatprep.subr.mxu0 0.0
    %3386 = vmatpush1.xpose.msra.mxu0 0.0
    %3387 = vmatprep.subr.mxu0 0.0
    %3388 = vmatpush1.xpose.msra.mxu0 0.0
    %3389 = vmatprep.subr.mxu0 0.0
    %3390 = vmatpush1.xpose.msra.mxu0 0.0
    %3391 = vmatprep.subr.mxu0 0.0
    %3392 = vmatpush1.xpose.msra.mxu0 0.0
    %3393 = vmatprep.subr.mxu0 0.0
    %3394 = vmatpush1.xpose.msra.mxu0 0.0
    %3395 = vmatprep.subr.mxu0 0.0
    %3396 = vmatpush1.xpose.msra.mxu0 0.0
    %3397 = vmatprep.subr.mxu0 0.0
    %3398 = vmatpush1.xpose.msra.mxu0 0.0
    %3399 = vmatprep.subr.mxu0 0.0
    %3400 = vmatpush1.xpose.msra.mxu0 0.0
    %3401 = vmatprep.subr.mxu0 0.0
    %3402 = vmatpush1.xpose.msra.mxu0 0.0
    %3403 = vmatprep.mubr.f32.mxu0 0.0
    %3404 = vmatmul.mubr.f32.gmra.mrb[0].mxu0 %v3333
    %v3405 = vpop.f32.mrb[0].mxu0
    %v3406 = vadd.f32 0.0, %v3405
    %v3407 = vpop.f32.mrb[0].mxu0
    %3408 = vdwg.mxu0
    %v3409 = vsel %vm2417, %v3406, -inf
    %3410 = vmax.xlane.f32.xlu0 %v3409
    %v3411 = vpop.xlane.xlu0 %3410
    %v3412 = vsub.f32 %v3406, %v3411
    %v3413 = vmul.f32 %v3412, 1.442695
    %v3414 = vpow.pop %v3413
    %v3415 = vsel %vm2417, %v3414, 0.0
    %3416 = vadd.xlane.f32.xlu0 %v3415
    %v3417 = vpop.xlane.xlu0 %3416
    %v3418 = vrcp.pop %v3417
    %v3419 = vmul.f32 %v3414, %v3418
    %3420 = vrot.lane.b32.xlu0 %v3331, 96
    %v3421 = vpop.permute.xlu0 %3420
    %3422 = vrot.lane.b32.xlu0 %v3330, 96
    %v3423 = vpop.permute.xlu0 %3422
    %v3426 = vsel %vm2417, %v3419, 0
    %v3428 = vsel %vm2437, %v3423, 0
    %3430 = vmatprep.subr.mxu0 0.0
    %3431 = vmatpush1.msra.mxu0 %v3421
    %3432 = vmatprep.subr.mxu0 0.0
    %3433 = vmatpush1.msra.mxu0 %v3428
    %3434 = vmatprep.subr.mxu0 0.0
    %3435 = vmatpush1.msra.mxu0 0.0
    %3436 = vmatprep.subr.mxu0 0.0
    %3437 = vmatpush1.msra.mxu0 0.0
    %3438 = vmatprep.subr.mxu0 0.0
    %3439 = vmatpush1.msra.mxu0 0.0
    %3440 = vmatprep.subr.mxu0 0.0
    %3441 = vmatpush1.msra.mxu0 0.0
    %3442 = vmatprep.subr.mxu0 0.0
    %3443 = vmatpush1.msra.mxu0 0.0
    %3444 = vmatprep.subr.mxu0 0.0
    %3445 = vmatpush1.msra.mxu0 0.0
    %3446 = vmatprep.subr.mxu0 0.0
    %3447 = vmatpush1.msra.mxu0 0.0
    %3448 = vmatprep.subr.mxu0 0.0
    %3449 = vmatpush1.msra.mxu0 0.0
    %3450 = vmatprep.subr.mxu0 0.0
    %3451 = vmatpush1.msra.mxu0 0.0
    %3452 = vmatprep.subr.mxu0 0.0
    %3453 = vmatpush1.msra.mxu0 0.0
    %3454 = vmatprep.subr.mxu0 0.0
    %3455 = vmatpush1.msra.mxu0 0.0
    %3456 = vmatprep.subr.mxu0 0.0
    %3457 = vmatpush1.msra.mxu0 0.0
    %3458 = vmatprep.subr.mxu0 0.0
    %3459 = vmatpush1.msra.mxu0 0.0
    %3460 = vmatprep.subr.mxu0 0.0
    %3461 = vmatpush1.msra.mxu0 0.0
    %3462 = vmatprep.subr.mxu0 0.0
    %3463 = vmatpush1.msra.mxu0 0.0
    %3464 = vmatprep.subr.mxu0 0.0
    %3465 = vmatpush1.msra.mxu0 0.0
    %3466 = vmatprep.subr.mxu0 0.0
    %3467 = vmatpush1.msra.mxu0 0.0
    %3468 = vmatprep.subr.mxu0 0.0
    %3469 = vmatpush1.msra.mxu0 0.0
    %3470 = vmatprep.subr.mxu0 0.0
    %3471 = vmatpush1.msra.mxu0 0.0
    %3472 = vmatprep.subr.mxu0 0.0
    %3473 = vmatpush1.msra.mxu0 0.0
    %3474 = vmatprep.subr.mxu0 0.0
    %3475 = vmatpush1.msra.mxu0 0.0
    %3476 = vmatprep.subr.mxu0 0.0
    %3477 = vmatpush1.msra.mxu0 0.0
    %3478 = vmatprep.subr.mxu0 0.0
    %3479 = vmatpush1.msra.mxu0 0.0
    %3480 = vmatprep.subr.mxu0 0.0
    %3481 = vmatpush1.msra.mxu0 0.0
    %3482 = vmatprep.subr.mxu0 0.0
    %3483 = vmatpush1.msra.mxu0 0.0
    %3484 = vmatprep.subr.mxu0 0.0
    %3485 = vmatpush1.msra.mxu0 0.0
    %3486 = vmatprep.subr.mxu0 0.0
    %3487 = vmatpush1.msra.mxu0 0.0
    %3488 = vmatprep.subr.mxu0 0.0
    %3489 = vmatpush1.msra.mxu0 0.0
    %3490 = vmatprep.subr.mxu0 0.0
    %3491 = vmatpush1.msra.mxu0 0.0
    %3492 = vmatprep.subr.mxu0 0.0
    %3493 = vmatpush1.msra.mxu0 0.0
    %3494 = vmatprep.mubr.f32.mxu0 0.0
    %3495 = vmatmul.mubr.f32.gmra.mrb[0].mxu0 %v3426
    %v3496 = vpop.f32.mrb[0].mxu0
    %v3497 = vadd.f32 0.0, %v3496
    %v3498 = vpop.f32.mrb[0].mxu0
    %3499 = vdwg.mxu0
    %v3501 = vsel %vm179, %v3497, 0
    %3503 = vmatprep.subr.mxu0 0.0
    %3504 = vmatpush1.msra.mxu0 %v2328
    %3505 = vmatprep.subr.mxu0 0.0
    %3506 = vmatpush1.msra.mxu0 0.0
    %3507 = vmatprep.subr.mxu0 0.0
    %3508 = vmatpush1.msra.mxu0 0.0
    %3509 = vmatprep.subr.mxu0 0.0
    %3510 = vmatpush1.msra.mxu0 0.0
    %3511 = vmatprep.subr.mxu0 0.0
    %3512 = vmatpush1.msra.mxu0 0.0
    %3513 = vmatprep.subr.mxu0 0.0
    %3514 = vmatpush1.msra.mxu0 0.0
    %3515 = vmatprep.subr.mxu0 0.0
    %3516 = vmatpush1.msra.mxu0 0.0
    %3517 = vmatprep.subr.mxu0 0.0
    %3518 = vmatpush1.msra.mxu0 0.0
    %3519 = vmatprep.subr.mxu0 0.0
    %3520 = vmatpush1.msra.mxu0 0.0
    %3521 = vmatprep.subr.mxu0 0.0
    %3522 = vmatpush1.msra.mxu0 0.0
    %3523 = vmatprep.subr.mxu0 0.0
    %3524 = vmatpush1.msra.mxu0 0.0
    %3525 = vmatprep.subr.mxu0 0.0
    %3526 = vmatpush1.msra.mxu0 0.0
    %3527 = vmatprep.subr.mxu0 0.0
    %3528 = vmatpush1.msra.mxu0 0.0
    %3529 = vmatprep.subr.mxu0 0.0
    %3530 = vmatpush1.msra.mxu0 0.0
    %3531 = vmatprep.subr.mxu0 0.0
    %3532 = vmatpush1.msra.mxu0 0.0
    %3533 = vmatprep.subr.mxu0 0.0
    %3534 = vmatpush1.msra.mxu0 0.0
    %3535 = vmatprep.subr.mxu0 0.0
    %3536 = vmatpush1.msra.mxu0 0.0
    %3537 = vmatprep.subr.mxu0 0.0
    %3538 = vmatpush1.msra.mxu0 0.0
    %3539 = vmatprep.subr.mxu0 0.0
    %3540 = vmatpush1.msra.mxu0 0.0
    %3541 = vmatprep.subr.mxu0 0.0
    %3542 = vmatpush1.msra.mxu0 0.0
    %3543 = vmatprep.subr.mxu0 0.0
    %3544 = vmatpush1.msra.mxu0 0.0
    %3545 = vmatprep.subr.mxu0 0.0
    %3546 = vmatpush1.msra.mxu0 0.0
    %3547 = vmatprep.subr.mxu0 0.0
    %3548 = vmatpush1.msra.mxu0 0.0
    %3549 = vmatprep.subr.mxu0 0.0
    %3550 = vmatpush1.msra.mxu0 0.0
    %3551 = vmatprep.subr.mxu0 0.0
    %3552 = vmatpush1.msra.mxu0 0.0
    %3553 = vmatprep.subr.mxu0 0.0
    %3554 = vmatpush1.msra.mxu0 0.0
    %3555 = vmatprep.subr.mxu0 0.0
    %3556 = vmatpush1.msra.mxu0 0.0
    %3557 = vmatprep.subr.mxu0 0.0
    %3558 = vmatpush1.msra.mxu0 0.0
    %3559 = vmatprep.subr.mxu0 0.0
    %3560 = vmatpush1.msra.mxu0 0.0
    %3561 = vmatprep.subr.mxu0 0.0
    %3562 = vmatpush1.msra.mxu0 0.0
    %3563 = vmatprep.subr.mxu0 0.0
    %3564 = vmatpush1.msra.mxu0 0.0
    %3565 = vmatprep.subr.mxu0 0.0
    %3566 = vmatpush1.msra.mxu0 0.0
    %3567 = vmatprep.mubr.f32.mxu0 0.0
    %3568 = vmatmul.mubr.f32.gmra.mrb[0].mxu0 %v3501
    %v3569 = vpop.f32.mrb[0].mxu0
    %v3570 = vadd.f32 0.0, %v3569
    %v3571 = vpop.f32.mrb[0].mxu0
    %3572 = vdwg.mxu0
    %v3573 = vadd.f32 %v3326, %v3570
    %3574 = vrot.lane.b32.xlu0 %v2227, 120
    %v3575 = vpop.permute.xlu0 %3574
    %3576 = vrot.lane.b32.xlu0 %v3331, 120
    %v3577 = vpop.permute.xlu0 %3576
    %3578 = vrot.lane.b32.xlu0 %v3330, 120
    %v3579 = vpop.permute.xlu0 %3578
    %v3580 = vsel %vm179, %v3575, 0
    %v3582 = vsel %vm179, %v3577, 0
    %v3584 = vsel %vm179, %v3579, 0
    %3586 = vmatprep.subr.mxu0 0.0
    %3587 = vmatpush1.xpose.msra.mxu0 %v3582
    %3588 = vmatprep.subr.mxu0 0.0
    %3589 = vmatpush1.xpose.msra.mxu0 %v3584
    %3590 = vmatprep.subr.mxu0 0.0
    %3591 = vmatpush1.xpose.msra.mxu0 0.0
    %3592 = vmatprep.subr.mxu0 0.0
    %3593 = vmatpush1.xpose.msra.mxu0 0.0
    %3594 = vmatprep.subr.mxu0 0.0
    %3595 = vmatpush1.xpose.msra.mxu0 0.0
    %3596 = vmatprep.subr.mxu0 0.0
    %3597 = vmatpush1.xpose.msra.mxu0 0.0
    %3598 = vmatprep.subr.mxu0 0.0
    %3599 = vmatpush1.xpose.msra.mxu0 0.0
    %3600 = vmatprep.subr.mxu0 0.0
    %3601 = vmatpush1.xpose.msra.mxu0 0.0
    %3602 = vmatprep.subr.mxu0 0.0
    %3603 = vmatpush1.xpose.msra.mxu0 0.0
    %3604 = vmatprep.subr.mxu0 0.0
    %3605 = vmatpush1.xpose.msra.mxu0 0.0
    %3606 = vmatprep.subr.mxu0 0.0
    %3607 = vmatpush1.xpose.msra.mxu0 0.0
    %3608 = vmatprep.subr.mxu0 0.0
    %3609 = vmatpush1.xpose.msra.mxu0 0.0
    %3610 = vmatprep.subr.mxu0 0.0
    %3611 = vmatpush1.xpose.msra.mxu0 0.0
    %3612 = vmatprep.subr.mxu0 0.0
    %3613 = vmatpush1.xpose.msra.mxu0 0.0
    %3614 = vmatprep.subr.mxu0 0.0
    %3615 = vmatpush1.xpose.msra.mxu0 0.0
    %3616 = vmatprep.subr.mxu0 0.0
    %3617 = vmatpush1.xpose.msra.mxu0 0.0
    %3618 = vmatprep.subr.mxu0 0.0
    %3619 = vmatpush1.xpose.msra.mxu0 0.0
    %3620 = vmatprep.subr.mxu0 0.0
    %3621 = vmatpush1.xpose.msra.mxu0 0.0
    %3622 = vmatprep.subr.mxu0 0.0
    %3623 = vmatpush1.xpose.msra.mxu0 0.0
    %3624 = vmatprep.subr.mxu0 0.0
    %3625 = vmatpush1.xpose.msra.mxu0 0.0
    %3626 = vmatprep.subr.mxu0 0.0
    %3627 = vmatpush1.xpose.msra.mxu0 0.0
    %3628 = vmatprep.subr.mxu0 0.0
    %3629 = vmatpush1.xpose.msra.mxu0 0.0
    %3630 = vmatprep.subr.mxu0 0.0
    %3631 = vmatpush1.xpose.msra.mxu0 0.0
    %3632 = vmatprep.subr.mxu0 0.0
    %3633 = vmatpush1.xpose.msra.mxu0 0.0
    %3634 = vmatprep.subr.mxu0 0.0
    %3635 = vmatpush1.xpose.msra.mxu0 0.0
    %3636 = vmatprep.subr.mxu0 0.0
    %3637 = vmatpush1.xpose.msra.mxu0 0.0
    %3638 = vmatprep.subr.mxu0 0.0
    %3639 = vmatpush1.xpose.msra.mxu0 0.0
    %3640 = vmatprep.subr.mxu0 0.0
    %3641 = vmatpush1.xpose.msra.mxu0 0.0
    %3642 = vmatprep.subr.mxu0 0.0
    %3643 = vmatpush1.xpose.msra.mxu0 0.0
    %3644 = vmatprep.subr.mxu0 0.0
    %3645 = vmatpush1.xpose.msra.mxu0 0.0
    %3646 = vmatprep.subr.mxu0 0.0
    %3647 = vmatpush1.xpose.msra.mxu0 0.0
    %3648 = vmatprep.subr.mxu0 0.0
    %3649 = vmatpush1.xpose.msra.mxu0 0.0
    %3650 = vmatprep.mubr.f32.mxu0 0.0
    %3651 = vmatmul.mubr.f32.gmra.mrb[0].mxu0 %v3580
    %v3652 = vpop.f32.mrb[0].mxu0
    %v3653 = vadd.f32 0.0, %v3652
    %v3654 = vpop.f32.mrb[0].mxu0
    %3655 = vdwg.mxu0
    %v3656 = vsel %vm2417, %v3653, -inf
    %3657 = vmax.xlane.f32.xlu0 %v3656
    %v3658 = vpop.xlane.xlu0 %3657
    %v3659 = vsub.f32 %v3653, %v3658
    %v3660 = vmul.f32 %v3659, 1.442695
    %v3661 = vpow.pop %v3660
    %v3662 = vsel %vm2417, %v3661, 0.0
    %3663 = vadd.xlane.f32.xlu0 %v3662
    %v3664 = vpop.xlane.xlu0 %3663
    %v3665 = vrcp.pop %v3664
    %v3666 = vmul.f32 %v3661, %v3665
    %3667 = vrot.lane.b32.xlu0 %v3331, 88
    %v3668 = vpop.permute.xlu0 %3667
    %3669 = vrot.lane.b32.xlu0 %v3330, 88
    %v3670 = vpop.permute.xlu0 %3669
    %v3673 = vsel %vm2417, %v3666, 0
    %v3675 = vsel %vm2437, %v3670, 0
    %3677 = vmatprep.subr.mxu0 0.0
    %3678 = vmatpush1.msra.mxu0 %v3668
    %3679 = vmatprep.subr.mxu0 0.0
    %3680 = vmatpush1.msra.mxu0 %v3675
    %3681 = vmatprep.subr.mxu0 0.0
    %3682 = vmatpush1.msra.mxu0 0.0
    %3683 = vmatprep.subr.mxu0 0.0
    %3684 = vmatpush1.msra.mxu0 0.0
    %3685 = vmatprep.subr.mxu0 0.0
    %3686 = vmatpush1.msra.mxu0 0.0
    %3687 = vmatprep.subr.mxu0 0.0
    %3688 = vmatpush1.msra.mxu0 0.0
    %3689 = vmatprep.subr.mxu0 0.0
    %3690 = vmatpush1.msra.mxu0 0.0
    %3691 = vmatprep.subr.mxu0 0.0
    %3692 = vmatpush1.msra.mxu0 0.0
    %3693 = vmatprep.subr.mxu0 0.0
    %3694 = vmatpush1.msra.mxu0 0.0
    %3695 = vmatprep.subr.mxu0 0.0
    %3696 = vmatpush1.msra.mxu0 0.0
    %3697 = vmatprep.subr.mxu0 0.0
    %3698 = vmatpush1.msra.mxu0 0.0
    %3699 = vmatprep.subr.mxu0 0.0
    %3700 = vmatpush1.msra.mxu0 0.0
    %3701 = vmatprep.subr.mxu0 0.0
    %3702 = vmatpush1.msra.mxu0 0.0
    %3703 = vmatprep.subr.mxu0 0.0
    %3704 = vmatpush1.msra.mxu0 0.0
    %3705 = vmatprep.subr.mxu0 0.0
    %3706 = vmatpush1.msra.mxu0 0.0
    %3707 = vmatprep.subr.mxu0 0.0
    %3708 = vmatpush1.msra.mxu0 0.0
    %3709 = vmatprep.subr.mxu0 0.0
    %3710 = vmatpush1.msra.mxu0 0.0
    %3711 = vmatprep.subr.mxu0 0.0
    %3712 = vmatpush1.msra.mxu0 0.0
    %3713 = vmatprep.subr.mxu0 0.0
    %3714 = vmatpush1.msra.mxu0 0.0
    %3715 = vmatprep.subr.mxu0 0.0
    %3716 = vmatpush1.msra.mxu0 0.0
    %3717 = vmatprep.subr.mxu0 0.0
    %3718 = vmatpush1.msra.mxu0 0.0
    %3719 = vmatprep.subr.mxu0 0.0
    %3720 = vmatpush1.msra.mxu0 0.0
    %3721 = vmatprep.subr.mxu0 0.0
    %3722 = vmatpush1.msra.mxu0 0.0
    %3723 = vmatprep.subr.mxu0 0.0
    %3724 = vmatpush1.msra.mxu0 0.0
    %3725 = vmatprep.subr.mxu0 0.0
    %3726 = vmatpush1.msra.mxu0 0.0
    %3727 = vmatprep.subr.mxu0 0.0
    %3728 = vmatpush1.msra.mxu0 0.0
    %3729 = vmatprep.subr.mxu0 0.0
    %3730 = vmatpush1.msra.mxu0 0.0
    %3731 = vmatprep.subr.mxu0 0.0
    %3732 = vmatpush1.msra.mxu0 0.0
    %3733 = vmatprep.subr.mxu0 0.0
    %3734 = vmatpush1.msra.mxu0 0.0
    %3735 = vmatprep.subr.mxu0 0.0
    %3736 = vmatpush1.msra.mxu0 0.0
    %3737 = vmatprep.subr.mxu0 0.0
    %3738 = vmatpush1.msra.mxu0 0.0
    %3739 = vmatprep.subr.mxu0 0.0
    %3740 = vmatpush1.msra.mxu0 0.0
    %3741 = vmatprep.mubr.f32.mxu0 0.0
    %3742 = vmatmul.mubr.f32.gmra.mrb[0].mxu0 %v3673
    %v3743 = vpop.f32.mrb[0].mxu0
    %v3744 = vadd.f32 0.0, %v3743
    %v3745 = vpop.f32.mrb[0].mxu0
    %3746 = vdwg.mxu0
    %v3748 = vsel %vm179, %v3744, 0
    %3750 = vmatprep.subr.mxu0 0.0
    %3751 = vmatpush1.msra.mxu0 %v2329
    %3752 = vmatprep.subr.mxu0 0.0
    %3753 = vmatpush1.msra.mxu0 0.0
    %3754 = vmatprep.subr.mxu0 0.0
    %3755 = vmatpush1.msra.mxu0 0.0
    %3756 = vmatprep.subr.mxu0 0.0
    %3757 = vmatpush1.msra.mxu0 0.0
    %3758 = vmatprep.subr.mxu0 0.0
    %3759 = vmatpush1.msra.mxu0 0.0
    %3760 = vmatprep.subr.mxu0 0.0
    %3761 = vmatpush1.msra.mxu0 0.0
    %3762 = vmatprep.subr.mxu0 0.0
    %3763 = vmatpush1.msra.mxu0 0.0
    %3764 = vmatprep.subr.mxu0 0.0
    %3765 = vmatpush1.msra.mxu0 0.0
    %3766 = vmatprep.subr.mxu0 0.0
    %3767 = vmatpush1.msra.mxu0 0.0
    %3768 = vmatprep.subr.mxu0 0.0
    %3769 = vmatpush1.msra.mxu0 0.0
    %3770 = vmatprep.subr.mxu0 0.0
    %3771 = vmatpush1.msra.mxu0 0.0
    %3772 = vmatprep.subr.mxu0 0.0
    %3773 = vmatpush1.msra.mxu0 0.0
    %3774 = vmatprep.subr.mxu0 0.0
    %3775 = vmatpush1.msra.mxu0 0.0
    %3776 = vmatprep.subr.mxu0 0.0
    %3777 = vmatpush1.msra.mxu0 0.0
    %3778 = vmatprep.subr.mxu0 0.0
    %3779 = vmatpush1.msra.mxu0 0.0
    %3780 = vmatprep.subr.mxu0 0.0
    %3781 = vmatpush1.msra.mxu0 0.0
    %3782 = vmatprep.subr.mxu0 0.0
    %3783 = vmatpush1.msra.mxu0 0.0
    %3784 = vmatprep.subr.mxu0 0.0
    %3785 = vmatpush1.msra.mxu0 0.0
    %3786 = vmatprep.subr.mxu0 0.0
    %3787 = vmatpush1.msra.mxu0 0.0
    %3788 = vmatprep.subr.mxu0 0.0
    %3789 = vmatpush1.msra.mxu0 0.0
    %3790 = vmatprep.subr.mxu0 0.0
    %3791 = vmatpush1.msra.mxu0 0.0
    %3792 = vmatprep.subr.mxu0 0.0
    %3793 = vmatpush1.msra.mxu0 0.0
    %3794 = vmatprep.subr.mxu0 0.0
    %3795 = vmatpush1.msra.mxu0 0.0
    %3796 = vmatprep.subr.mxu0 0.0
    %3797 = vmatpush1.msra.mxu0 0.0
    %3798 = vmatprep.subr.mxu0 0.0
    %3799 = vmatpush1.msra.mxu0 0.0
    %3800 = vmatprep.subr.mxu0 0.0
    %3801 = vmatpush1.msra.mxu0 0.0
    %3802 = vmatprep.subr.mxu0 0.0
    %3803 = vmatpush1.msra.mxu0 0.0
    %3804 = vmatprep.subr.mxu0 0.0
    %3805 = vmatpush1.msra.mxu0 0.0
    %3806 = vmatprep.subr.mxu0 0.0
    %3807 = vmatpush1.msra.mxu0 0.0
    %3808 = vmatprep.subr.mxu0 0.0
    %3809 = vmatpush1.msra.mxu0 0.0
    %3810 = vmatprep.subr.mxu0 0.0
    %3811 = vmatpush1.msra.mxu0 0.0
    %3812 = vmatprep.subr.mxu0 0.0
    %3813 = vmatpush1.msra.mxu0 0.0
    %3814 = vmatprep.mubr.f32.mxu0 0.0
    %3815 = vmatmul.mubr.f32.gmra.mrb[0].mxu0 %v3748
    %v3816 = vpop.f32.mrb[0].mxu0
    %v3817 = vadd.f32 0.0, %v3816
    %v3818 = vpop.f32.mrb[0].mxu0
    %3819 = vdwg.mxu0
    %v3820 = vadd.f32 %v3573, %v3817
    %3821 = vrot.lane.b32.xlu0 %v2227, 112
    %v3822 = vpop.permute.xlu0 %3821
    %3823 = vrot.lane.b32.xlu0 %v3331, 112
    %v3824 = vpop.permute.xlu0 %3823
    %3825 = vrot.lane.b32.xlu0 %v3330, 112
    %v3826 = vpop.permute.xlu0 %3825
    %v3827 = vsel %vm179, %v3822, 0
    %v3829 = vsel %vm179, %v3824, 0
    %v3831 = vsel %vm179, %v3826, 0
    %3833 = vmatprep.subr.mxu0 0.0
    %3834 = vmatpush1.xpose.msra.mxu0 %v3829
    %3835 = vmatprep.subr.mxu0 0.0
    %3836 = vmatpush1.xpose.msra.mxu0 %v3831
    %3837 = vmatprep.subr.mxu0 0.0
    %3838 = vmatpush1.xpose.msra.mxu0 0.0
    %3839 = vmatprep.subr.mxu0 0.0
    %3840 = vmatpush1.xpose.msra.mxu0 0.0
    %3841 = vmatprep.subr.mxu0 0.0
    %3842 = vmatpush1.xpose.msra.mxu0 0.0
    %3843 = vmatprep.subr.mxu0 0.0
    %3844 = vmatpush1.xpose.msra.mxu0 0.0
    %3845 = vmatprep.subr.mxu0 0.0
    %3846 = vmatpush1.xpose.msra.mxu0 0.0
    %3847 = vmatprep.subr.mxu0 0.0
    %3848 = vmatpush1.xpose.msra.mxu0 0.0
    %3849 = vmatprep.subr.mxu0 0.0
    %3850 = vmatpush1.xpose.msra.mxu0 0.0
    %3851 = vmatprep.subr.mxu0 0.0
    %3852 = vmatpush1.xpose.msra.mxu0 0.0
    %3853 = vmatprep.subr.mxu0 0.0
    %3854 = vmatpush1.xpose.msra.mxu0 0.0
    %3855 = vmatprep.subr.mxu0 0.0
    %3856 = vmatpush1.xpose.msra.mxu0 0.0
    %3857 = vmatprep.subr.mxu0 0.0
    %3858 = vmatpush1.xpose.msra.mxu0 0.0
    %3859 = vmatprep.subr.mxu0 0.0
    %3860 = vmatpush1.xpose.msra.mxu0 0.0
    %3861 = vmatprep.subr.mxu0 0.0
    %3862 = vmatpush1.xpose.msra.mxu0 0.0
    %3863 = vmatprep.subr.mxu0 0.0
    %3864 = vmatpush1.xpose.msra.mxu0 0.0
    %3865 = vmatprep.subr.mxu0 0.0
    %3866 = vmatpush1.xpose.msra.mxu0 0.0
    %3867 = vmatprep.subr.mxu0 0.0
    %3868 = vmatpush1.xpose.msra.mxu0 0.0
    %3869 = vmatprep.subr.mxu0 0.0
    %3870 = vmatpush1.xpose.msra.mxu0 0.0
    %3871 = vmatprep.subr.mxu0 0.0
    %3872 = vmatpush1.xpose.msra.mxu0 0.0
    %3873 = vmatprep.subr.mxu0 0.0
    %3874 = vmatpush1.xpose.msra.mxu0 0.0
    %3875 = vmatprep.subr.mxu0 0.0
    %3876 = vmatpush1.xpose.msra.mxu0 0.0
    %3877 = vmatprep.subr.mxu0 0.0
    %3878 = vmatpush1.xpose.msra.mxu0 0.0
    %3879 = vmatprep.subr.mxu0 0.0
    %3880 = vmatpush1.xpose.msra.mxu0 0.0
    %3881 = vmatprep.subr.mxu0 0.0
    %3882 = vmatpush1.xpose.msra.mxu0 0.0
    %3883 = vmatprep.subr.mxu0 0.0
    %3884 = vmatpush1.xpose.msra.mxu0 0.0
    %3885 = vmatprep.subr.mxu0 0.0
    %3886 = vmatpush1.xpose.msra.mxu0 0.0
    %3887 = vmatprep.subr.mxu0 0.0
    %3888 = vmatpush1.xpose.msra.mxu0 0.0
    %3889 = vmatprep.subr.mxu0 0.0
    %3890 = vmatpush1.xpose.msra.mxu0 0.0
    %3891 = vmatprep.subr.mxu0 0.0
    %3892 = vmatpush1.xpose.msra.mxu0 0.0
    %3893 = vmatprep.subr.mxu0 0.0
    %3894 = vmatpush1.xpose.msra.mxu0 0.0
    %3895 = vmatprep.subr.mxu0 0.0
    %3896 = vmatpush1.xpose.msra.mxu0 0.0
    %3897 = vmatprep.mubr.f32.mxu0 0.0
    %3898 = vmatmul.mubr.f32.gmra.mrb[0].mxu0 %v3827
    %v3899 = vpop.f32.mrb[0].mxu0
    %v3900 = vadd.f32 0.0, %v3899
    %v3901 = vpop.f32.mrb[0].mxu0
    %3902 = vdwg.mxu0
    %v3903 = vsel %vm2417, %v3900, -inf
    %3904 = vmax.xlane.f32.xlu0 %v3903
    %v3905 = vpop.xlane.xlu0 %3904
    %v3906 = vsub.f32 %v3900, %v3905
    %v3907 = vmul.f32 %v3906, 1.442695
    %v3908 = vpow.pop %v3907
    %v3909 = vsel %vm2417, %v3908, 0.0
    %3910 = vadd.xlane.f32.xlu0 %v3909
    %v3911 = vpop.xlane.xlu0 %3910
    %v3912 = vrcp.pop %v3911
    %v3913 = vmul.f32 %v3908, %v3912
    %3914 = vrot.lane.b32.xlu0 %v3331, 80
    %v3915 = vpop.permute.xlu0 %3914
    %3916 = vrot.lane.b32.xlu0 %v3330, 80
    %v3917 = vpop.permute.xlu0 %3916
    %v3920 = vsel %vm2417, %v3913, 0
    %v3922 = vsel %vm2437, %v3917, 0
    %3924 = vmatprep.subr.mxu0 0.0
    %3925 = vmatpush1.msra.mxu0 %v3915
    %3926 = vmatprep.subr.mxu0 0.0
    %3927 = vmatpush1.msra.mxu0 %v3922
    %3928 = vmatprep.subr.mxu0 0.0
    %3929 = vmatpush1.msra.mxu0 0.0
    %3930 = vmatprep.subr.mxu0 0.0
    %3931 = vmatpush1.msra.mxu0 0.0
    %3932 = vmatprep.subr.mxu0 0.0
    %3933 = vmatpush1.msra.mxu0 0.0
    %3934 = vmatprep.subr.mxu0 0.0
    %3935 = vmatpush1.msra.mxu0 0.0
    %3936 = vmatprep.subr.mxu0 0.0
    %3937 = vmatpush1.msra.mxu0 0.0
    %3938 = vmatprep.subr.mxu0 0.0
    %3939 = vmatpush1.msra.mxu0 0.0
    %3940 = vmatprep.subr.mxu0 0.0
    %3941 = vmatpush1.msra.mxu0 0.0
    %3942 = vmatprep.subr.mxu0 0.0
    %3943 = vmatpush1.msra.mxu0 0.0
    %3944 = vmatprep.subr.mxu0 0.0
    %3945 = vmatpush1.msra.mxu0 0.0
    %3946 = vmatprep.subr.mxu0 0.0
    %3947 = vmatpush1.msra.mxu0 0.0
    %3948 = vmatprep.subr.mxu0 0.0
    %3949 = vmatpush1.msra.mxu0 0.0
    %3950 = vmatprep.subr.mxu0 0.0
    %3951 = vmatpush1.msra.mxu0 0.0
    %3952 = vmatprep.subr.mxu0 0.0
    %3953 = vmatpush1.msra.mxu0 0.0
    %3954 = vmatprep.subr.mxu0 0.0
    %3955 = vmatpush1.msra.mxu0 0.0
    %3956 = vmatprep.subr.mxu0 0.0
    %3957 = vmatpush1.msra.mxu0 0.0
    %3958 = vmatprep.subr.mxu0 0.0
    %3959 = vmatpush1.msra.mxu0 0.0
    %3960 = vmatprep.subr.mxu0 0.0
    %3961 = vmatpush1.msra.mxu0 0.0
    %3962 = vmatprep.subr.mxu0 0.0
    %3963 = vmatpush1.msra.mxu0 0.0
    %3964 = vmatprep.subr.mxu0 0.0
    %3965 = vmatpush1.msra.mxu0 0.0
    %3966 = vmatprep.subr.mxu0 0.0
    %3967 = vmatpush1.msra.mxu0 0.0
    %3968 = vmatprep.subr.mxu0 0.0
    %3969 = vmatpush1.msra.mxu0 0.0
    %3970 = vmatprep.subr.mxu0 0.0
    %3971 = vmatpush1.msra.mxu0 0.0
    %3972 = vmatprep.subr.mxu0 0.0
    %3973 = vmatpush1.msra.mxu0 0.0
    %3974 = vmatprep.subr.mxu0 0.0
    %3975 = vmatpush1.msra.mxu0 0.0
    %3976 = vmatprep.subr.mxu0 0.0
    %3977 = vmatpush1.msra.mxu0 0.0
    %3978 = vmatprep.subr.mxu0 0.0
    %3979 = vmatpush1.msra.mxu0 0.0
    %3980 = vmatprep.subr.mxu0 0.0
    %3981 = vmatpush1.msra.mxu0 0.0
    %3982 = vmatprep.subr.mxu0 0.0
    %3983 = vmatpush1.msra.mxu0 0.0
    %3984 = vmatprep.subr.mxu0 0.0
    %3985 = vmatpush1.msra.mxu0 0.0
    %3986 = vmatprep.subr.mxu0 0.0
    %3987 = vmatpush1.msra.mxu0 0.0
    %3988 = vmatprep.mubr.f32.mxu0 0.0
    %3989 = vmatmul.mubr.f32.gmra.mrb[0].mxu0 %v3920
    %v3990 = vpop.f32.mrb[0].mxu0
    %v3991 = vadd.f32 0.0, %v3990
    %v3992 = vpop.f32.mrb[0].mxu0
    %3993 = vdwg.mxu0
    %v3995 = vsel %vm179, %v3991, 0
    %3997 = vmatprep.subr.mxu0 0.0
    %3998 = vmatpush1.msra.mxu0 %v2330
    %3999 = vmatprep.subr.mxu0 0.0
    %4000 = vmatpush1.msra.mxu0 0.0
    %4001 = vmatprep.subr.mxu0 0.0
    %4002 = vmatpush1.msra.mxu0 0.0
    %4003 = vmatprep.subr.mxu0 0.0
    %4004 = vmatpush1.msra.mxu0 0.0
    %4005 = vmatprep.subr.mxu0 0.0
    %4006 = vmatpush1.msra.mxu0 0.0
    %4007 = vmatprep.subr.mxu0 0.0
    %4008 = vmatpush1.msra.mxu0 0.0
    %4009 = vmatprep.subr.mxu0 0.0
    %4010 = vmatpush1.msra.mxu0 0.0
    %4011 = vmatprep.subr.mxu0 0.0
    %4012 = vmatpush1.msra.mxu0 0.0
    %4013 = vmatprep.subr.mxu0 0.0
    %4014 = vmatpush1.msra.mxu0 0.0
    %4015 = vmatprep.subr.mxu0 0.0
    %4016 = vmatpush1.msra.mxu0 0.0
    %4017 = vmatprep.subr.mxu0 0.0
    %4018 = vmatpush1.msra.mxu0 0.0
    %4019 = vmatprep.subr.mxu0 0.0
    %4020 = vmatpush1.msra.mxu0 0.0
    %4021 = vmatprep.subr.mxu0 0.0
    %4022 = vmatpush1.msra.mxu0 0.0
    %4023 = vmatprep.subr.mxu0 0.0
    %4024 = vmatpush1.msra.mxu0 0.0
    %4025 = vmatprep.subr.mxu0 0.0
    %4026 = vmatpush1.msra.mxu0 0.0
    %4027 = vmatprep.subr.mxu0 0.0
    %4028 = vmatpush1.msra.mxu0 0.0
    %4029 = vmatprep.subr.mxu0 0.0
    %4030 = vmatpush1.msra.mxu0 0.0
    %4031 = vmatprep.subr.mxu0 0.0
    %4032 = vmatpush1.msra.mxu0 0.0
    %4033 = vmatprep.subr.mxu0 0.0
    %4034 = vmatpush1.msra.mxu0 0.0
    %4035 = vmatprep.subr.mxu0 0.0
    %4036 = vmatpush1.msra.mxu0 0.0
    %4037 = vmatprep.subr.mxu0 0.0
    %4038 = vmatpush1.msra.mxu0 0.0
    %4039 = vmatprep.subr.mxu0 0.0
    %4040 = vmatpush1.msra.mxu0 0.0
    %4041 = vmatprep.subr.mxu0 0.0
    %4042 = vmatpush1.msra.mxu0 0.0
    %4043 = vmatprep.subr.mxu0 0.0
    %4044 = vmatpush1.msra.mxu0 0.0
    %4045 = vmatprep.subr.mxu0 0.0
    %4046 = vmatpush1.msra.mxu0 0.0
    %4047 = vmatprep.subr.mxu0 0.0
    %4048 = vmatpush1.msra.mxu0 0.0
    %4049 = vmatprep.subr.mxu0 0.0
    %4050 = vmatpush1.msra.mxu0 0.0
    %4051 = vmatprep.subr.mxu0 0.0
    %4052 = vmatpush1.msra.mxu0 0.0
    %4053 = vmatprep.subr.mxu0 0.0
    %4054 = vmatpush1.msra.mxu0 0.0
    %4055 = vmatprep.subr.mxu0 0.0
    %4056 = vmatpush1.msra.mxu0 0.0
    %4057 = vmatprep.subr.mxu0 0.0
    %4058 = vmatpush1.msra.mxu0 0.0
    %4059 = vmatprep.subr.mxu0 0.0
    %4060 = vmatpush1.msra.mxu0 0.0
    %4061 = vmatprep.mubr.f32.mxu0 0.0
    %4062 = vmatmul.mubr.f32.gmra.mrb[0].mxu0 %v3995
    %v4063 = vpop.f32.mrb[0].mxu0
    %v4064 = vadd.f32 0.0, %v4063
    %v4065 = vpop.f32.mrb[0].mxu0
    %4066 = vdwg.mxu0
    %v4067 = vadd.f32 %v3820, %v4064
    %4068 = vrot.lane.b32.xlu0 %v2227, 104
    %v4069 = vpop.permute.xlu0 %4068
    %4070 = vrot.lane.b32.xlu0 %v3331, 104
    %v4071 = vpop.permute.xlu0 %4070
    %4072 = vrot.lane.b32.xlu0 %v3330, 104
    %v4073 = vpop.permute.xlu0 %4072
    %v4074 = vsel %vm179, %v4069, 0
    %v4076 = vsel %vm179, %v4071, 0
    %v4078 = vsel %vm179, %v4073, 0
    %4080 = vmatprep.subr.mxu0 0.0
    %4081 = vmatpush1.xpose.msra.mxu0 %v4076
    %4082 = vmatprep.subr.mxu0 0.0
    %4083 = vmatpush1.xpose.msra.mxu0 %v4078
    %4084 = vmatprep.subr.mxu0 0.0
    %4085 = vmatpush1.xpose.msra.mxu0 0.0
    %4086 = vmatprep.subr.mxu0 0.0
    %4087 = vmatpush1.xpose.msra.mxu0 0.0
    %4088 = vmatprep.subr.mxu0 0.0
    %4089 = vmatpush1.xpose.msra.mxu0 0.0
    %4090 = vmatprep.subr.mxu0 0.0
    %4091 = vmatpush1.xpose.msra.mxu0 0.0
    %4092 = vmatprep.subr.mxu0 0.0
    %4093 = vmatpush1.xpose.msra.mxu0 0.0
    %4094 = vmatprep.subr.mxu0 0.0
    %4095 = vmatpush1.xpose.msra.mxu0 0.0
    %4096 = vmatprep.subr.mxu0 0.0
    %4097 = vmatpush1.xpose.msra.mxu0 0.0
    %4098 = vmatprep.subr.mxu0 0.0
    %4099 = vmatpush1.xpose.msra.mxu0 0.0
    %4100 = vmatprep.subr.mxu0 0.0
    %4101 = vmatpush1.xpose.msra.mxu0 0.0
    %4102 = vmatprep.subr.mxu0 0.0
    %4103 = vmatpush1.xpose.msra.mxu0 0.0
    %4104 = vmatprep.subr.mxu0 0.0
    %4105 = vmatpush1.xpose.msra.mxu0 0.0
    %4106 = vmatprep.subr.mxu0 0.0
    %4107 = vmatpush1.xpose.msra.mxu0 0.0
    %4108 = vmatprep.subr.mxu0 0.0
    %4109 = vmatpush1.xpose.msra.mxu0 0.0
    %4110 = vmatprep.subr.mxu0 0.0
    %4111 = vmatpush1.xpose.msra.mxu0 0.0
    %4112 = vmatprep.subr.mxu0 0.0
    %4113 = vmatpush1.xpose.msra.mxu0 0.0
    %4114 = vmatprep.subr.mxu0 0.0
    %4115 = vmatpush1.xpose.msra.mxu0 0.0
    %4116 = vmatprep.subr.mxu0 0.0
    %4117 = vmatpush1.xpose.msra.mxu0 0.0
    %4118 = vmatprep.subr.mxu0 0.0
    %4119 = vmatpush1.xpose.msra.mxu0 0.0
    %4120 = vmatprep.subr.mxu0 0.0
    %4121 = vmatpush1.xpose.msra.mxu0 0.0
    %4122 = vmatprep.subr.mxu0 0.0
    %4123 = vmatpush1.xpose.msra.mxu0 0.0
    %4124 = vmatprep.subr.mxu0 0.0
    %4125 = vmatpush1.xpose.msra.mxu0 0.0
    %4126 = vmatprep.subr.mxu0 0.0
    %4127 = vmatpush1.xpose.msra.mxu0 0.0
    %4128 = vmatprep.subr.mxu0 0.0
    %4129 = vmatpush1.xpose.msra.mxu0 0.0
    %4130 = vmatprep.subr.mxu0 0.0
    %4131 = vmatpush1.xpose.msra.mxu0 0.0
    %4132 = vmatprep.subr.mxu0 0.0
    %4133 = vmatpush1.xpose.msra.mxu0 0.0
    %4134 = vmatprep.subr.mxu0 0.0
    %4135 = vmatpush1.xpose.msra.mxu0 0.0
    %4136 = vmatprep.subr.mxu0 0.0
    %4137 = vmatpush1.xpose.msra.mxu0 0.0
    %4138 = vmatprep.subr.mxu0 0.0
    %4139 = vmatpush1.xpose.msra.mxu0 0.0
    %4140 = vmatprep.subr.mxu0 0.0
    %4141 = vmatpush1.xpose.msra.mxu0 0.0
    %4142 = vmatprep.subr.mxu0 0.0
    %4143 = vmatpush1.xpose.msra.mxu0 0.0
    %4144 = vmatprep.mubr.f32.mxu0 0.0
    %4145 = vmatmul.mubr.f32.gmra.mrb[0].mxu0 %v4074
    %v4146 = vpop.f32.mrb[0].mxu0
    %v4147 = vadd.f32 0.0, %v4146
    %v4148 = vpop.f32.mrb[0].mxu0
    %4149 = vdwg.mxu0
    %v4150 = vsel %vm2417, %v4147, -inf
    %4151 = vmax.xlane.f32.xlu0 %v4150
    %v4152 = vpop.xlane.xlu0 %4151
    %v4153 = vsub.f32 %v4147, %v4152
    %v4154 = vmul.f32 %v4153, 1.442695
    %v4155 = vpow.pop %v4154
    %v4156 = vsel %vm2417, %v4155, 0.0
    %4157 = vadd.xlane.f32.xlu0 %v4156
    %v4158 = vpop.xlane.xlu0 %4157
    %v4159 = vrcp.pop %v4158
    %v4160 = vmul.f32 %v4155, %v4159
    %4161 = vrot.lane.b32.xlu0 %v3331, 72
    %v4162 = vpop.permute.xlu0 %4161
    %4163 = vrot.lane.b32.xlu0 %v3330, 72
    %v4164 = vpop.permute.xlu0 %4163
    %v4167 = vsel %vm2417, %v4160, 0
    %v4169 = vsel %vm2437, %v4164, 0
    %4171 = vmatprep.subr.mxu0 0.0
    %4172 = vmatpush1.msra.mxu0 %v4162
    %4173 = vmatprep.subr.mxu0 0.0
    %4174 = vmatpush1.msra.mxu0 %v4169
    %4175 = vmatprep.subr.mxu0 0.0
    %4176 = vmatpush1.msra.mxu0 0.0
    %4177 = vmatprep.subr.mxu0 0.0
    %4178 = vmatpush1.msra.mxu0 0.0
    %4179 = vmatprep.subr.mxu0 0.0
    %4180 = vmatpush1.msra.mxu0 0.0
    %4181 = vmatprep.subr.mxu0 0.0
    %4182 = vmatpush1.msra.mxu0 0.0
    %4183 = vmatprep.subr.mxu0 0.0
    %4184 = vmatpush1.msra.mxu0 0.0
    %4185 = vmatprep.subr.mxu0 0.0
    %4186 = vmatpush1.msra.mxu0 0.0
    %4187 = vmatprep.subr.mxu0 0.0
    %4188 = vmatpush1.msra.mxu0 0.0
    %4189 = vmatprep.subr.mxu0 0.0
    %4190 = vmatpush1.msra.mxu0 0.0
    %4191 = vmatprep.subr.mxu0 0.0
    %4192 = vmatpush1.msra.mxu0 0.0
    %4193 = vmatprep.subr.mxu0 0.0
    %4194 = vmatpush1.msra.mxu0 0.0
    %4195 = vmatprep.subr.mxu0 0.0
    %4196 = vmatpush1.msra.mxu0 0.0
    %4197 = vmatprep.subr.mxu0 0.0
    %4198 = vmatpush1.msra.mxu0 0.0
    %4199 = vmatprep.subr.mxu0 0.0
    %4200 = vmatpush1.msra.mxu0 0.0
    %4201 = vmatprep.subr.mxu0 0.0
    %4202 = vmatpush1.msra.mxu0 0.0
    %4203 = vmatprep.subr.mxu0 0.0
    %4204 = vmatpush1.msra.mxu0 0.0
    %4205 = vmatprep.subr.mxu0 0.0
    %4206 = vmatpush1.msra.mxu0 0.0
    %4207 = vmatprep.subr.mxu0 0.0
    %4208 = vmatpush1.msra.mxu0 0.0
    %4209 = vmatprep.subr.mxu0 0.0
    %4210 = vmatpush1.msra.mxu0 0.0
    %4211 = vmatprep.subr.mxu0 0.0
    %4212 = vmatpush1.msra.mxu0 0.0
    %4213 = vmatprep.subr.mxu0 0.0
    %4214 = vmatpush1.msra.mxu0 0.0
    %4215 = vmatprep.subr.mxu0 0.0
    %4216 = vmatpush1.msra.mxu0 0.0
    %4217 = vmatprep.subr.mxu0 0.0
    %4218 = vmatpush1.msra.mxu0 0.0
    %4219 = vmatprep.subr.mxu0 0.0
    %4220 = vmatpush1.msra.mxu0 0.0
    %4221 = vmatprep.subr.mxu0 0.0
    %4222 = vmatpush1.msra.mxu0 0.0
    %4223 = vmatprep.subr.mxu0 0.0
    %4224 = vmatpush1.msra.mxu0 0.0
    %4225 = vmatprep.subr.mxu0 0.0
    %4226 = vmatpush1.msra.mxu0 0.0
    %4227 = vmatprep.subr.mxu0 0.0
    %4228 = vmatpush1.msra.mxu0 0.0
    %4229 = vmatprep.subr.mxu0 0.0
    %4230 = vmatpush1.msra.mxu0 0.0
    %4231 = vmatprep.subr.mxu0 0.0
    %4232 = vmatpush1.msra.mxu0 0.0
    %4233 = vmatprep.subr.mxu0 0.0
    %4234 = vmatpush1.msra.mxu0 0.0
    %4235 = vmatprep.mubr.f32.mxu0 0.0
    %4236 = vmatmul.mubr.f32.gmra.mrb[0].mxu0 %v4167
    %v4237 = vpop.f32.mrb[0].mxu0
    %v4238 = vadd.f32 0.0, %v4237
    %v4239 = vpop.f32.mrb[0].mxu0
    %4240 = vdwg.mxu0
    %v4242 = vsel %vm179, %v4238, 0
    %4244 = vmatprep.subr.mxu0 0.0
    %4245 = vmatpush1.msra.mxu0 %v2331
    %4246 = vmatprep.subr.mxu0 0.0
    %4247 = vmatpush1.msra.mxu0 0.0
    %4248 = vmatprep.subr.mxu0 0.0
    %4249 = vmatpush1.msra.mxu0 0.0
    %4250 = vmatprep.subr.mxu0 0.0
    %4251 = vmatpush1.msra.mxu0 0.0
    %4252 = vmatprep.subr.mxu0 0.0
    %4253 = vmatpush1.msra.mxu0 0.0
    %4254 = vmatprep.subr.mxu0 0.0
    %4255 = vmatpush1.msra.mxu0 0.0
    %4256 = vmatprep.subr.mxu0 0.0
    %4257 = vmatpush1.msra.mxu0 0.0
    %4258 = vmatprep.subr.mxu0 0.0
    %4259 = vmatpush1.msra.mxu0 0.0
    %4260 = vmatprep.subr.mxu0 0.0
    %4261 = vmatpush1.msra.mxu0 0.0
    %4262 = vmatprep.subr.mxu0 0.0
    %4263 = vmatpush1.msra.mxu0 0.0
    %4264 = vmatprep.subr.mxu0 0.0
    %4265 = vmatpush1.msra.mxu0 0.0
    %4266 = vmatprep.subr.mxu0 0.0
    %4267 = vmatpush1.msra.mxu0 0.0
    %4268 = vmatprep.subr.mxu0 0.0
    %4269 = vmatpush1.msra.mxu0 0.0
    %4270 = vmatprep.subr.mxu0 0.0
    %4271 = vmatpush1.msra.mxu0 0.0
    %4272 = vmatprep.subr.mxu0 0.0
    %4273 = vmatpush1.msra.mxu0 0.0
    %4274 = vmatprep.subr.mxu0 0.0
    %4275 = vmatpush1.msra.mxu0 0.0
    %4276 = vmatprep.subr.mxu0 0.0
    %4277 = vmatpush1.msra.mxu0 0.0
    %4278 = vmatprep.subr.mxu0 0.0
    %4279 = vmatpush1.msra.mxu0 0.0
    %4280 = vmatprep.subr.mxu0 0.0
    %4281 = vmatpush1.msra.mxu0 0.0
    %4282 = vmatprep.subr.mxu0 0.0
    %4283 = vmatpush1.msra.mxu0 0.0
    %4284 = vmatprep.subr.mxu0 0.0
    %4285 = vmatpush1.msra.mxu0 0.0
    %4286 = vmatprep.subr.mxu0 0.0
    %4287 = vmatpush1.msra.mxu0 0.0
    %4288 = vmatprep.subr.mxu0 0.0
    %4289 = vmatpush1.msra.mxu0 0.0
    %4290 = vmatprep.subr.mxu0 0.0
    %4291 = vmatpush1.msra.mxu0 0.0
    %4292 = vmatprep.subr.mxu0 0.0
    %4293 = vmatpush1.msra.mxu0 0.0
    %4294 = vmatprep.subr.mxu0 0.0
    %4295 = vmatpush1.msra.mxu0 0.0
    %4296 = vmatprep.subr.mxu0 0.0
    %4297 = vmatpush1.msra.mxu0 0.0
    %4298 = vmatprep.subr.mxu0 0.0
    %4299 = vmatpush1.msra.mxu0 0.0
    %4300 = vmatprep.subr.mxu0 0.0
    %4301 = vmatpush1.msra.mxu0 0.0
    %4302 = vmatprep.subr.mxu0 0.0
    %4303 = vmatpush1.msra.mxu0 0.0
    %4304 = vmatprep.subr.mxu0 0.0
    %4305 = vmatpush1.msra.mxu0 0.0
    %4306 = vmatprep.subr.mxu0 0.0
    %4307 = vmatpush1.msra.mxu0 0.0
    %4308 = vmatprep.mubr.f32.mxu0 0.0
    %4309 = vmatmul.mubr.f32.gmra.mrb[0].mxu0 %v4242
    %v4310 = vpop.f32.mrb[0].mxu0
    %v4311 = vadd.f32 0.0, %v4310
    %v4312 = vpop.f32.mrb[0].mxu0
    %4313 = vdwg.mxu0
    %v4314 = vadd.f32 %v4067, %v4311
    %4315 = vst.msk [vmem:[#allocation2 + $0x8] sm:$0xff] %vm84, %v4314
    %v4316 = vld [vmem:[#allocation2] sm:$0xff]
    %v4317 = vld [vmem:[#allocation2 + $0x8] sm:$0xff]
    %v4318 = vld [vmem:[#allocation9 + $0x9] sm:$0x1]
    %v4319 = vld [vmem:[#allocation9 + $0xa] sm:$0x1]
    %v4320 = vsel %vm84, %v4316, 0.0
    %4321 = vadd.xlane.f32.xlu0 %v4320
    %v4322 = vpop.xlane.xlu0 %4321
    %v4323 = vsel %vm84, %v4317, 0.0
    %4324 = vadd.xlane.f32.xlu0 %v4323
    %v4325 = vpop.xlane.xlu0 %4324
    %v4326 = vmul.f32 %v4322, %v2100
    %v4327 = vmul.f32 %v4325, %v2100
    %v4328 = vmul.f32 %v4316, %v4316
    %v4329 = vmul.f32 %v4317, %v4317
    %v4330 = vsel %vm84, %v4328, 0.0
    %4331 = vadd.xlane.f32.xlu0 %v4330
    %v4332 = vpop.xlane.xlu0 %4331
    %v4333 = vsel %vm84, %v4329, 0.0
    %4334 = vadd.xlane.f32.xlu0 %v4333
    %v4335 = vpop.xlane.xlu0 %4334
    %v4336 = vmul.f32 %v4332, %v2100
    %v4337 = vmul.f32 %v4335, %v2100
    %v4338 = vmul.f32 %v4326, %v4326
    %v4339 = vmul.f32 %v4327, %v4327
    %v4340 = vsub.f32 %v4336, %v4338
    %v4341 = vsub.f32 %v4337, %v4339
    %v4342 = vsub.f32 %v4316, %v4326
    %v4343 = vsub.f32 %v4317, %v4327
    %v4344 = vadd.f32 %v4340, 1e-05
    %v4345 = vadd.f32 %v4341, 1e-05
    %v4346 = vrsqrt.pop %v4344
    %v4347 = vrsqrt.pop %v4345
    %v4348 = vmul.f32 %v4342, %v4346
    %v4349 = vmul.f32 %v4343, %v4347
    %v4350 = vlaneseq
    %v4351 = vshrl.u32 %v4350, 7
    %v4352 = vsub.s32 0, %v4351
    %v4353 = vrot.slane %v4318, %v4352
    %v4354 = vmul.f32 %v4348, %v4353
    %v4355 = vmul.f32 %v4349, %v4353
    %v4356 = vlaneseq
    %v4357 = vshrl.u32 %v4356, 7
    %v4358 = vsub.s32 0, %v4357
    %v4359 = vrot.slane %v4319, %v4358
    %v4360 = vadd.f32 %v4354, %v4359
    %v4361 = vadd.f32 %v4355, %v4359
    %v4362 = vld [vmem:[#allocation8 + $0xa0] sm:$0xff]
    %v4363 = vld [vmem:[#allocation8 + $0xa8] sm:$0xff]
    %v4364 = vld [vmem:[#allocation8 + $0xb0] sm:$0xff]
    %v4365 = vld [vmem:[#allocation8 + $0xb8] sm:$0xff]
    %v4366 = vld [vmem:[#allocation9 + $0x5] sm:$0x1]
    %v4367 = vlaneseq
    %v4368 = vshrl.u32 %v4367, 7
    %v4369 = vsub.s32 0, %v4368
    %v4370 = vrot.slane %v4366, %v4369
    %v4372 = vsel %vm84, %v4360, 0
    %v4375 = vsel %vm84, %v4361, 0
    %4377 = vmatprep.subr.mxu0 0.0
    %4378 = vmatpush1.msra.mxu0 %v4362
    %4379 = vmatprep.subr.mxu0 0.0
    %4380 = vmatpush1.msra.mxu0 %v4363
    %4381 = vmatprep.subr.mxu0 0.0
    %4382 = vmatpush1.msra.mxu0 %v4364
    %4383 = vmatprep.subr.mxu0 0.0
    %4384 = vmatpush1.msra.mxu0 %v4365
    %4385 = vmatprep.subr.mxu0 0.0
    %4386 = vmatpush1.msra.mxu0 0.0
    %4387 = vmatprep.subr.mxu0 0.0
    %4388 = vmatpush1.msra.mxu0 0.0
    %4389 = vmatprep.subr.mxu0 0.0
    %4390 = vmatpush1.msra.mxu0 0.0
    %4391 = vmatprep.subr.mxu0 0.0
    %4392 = vmatpush1.msra.mxu0 0.0
    %4393 = vmatprep.subr.mxu0 0.0
    %4394 = vmatpush1.msra.mxu0 0.0
    %4395 = vmatprep.subr.mxu0 0.0
    %4396 = vmatpush1.msra.mxu0 0.0
    %4397 = vmatprep.subr.mxu0 0.0
    %4398 = vmatpush1.msra.mxu0 0.0
    %4399 = vmatprep.subr.mxu0 0.0
    %4400 = vmatpush1.msra.mxu0 0.0
    %4401 = vmatprep.subr.mxu0 0.0
    %4402 = vmatpush1.msra.mxu0 0.0
    %4403 = vmatprep.subr.mxu0 0.0
    %4404 = vmatpush1.msra.mxu0 0.0
    %4405 = vmatprep.subr.mxu0 0.0
    %4406 = vmatpush1.msra.mxu0 0.0
    %4407 = vmatprep.subr.mxu0 0.0
    %4408 = vmatpush1.msra.mxu0 0.0
    %4409 = vmatprep.subr.mxu0 0.0
    %4410 = vmatpush1.msra.mxu0 0.0
    %4411 = vmatprep.subr.mxu0 0.0
    %4412 = vmatpush1.msra.mxu0 0.0
    %4413 = vmatprep.subr.mxu0 0.0
    %4414 = vmatpush1.msra.mxu0 0.0
    %4415 = vmatprep.subr.mxu0 0.0
    %4416 = vmatpush1.msra.mxu0 0.0
    %4417 = vmatprep.subr.mxu0 0.0
    %4418 = vmatpush1.msra.mxu0 0.0
    %4419 = vmatprep.subr.mxu0 0.0
    %4420 = vmatpush1.msra.mxu0 0.0
    %4421 = vmatprep.subr.mxu0 0.0
    %4422 = vmatpush1.msra.mxu0 0.0
    %4423 = vmatprep.subr.mxu0 0.0
    %4424 = vmatpush1.msra.mxu0 0.0
    %4425 = vmatprep.subr.mxu0 0.0
    %4426 = vmatpush1.msra.mxu0 0.0
    %4427 = vmatprep.subr.mxu0 0.0
    %4428 = vmatpush1.msra.mxu0 0.0
    %4429 = vmatprep.subr.mxu0 0.0
    %4430 = vmatpush1.msra.mxu0 0.0
    %4431 = vmatprep.subr.mxu0 0.0
    %4432 = vmatpush1.msra.mxu0 0.0
    %4433 = vmatprep.subr.mxu0 0.0
    %4434 = vmatpush1.msra.mxu0 0.0
    %4435 = vmatprep.subr.mxu0 0.0
    %4436 = vmatpush1.msra.mxu0 0.0
    %4437 = vmatprep.subr.mxu0 0.0
    %4438 = vmatpush1.msra.mxu0 0.0
    %4439 = vmatprep.subr.mxu0 0.0
    %4440 = vmatpush1.msra.mxu0 0.0
    %4441 = vmatprep.mubr.f32.mxu0 0.0
    %4442 = vmatmul.mubr.f32.gmra.mrb[0].mxu0 %v4372
    %v4443 = vpop.f32.mrb[0].mxu0
    %v4444 = vadd.f32 %v4370, %v4443
    %v4445 = vpop.f32.mrb[0].mxu0
    %4446 = vmatprep.mubr.f32.mxu0 0.0
    %4447 = vmatmul.mubr.f32.gmra.mrb[0].mxu0 %v4375
    %v4448 = vpop.f32.mrb[0].mxu0
    %v4449 = vadd.f32 %v4370, %v4448
    %v4450 = vpop.f32.mrb[0].mxu0
    %4451 = vdwg.mxu0
    %v4452 = vmax.f32 %v4444, 0.0
    %v4453 = vmax.f32 %v4449, 0.0
    %v4454 = vld [vmem:[#allocation8 + $0xc0] sm:$0xff]
    %v4455 = vld [vmem:[#allocation8 + $0xc8] sm:$0xff]
    %v4456 = vld [vmem:[#allocation8 + $0xd0] sm:$0xff]
    %v4457 = vld [vmem:[#allocation8 + $0xd8] sm:$0xff]
    %v4458 = vld [vmem:[#allocation8 + $0xe0] sm:$0xff]
    %v4459 = vld [vmem:[#allocation8 + $0xe8] sm:$0xff]
    %v4460 = vld [vmem:[#allocation8 + $0xf0] sm:$0xff]
    %v4461 = vld [vmem:[#allocation8 + $0xf8] sm:$0xff]
    %v4462 = vld [vmem:[#allocation8 + $0x100] sm:$0xff]
    %v4463 = vld [vmem:[#allocation8 + $0x108] sm:$0xff]
    %v4464 = vld [vmem:[#allocation8 + $0x110] sm:$0xff]
    %v4465 = vld [vmem:[#allocation8 + $0x118] sm:$0xff]
    %v4466 = vld [vmem:[#allocation8 + $0x120] sm:$0xff]
    %v4467 = vld [vmem:[#allocation8 + $0x128] sm:$0xff]
    %v4468 = vld [vmem:[#allocation8 + $0x130] sm:$0xff]
    %v4469 = vld [vmem:[#allocation8 + $0x138] sm:$0xff]
    %v4470 = vld [vmem:[#allocation9 + $0x6] sm:$0x1]
    %v4471 = vlaneseq
    %v4472 = vshrl.u32 %v4471, 7
    %v4473 = vsub.s32 0, %v4472
    %v4474 = vrot.slane %v4470, %v4473
    %4475 = vmatprep.subr.mxu0 0.0
    %4476 = vmatpush1.msra.mxu0 %v4454
    %4477 = vmatprep.subr.mxu0 0.0
    %4478 = vmatpush1.msra.mxu0 %v4455
    %4479 = vmatprep.subr.mxu0 0.0
    %4480 = vmatpush1.msra.mxu0 %v4456
    %4481 = vmatprep.subr.mxu0 0.0
    %4482 = vmatpush1.msra.mxu0 %v4457
    %4483 = vmatprep.subr.mxu0 0.0
    %4484 = vmatpush1.msra.mxu0 %v4458
    %4485 = vmatprep.subr.mxu0 0.0
    %4486 = vmatpush1.msra.mxu0 %v4459
    %4487 = vmatprep.subr.mxu0 0.0
    %4488 = vmatpush1.msra.mxu0 %v4460
    %4489 = vmatprep.subr.mxu0 0.0
    %4490 = vmatpush1.msra.mxu0 %v4461
    %4491 = vmatprep.subr.mxu0 0.0
    %4492 = vmatpush1.msra.mxu0 %v4462
    %4493 = vmatprep.subr.mxu0 0.0
    %4494 = vmatpush1.msra.mxu0 %v4463
    %4495 = vmatprep.subr.mxu0 0.0
    %4496 = vmatpush1.msra.mxu0 %v4464
    %4497 = vmatprep.subr.mxu0 0.0
    %4498 = vmatpush1.msra.mxu0 %v4465
    %4499 = vmatprep.subr.mxu0 0.0
    %4500 = vmatpush1.msra.mxu0 %v4466
    %4501 = vmatprep.subr.mxu0 0.0
    %4502 = vmatpush1.msra.mxu0 %v4467
    %4503 = vmatprep.subr.mxu0 0.0
    %4504 = vmatpush1.msra.mxu0 %v4468
    %4505 = vmatprep.subr.mxu0 0.0
    %4506 = vmatpush1.msra.mxu0 %v4469
    %4507 = vmatprep.subr.mxu0 0.0
    %4508 = vmatpush1.msra.mxu0 0.0
    %4509 = vmatprep.subr.mxu0 0.0
    %4510 = vmatpush1.msra.mxu0 0.0
    %4511 = vmatprep.subr.mxu0 0.0
    %4512 = vmatpush1.msra.mxu0 0.0
    %4513 = vmatprep.subr.mxu0 0.0
    %4514 = vmatpush1.msra.mxu0 0.0
    %4515 = vmatprep.subr.mxu0 0.0
    %4516 = vmatpush1.msra.mxu0 0.0
    %4517 = vmatprep.subr.mxu0 0.0
    %4518 = vmatpush1.msra.mxu0 0.0
    %4519 = vmatprep.subr.mxu0 0.0
    %4520 = vmatpush1.msra.mxu0 0.0
    %4521 = vmatprep.subr.mxu0 0.0
    %4522 = vmatpush1.msra.mxu0 0.0
    %4523 = vmatprep.subr.mxu0 0.0
    %4524 = vmatpush1.msra.mxu0 0.0
    %4525 = vmatprep.subr.mxu0 0.0
    %4526 = vmatpush1.msra.mxu0 0.0
    %4527 = vmatprep.subr.mxu0 0.0
    %4528 = vmatpush1.msra.mxu0 0.0
    %4529 = vmatprep.subr.mxu0 0.0
    %4530 = vmatpush1.msra.mxu0 0.0
    %4531 = vmatprep.subr.mxu0 0.0
    %4532 = vmatpush1.msra.mxu0 0.0
    %4533 = vmatprep.subr.mxu0 0.0
    %4534 = vmatpush1.msra.mxu0 0.0
    %4535 = vmatprep.subr.mxu0 0.0
    %4536 = vmatpush1.msra.mxu0 0.0
    %4537 = vmatprep.subr.mxu0 0.0
    %4538 = vmatpush1.msra.mxu0 0.0
    %4539 = vmatprep.mubr.f32.mxu0 0.0
    %4540 = vmatmul.mubr.f32.gmra.mrb[0].mxu0 %v4452
    %v4541 = vpop.f32.mrb[0].mxu0
    %v4542 = vadd.f32 %v4474, %v4541
    %v4543 = vpop.f32.mrb[0].mxu0
    %4544 = vmatprep.mubr.f32.mxu0 0.0
    %4545 = vmatmul.mubr.f32.gmra.mrb[0].mxu0 %v4453
    %v4546 = vpop.f32.mrb[0].mxu0
    %v4547 = vadd.f32 %v4474, %v4546
    %v4548 = vpop.f32.mrb[0].mxu0
    %4549 = vdwg.mxu0
    %v4550 = vadd.f32 %v4360, %v4542
    %v4551 = vadd.f32 %v4361, %v4547
    %v4552 = vld [vmem:[#allocation9 + $0xb] sm:$0x1]
    %v4553 = vld [vmem:[#allocation9 + $0xc] sm:$0x1]
    %v4554 = vsel %vm84, %v4550, 0.0
    %4555 = vadd.xlane.f32.xlu0 %v4554
    %v4556 = vpop.xlane.xlu0 %4555
    %v4557 = vsel %vm84, %v4551, 0.0
    %4558 = vadd.xlane.f32.xlu0 %v4557
    %v4559 = vpop.xlane.xlu0 %4558
    %v4560 = vmul.f32 %v4556, %v2100
    %v4561 = vmul.f32 %v4559, %v2100
    %v4562 = vmul.f32 %v4550, %v4550
    %v4563 = vmul.f32 %v4551, %v4551
    %v4564 = vsel %vm84, %v4562, 0.0
    %4565 = vadd.xlane.f32.xlu0 %v4564
    %v4566 = vpop.xlane.xlu0 %4565
    %v4567 = vsel %vm84, %v4563, 0.0
    %4568 = vadd.xlane.f32.xlu0 %v4567
    %v4569 = vpop.xlane.xlu0 %4568
    %v4570 = vmul.f32 %v4566, %v2100
    %v4571 = vmul.f32 %v4569, %v2100
    %v4572 = vmul.f32 %v4560, %v4560
    %v4573 = vmul.f32 %v4561, %v4561
    %v4574 = vsub.f32 %v4570, %v4572
    %v4575 = vsub.f32 %v4571, %v4573
    %v4576 = vsub.f32 %v4550, %v4560
    %v4577 = vsub.f32 %v4551, %v4561
    %v4578 = vadd.f32 %v4574, 1e-05
    %v4579 = vadd.f32 %v4575, 1e-05
    %v4580 = vrsqrt.pop %v4578
    %v4581 = vrsqrt.pop %v4579
    %v4582 = vmul.f32 %v4576, %v4580
    %v4583 = vmul.f32 %v4577, %v4581
    %v4584 = vlaneseq
    %v4585 = vshrl.u32 %v4584, 7
    %v4586 = vsub.s32 0, %v4585
    %v4587 = vrot.slane %v4552, %v4586
    %v4588 = vmul.f32 %v4582, %v4587
    %v4589 = vmul.f32 %v4583, %v4587
    %v4590 = vlaneseq
    %v4591 = vshrl.u32 %v4590, 7
    %v4592 = vsub.s32 0, %v4591
    %v4593 = vrot.slane %v4553, %v4592
    %v4594 = vadd.f32 %v4588, %v4593
    %v4595 = vadd.f32 %v4589, %v4593
    %4596 = vst.msk [vmem:[#allocation11] sm:$0xff] %vm84, %v4594
    %4597 = vst.msk [vmem:[#allocation11 + $0x8] sm:$0xff] %vm84, %v4595
    // Predicated region
    $region34: #{tpu_custom_call.1} parent=1 // pred_check
      _
    $region35: #{tpu_custom_call.1} parent=1 // pred_check_branch
      %4599 = sbr.rel (0) target = $region37
    $region36: #{tpu_custom_call.1} parent=1 // pred_region
      %s4601 = ssub.s32 256, 256
      %4602 = vsyncadd [#allocation5], %s4601
      %s4603 = sshll.u32 [#allocation11], 4
      %s4604 = int_to_ptr.vmem [resolvable:$true] %s4603
      %4609 = dma.vmem_to_hbm [thread:$0]  %s4604, 256, %s4, [#allocation5], 128, 128, 8
    $region37: #{tpu_custom_call.1} parent=1 // pred_fallthru
      _
    // Predicated region
    $region38: #{tpu_custom_call.1} parent=1 // pred_check
      _
    $region39: #{tpu_custom_call.1} parent=1 // pred_check_branch
      %4611 = sbr.rel (0) target = $region41
    $region40: #{tpu_custom_call.1} parent=1 // pred_region
      %4612 = dma.done [#allocation5], 256
    $region41: #{tpu_custom_call.1} parent=1 // pred_fallthru
      _
    %4613 = vsyncpa [#allocation4], 1
    %4614 = vsyncpa [#allocation7], 1
    %4615 = vsyncpa [#allocation10], 1
    %4616 = vsyncpa [#allocation5], 1

</llo_original>
